<compile_context>
chip_gen: v6e
topology: v6e:2x2x1
jax: 0.10.0
libtpu: 0.0.40
codegen_flags: <defaults>
</compile_context>

<pallas_src>
import functools

import jax
import jax.numpy as jnp
import numpy as np
from jax import lax
from jax.experimental import pallas as pl
from jax.experimental.pallas import tpu as pltpu

NEI_PACK = 4          # neighbours folded into the lane axis: NEI_PACK * H == 128 lanes
LAYER2_BF16 = True    # bf16 operands (f32 accumulation) for the layer-2 dot, per perf review


# ---------------------------------------------------------------------------
# Farthest point sampling (data-dependent, sequential argmax -> plain JAX glue).
# ---------------------------------------------------------------------------
def _fps_single(pos_b, M):
    N = pos_b.shape[0]
    sel0 = jnp.zeros((M,), dtype=jnp.int32)
    d0 = jnp.full((N,), jnp.inf, dtype=jnp.float32)

    def body(i, carry):
        sel, dmin = carry
        last = pos_b[sel[i - 1]]
        d = jnp.sum((pos_b - last[None, :]) ** 2, axis=-1)
        dmin = jnp.minimum(dmin, d)
        nxt = jnp.argmax(dmin).astype(jnp.int32)
        return sel.at[i].set(nxt), dmin

    sel, _ = lax.fori_loop(1, M, body, (sel0, d0))
    return sel


# ---------------------------------------------------------------------------
# PointConv hot path (radius mask + 2-layer MLP + masked max) in Pallas.
# Everything fits VMEM -> single grid step.
# ---------------------------------------------------------------------------
def pointconv_pallas(xb, posb, cpos, params, r):
    B, N, C = xb.shape
    M = cpos.shape[1]
    w1, b1, w2, b2 = params
    H = w1.shape[1]
    assert w1.shape[0] == C + 3
    assert H * NEI_PACK == 128, "repack assumes NEI_PACK * H == 128 lanes"
    assert N % NEI_PACK == 0
    G = N // NEI_PACK
    L = NEI_PACK * H                      # 128 packed lanes
    r2 = float(r) * float(r)
    f32 = jnp.float32

    # ---- wrapper-side layout plumbing (tiny, one-time; no pairwise compute here) ----
    # fused [x | pos] features, 4 neighbours per row -> pairs with block-diagonal w1
    xp = jnp.concatenate([xb, posb], axis=-1).astype(f32)                 # (B, N, C+3)
    xp_g = xp.reshape(B * G, NEI_PACK * (C + 3))                          # (B*G, 4*(C+3))
    # augmented position operand for the dist2 dot:  rows = [-2p, 1, |p|^2], neighbour k on
    # lanes [k*H, (k+1)*H)
    pn2 = jnp.sum(posb * posb, axis=-1, keepdims=True)
    paug = jnp.concatenate([-2.0 * posb, jnp.ones((B, N, 1), f32), pn2], axis=-1)  # (B, N, 5)
    paug = paug.reshape(B, G, NEI_PACK, 5).transpose(0, 1, 3, 2)          # (B, G, 5, 4)
    paug = jnp.repeat(paug, H, axis=-1).reshape(B * G, 5, L)              # (B*G, 5, 128)
    # augmented center operand: [c, |c|^2, 1]
    cn2 = jnp.sum(cpos * cpos, axis=-1, keepdims=True)
    caug_in = jnp.concatenate([cpos.astype(f32), cn2, jnp.ones((B, M, 1), f32)], -1)  # (B, M, 5)

    # packed weights (built once, VMEM resident)
    eye = jnp.eye(NEI_PACK, dtype=f32)
    w1_bd = jnp.kron(eye, w1)                                             # (4*(C+3), 128)
    w1p_aug = jnp.concatenate(
        [jnp.tile(w1[C:], (1, NEI_PACK)), jnp.zeros((2, L), f32)], axis=0)  # (5, 128)
    b1_t = jnp.tile(b1.reshape(1, H), (1, NEI_PACK))                      # (1, 128)
    w2_bd = jnp.kron(eye, w2)                                             # (128, 128)
    if LAYER2_BF16:
        w2_bd = w2_bd.astype(jnp.bfloat16)
    b2_t = jnp.tile(b2.reshape(1, H), (1, NEI_PACK))                      # (1, 128)

    def kernel(xp_ref, caug_ref, paug_ref, w1bd_ref, w1pa_ref, b1_ref, w2bd_ref, b2_ref, o_ref):
        # layer-1 point-side term, already packed: lane k*H+h <-> (neighbour g*4+k, feature h)
        xph = jnp.dot(xp_ref[...], w1bd_ref[...],
                      preferred_element_type=f32) + b1_ref[...]            # (B*G, 128)
        # layer-1 center-side term, tiled across the 4 neighbour lane-groups
        ca = caug_ref[...]                                                 # (B, M, 5)
        cph = jnp.dot(ca.reshape(B * M, 5), w1pa_ref[...],
                      preferred_element_type=f32)                          # (B*M, 128)

        # squared distances born directly in the packed (B, G, M, 128) orientation:
        # dist2 = |c|^2 + |p|^2 - 2 c.p folded into one batched K=5 dot (review: dot_general form
        # + mask generated in the layout used by the where/max, no relayouts).
        ca_bg = jnp.broadcast_to(ca[:, None, :, :], (B, G, M, 5)).reshape(B * G, M, 5)
        dist2 = jnp.einsum('zmk,zkl->zml', ca_bg, paug_ref[...],
                           preferred_element_type=f32)                     # (B*G, M, 128)
        valid = (dist2 <= r2).reshape(B, G, M, L)
        # NOTE: radius()'s max_num_neighbors=64 cap never truncates since N <= 64.

        # pair tensor, fully lane-dense: h1[b,g,m, k*H+h] = relu(layer1(center m, nbr g*4+k))_h
        h1 = jnp.maximum(xph.reshape(B, G, 1, L) - cph.reshape(B, 1, M, L), 0.0)

        # layer 2: block-diagonal w2 (4 identical HxH blocks); bf16 operands, f32 accumulation
        h2 = jnp.dot(h1.reshape(B * G * M, L).astype(w2bd_ref.dtype), w2bd_ref[...],
                     preferred_element_type=f32)                           # (B*G*M, 128)
        h2 = jnp.maximum(h2 + b2_ref[...], 0.0).reshape(B, G, M, L)

        # masked max over neighbours.  0-fill is exact because h2 >= 0 post-ReLU and every
        # center is its own in-radius neighbour (breaks if the trailing ReLU is removed).
        h2 = jnp.where(valid, h2, 0.0)
        acc = jnp.max(h2, axis=1).reshape(B * M, L)          # max over neighbour groups (sublanes)
        # reduce the 4 neighbour lane-groups {h, h+H, h+2H, h+3H} with XLU rotations
        acc = jnp.maximum(acc, pltpu.roll(acc, shift=2 * H, axis=1))
        acc = jnp.maximum(acc, pltpu.roll(acc, shift=H, axis=1))
        o_ref[...] = acc[:, :H]

    return pl.pallas_call(
        kernel,
        out_shape=jax.ShapeDtypeStruct((B * M, H), f32),
        in_specs=[pl.BlockSpec(memory_space=pltpu.MemorySpace.VMEM)] * 8,
        out_specs=pl.BlockSpec(memory_space=pltpu.MemorySpace.VMEM),
    )(xp_g, caug_in, paug, w1_bd, w1p_aug, b1_t, w2_bd, b2_t)


# ---------------------------------------------------------------------------
# Full SAModule.forward
# ---------------------------------------------------------------------------
def sa_module_forward(x, pos, batch, *, ratio, r, params, B, N):
    """x: (B*N, C), pos: (B*N, 3), batch: (B*N,) sorted with N points per sample."""
    C = x.shape[-1]
    M = int(ratio * N)
    xb = x.reshape(B, N, C)
    posb = pos.reshape(B, N, 3)

    # fps(pos, batch, ratio): data-dependent sequential argmax -> plain JAX outside the kernel
    idx_local = jax.vmap(functools.partial(_fps_single, M=M))(posb)        # (B, M)
    cpos = jax.vmap(lambda p, i: p[i])(posb, idx_local)                    # (B, M, 3)

    # radius(...) + PointConv(nn) fused as a dense masked conv in the Pallas kernel
    x_out = pointconv_pallas(xb, posb, cpos, params, r)                    # (B*M, H)

    idx_flat = (jnp.arange(B, dtype=jnp.int32)[:, None] * N + idx_local).reshape(-1)
    return x_out, pos[idx_flat], batch[idx_flat]


# ---------------------------------------------------------------------------
# Pure-JAX reference for the PointConv hot path (correctness check only, f32 end-to-end).
# ---------------------------------------------------------------------------
def pointconv_reference(xb, posb, cpos, params, r):
    w1, b1, w2, b2 = params
    C = xb.shape[-1]
    w1x, w1p = w1[:C], w1[C:]
    rel = posb[:, None, :, :] - cpos[:, :, None, :]                        # (B, M, N, 3)
    dist2 = jnp.sum(rel * rel, axis=-1)
    mask = dist2 <= r * r
    h1 = jax.nn.relu(jnp.einsum("bnc,ch->bnh", xb, w1x)[:, None]
                     + jnp.einsum("bmnk,kh->bmnh", rel, w1p) + b1[0])
    h2 = jax.nn.relu(jnp.einsum("bmnh,hk->bmnk", h1, w2) + b2[0])
    h2 = jnp.where(mask[..., None], h2, -jnp.inf)
    return jnp.max(h2, axis=2)


if __name__ == "__main__":
    B, N, C, H = 2, 64, 4, 32
    ratio, r = 0.5, 0.4
    M = int(ratio * N)

    # deterministic inputs
    key = jax.random.PRNGKey(0)
    k_pos, k_x = jax.random.split(key)
    pos = jax.random.uniform(k_pos, (B * N, 3), dtype=jnp.float32)
    x = jax.random.normal(k_x, (B * N, C), dtype=jnp.float32)
    batch = jnp.repeat(jnp.arange(B, dtype=jnp.int32), N)

    # deterministic synthetic parameters for nn = Seq(Lin(C+3,H), ReLU, Lin(H,H), ReLU)
    kw = jax.random.PRNGKey(1)
    kw1, kw2, kb1, kb2 = jax.random.split(kw, 4)
    w1 = jax.random.normal(kw1, (C + 3, H), dtype=jnp.float32) * 0.3
    b1 = jax.random.normal(kb1, (1, H), dtype=jnp.float32) * 0.1
    w2 = jax.random.normal(kw2, (H, H), dtype=jnp.float32) * 0.2
    b2 = jax.random.normal(kb2, (1, H), dtype=jnp.float32) * 0.1
    params = (w1, b1, w2, b2)

    x_out, pos_out, batch_out = sa_module_forward(
        x, pos, batch, ratio=ratio, r=r, params=params, B=B, N=N)
    jax.block_until_ready((x_out, pos_out, batch_out))

    assert x_out.shape == (B * M, H)
    assert pos_out.shape == (B * M, 3)
    assert batch_out.shape == (B * M,)

    # verify the Pallas PointConv against the pure-JAX reference
    xb = x.reshape(B, N, C)
    posb = pos.reshape(B, N, 3)
    idx_local = jax.vmap(functools.partial(_fps_single, M=M))(posb)
    cpos = jax.vmap(lambda p, i: p[i])(posb, idx_local)
    ref = pointconv_reference(xb, posb, cpos, params, r).reshape(B * M, H)
    if LAYER2_BF16:
        # tolerance deliberately loosened: layer-2 dot uses bf16 operands (f32 accumulation)
        rtol, atol = 5e-2, 1e-1
    else:
        rtol, atol = 2e-5, 1e-5
    np.testing.assert_allclose(np.asarray(x_out), np.asarray(ref), rtol=rtol, atol=atol)

    print("KERNEL_OK")
</pallas_src>

<mosaic_0001>
module attributes {stable_mosaic.version = 11 : i64} {
  func.func @kernel(%arg0: memref<32x28xf32, #tpu.memory_space<vmem>>, %arg1: memref<2x32x5xf32, #tpu.memory_space<vmem>>, %arg2: memref<32x5x128xf32, #tpu.memory_space<vmem>>, %arg3: memref<28x128xf32, #tpu.memory_space<vmem>>, %arg4: memref<5x128xf32, #tpu.memory_space<vmem>>, %arg5: memref<1x128xf32, #tpu.memory_space<vmem>>, %arg6: memref<128x128xbf16, #tpu.memory_space<vmem>>, %arg7: memref<1x128xf32, #tpu.memory_space<vmem>>, %arg8: memref<64x32xf32, #tpu.memory_space<vmem>>) attributes {dimension_semantics = [], scalar_prefetch = 0 : i64, scratch_operands = 0 : i64, tpu.core_type = #tpu.core_type<tc>} {
    %c0 = arith.constant 0 : index
    %c0_0 = arith.constant 0 : index
    %0 = vector.load %arg0[%c0, %c0_0] : memref<32x28xf32, #tpu.memory_space<vmem>>, vector<32x28xf32>
    %c0_1 = arith.constant 0 : index
    %c0_2 = arith.constant 0 : index
    %1 = vector.load %arg3[%c0_1, %c0_2] : memref<28x128xf32, #tpu.memory_space<vmem>>, vector<28x128xf32>
    %cst = arith.constant dense<0.000000e+00> : vector<32x128xf32>
    %2 = tpu.matmul %0, %1, %cst {dimension_numbers = #tpu.dot_dimension_numbers<[1], [0], [0], [1], [0, 0, 1, 1], [], []>} : vector<32x28xf32>, vector<28x128xf32>, vector<32x128xf32> -> vector<32x128xf32>
    %c0_3 = arith.constant 0 : index
    %c0_4 = arith.constant 0 : index
    %3 = vector.load %arg5[%c0_3, %c0_4] : memref<1x128xf32, #tpu.memory_space<vmem>>, vector<1x128xf32>
    %4 = vector.broadcast %3 : vector<1x128xf32> to vector<32x128xf32>
    %5 = arith.addf %2, %4 : vector<32x128xf32>
    %c0_5 = arith.constant 0 : index
    %c0_6 = arith.constant 0 : index
    %c0_7 = arith.constant 0 : index
    %6 = vector.load %arg1[%c0_5, %c0_6, %c0_7] : memref<2x32x5xf32, #tpu.memory_space<vmem>>, vector<2x32x5xf32>
    %7 = vector.shape_cast %6 : vector<2x32x5xf32> to vector<64x5xf32>
    %c0_8 = arith.constant 0 : index
    %c0_9 = arith.constant 0 : index
    %8 = vector.load %arg4[%c0_8, %c0_9] : memref<5x128xf32, #tpu.memory_space<vmem>>, vector<5x128xf32>
    %cst_10 = arith.constant dense<0.000000e+00> : vector<64x128xf32>
    %9 = tpu.matmul %7, %8, %cst_10 {dimension_numbers = #tpu.dot_dimension_numbers<[1], [0], [0], [1], [0, 0, 1, 1], [], []>} : vector<64x5xf32>, vector<5x128xf32>, vector<64x128xf32> -> vector<64x128xf32>
    %10 = vector.shape_cast %6 : vector<2x32x5xf32> to vector<2x1x32x5xf32>
    %11 = vector.shape_cast %10 : vector<2x1x32x5xf32> to vector<2x1x32x5xf32>
    %12 = vector.broadcast %11 : vector<2x1x32x5xf32> to vector<2x16x32x5xf32>
    %13 = vector.shape_cast %12 : vector<2x16x32x5xf32> to vector<32x32x5xf32>
    %c0_11 = arith.constant 0 : index
    %c0_12 = arith.constant 0 : index
    %c0_13 = arith.constant 0 : index
    %14 = vector.load %arg2[%c0_11, %c0_12, %c0_13] : memref<32x5x128xf32, #tpu.memory_space<vmem>>, vector<32x5x128xf32>
    "tpu.trace_start"() <{level = 10 : i32, message = "zmk,zkl->zml"}> : () -> ()
    %cst_14 = arith.constant dense<0.000000e+00> : vector<32x32x128xf32>
    %15 = tpu.matmul %13, %14, %cst_14 {dimension_numbers = #tpu.dot_dimension_numbers<[2], [1], [1], [2], [0, 0, 0, 1, 1, 2], [0], [0]>} : vector<32x32x5xf32>, vector<32x5x128xf32>, vector<32x32x128xf32> -> vector<32x32x128xf32>
    %cst_15 = arith.constant 1.600000e-01 : f32
    "tpu.trace_stop"() : () -> ()
    %16 = vector.broadcast %cst_15 : f32 to vector<32x32x128xf32>
    %17 = arith.cmpf ole, %15, %16 : vector<32x32x128xf32>
    %18 = vector.shape_cast %17 : vector<32x32x128xi1> to vector<2x16x32x128xi1>
    %19 = vector.shape_cast %5 : vector<32x128xf32> to vector<2x16x1x128xf32>
    %20 = vector.shape_cast %9 : vector<64x128xf32> to vector<2x1x32x128xf32>
    %21 = vector.broadcast %19 : vector<2x16x1x128xf32> to vector<2x16x32x128xf32>
    %22 = vector.broadcast %20 : vector<2x1x32x128xf32> to vector<2x16x32x128xf32>
    %23 = arith.subf %21, %22 : vector<2x16x32x128xf32>
    %cst_16 = arith.constant 0.000000e+00 : f32
    %24 = vector.broadcast %cst_16 : f32 to vector<2x16x32x128xf32>
    %25 = arith.maximumf %23, %24 : vector<2x16x32x128xf32>
    %26 = vector.shape_cast %25 : vector<2x16x32x128xf32> to vector<1024x128xf32>
    %27 = arith.truncf %26 : vector<1024x128xf32> to vector<1024x128xbf16>
    %c0_17 = arith.constant 0 : index
    %c0_18 = arith.constant 0 : index
    %28 = vector.load %arg6[%c0_17, %c0_18] : memref<128x128xbf16, #tpu.memory_space<vmem>>, vector<128x128xbf16>
    %cst_19 = arith.constant dense<0.000000e+00> : vector<1024x128xf32>
    %29 = tpu.matmul %27, %28, %cst_19 {dimension_numbers = #tpu.dot_dimension_numbers<[1], [0], [0], [1], [0, 0, 1, 1], [], []>} : vector<1024x128xbf16>, vector<128x128xbf16>, vector<1024x128xf32> -> vector<1024x128xf32>
    %c0_20 = arith.constant 0 : index
    %c0_21 = arith.constant 0 : index
    %30 = vector.load %arg7[%c0_20, %c0_21] : memref<1x128xf32, #tpu.memory_space<vmem>>, vector<1x128xf32>
    %31 = vector.broadcast %30 : vector<1x128xf32> to vector<1024x128xf32>
    %32 = arith.addf %29, %31 : vector<1024x128xf32>
    %cst_22 = arith.constant 0.000000e+00 : f32
    %33 = vector.broadcast %cst_22 : f32 to vector<1024x128xf32>
    %34 = arith.maximumf %32, %33 : vector<1024x128xf32>
    %35 = vector.shape_cast %34 : vector<1024x128xf32> to vector<2x16x32x128xf32>
    %cst_23 = arith.constant 0.000000e+00 : f32
    %36 = vector.broadcast %cst_23 : f32 to vector<2x16x32x128xf32>
    %37 = arith.select %18, %35, %36 : vector<2x16x32x128xi1>, vector<2x16x32x128xf32>
    %cst_24 = arith.constant dense<0xFF800000> : vector<2x32x128xf32>
    %38 = vector.multi_reduction <maximumf>, %37, %cst_24 [1] : vector<2x16x32x128xf32> to vector<2x32x128xf32>
    %39 = vector.shape_cast %38 : vector<2x32x128xf32> to vector<64x128xf32>
    %c64_i32 = arith.constant 64 : i32
    %40 = tpu.dynamic_rotate %39 by %c64_i32 dim 1 : vector<64x128xf32>, i32 -> vector<64x128xf32>
    %41 = arith.maximumf %39, %40 : vector<64x128xf32>
    %c32_i32 = arith.constant 32 : i32
    %42 = tpu.dynamic_rotate %41 by %c32_i32 dim 1 : vector<64x128xf32>, i32 -> vector<64x128xf32>
    %43 = arith.maximumf %41, %42 : vector<64x128xf32>
    %44 = vector.extract_strided_slice %43 {offsets = [0, 0], sizes = [64, 32], strides = [1, 1]} : vector<64x128xf32> to vector<64x32xf32>
    %c0_25 = arith.constant 0 : index
    %c0_26 = arith.constant 0 : index
    %45 = vector.load %arg8[%c0_25, %c0_26] : memref<64x32xf32, #tpu.memory_space<vmem>>, vector<64x32xf32>
    tpu.vector_store %arg8[%c0_25, %c0_26], %44 {strides = array<i32>} : memref<64x32xf32, #tpu.memory_space<vmem>>, vector<64x32xf32>,
    return
  }
}

</mosaic_0001>

<llo_original>
// kernel: tpu_custom_call.1
$region0: #{tpu_custom_call.1}
  #allocation0 [shape = 'u32[]', space=smem, size = 0x4, offset = 0x4, fixed_abs, tag = 'smem constant byte address 0x4 - core index']
  #allocation1 [shape = 'u32[144,128]{1,0:T(1,128)}', space=vmem, size = 0x12000, scoped, tag = 'internal scratch']
  %s0 = inlined_call_operand.vmem [shape: f32[32,28], index: 0, kind: input, shape index: {}]
  %s1 = inlined_call_operand.vmem [shape: f32[2,32,5], index: 1, kind: input, shape index: {}]
  %s2 = inlined_call_operand.vmem [shape: f32[32,5,128], index: 2, kind: input, shape index: {}]
  %s3 = inlined_call_operand.vmem [shape: f32[28,128], index: 3, kind: input, shape index: {}]
  %s4 = inlined_call_operand.vmem [shape: f32[5,128], index: 4, kind: input, shape index: {}]
  %s5 = inlined_call_operand.vmem [shape: f32[1,128], index: 5, kind: input, shape index: {}]
  %s6 = inlined_call_operand.vmem [shape: bf16[128,128], index: 6, kind: input, shape index: {}]
  %s7 = inlined_call_operand.vmem [shape: f32[1,128], index: 7, kind: input, shape index: {}]
  %s8 = inlined_call_operand.vmem [shape: f32[64,32], index: 8, kind: output, shape index: {}]
  %s9 = sld [smem:[#allocation0]]
  $region42: #{tpu_custom_call.1} parent=0
    _
  %s11 = ssub.s32 1, %s9
  %s12 = scalar_select 0, %s11, %s9
  // Predicated region
  $region2: #{tpu_custom_call.1} parent=0 // pred_check
    _
  $region3: #{tpu_custom_call.1} parent=0 // pred_check_branch
    %14 = sbr.rel (0) target = $region5
  $region4: #{tpu_custom_call.1} parent=0 // pred_region
    _
  $region5: #{tpu_custom_call.1} parent=0 // pred_fallthru
    _
  // Predicated region
  $region6: #{tpu_custom_call.1} parent=0 // pred_check
    _
  $region7: #{tpu_custom_call.1} parent=0 // pred_check_branch
    %16 = sbr.rel (0) target = $region9
  $region8: #{tpu_custom_call.1} parent=0 // pred_region
    _
  $region9: #{tpu_custom_call.1} parent=0 // pred_fallthru
    _
  // Predicated region
  $region10: #{tpu_custom_call.1} parent=0 // pred_check
    _
  $region11: #{tpu_custom_call.1} parent=0 // pred_check_branch
    %18 = sbr.rel (0) target = $region13
  $region12: #{tpu_custom_call.1} parent=0 // pred_region
    _
  $region13: #{tpu_custom_call.1} parent=0 // pred_fallthru
    _
  // Predicated region
  $region14: #{tpu_custom_call.1} parent=0 // pred_check
    _
  $region15: #{tpu_custom_call.1} parent=0 // pred_check_branch
    %20 = sbr.rel (0) target = $region17
  $region16: #{tpu_custom_call.1} parent=0 // pred_region
    _
  $region17: #{tpu_custom_call.1} parent=0 // pred_fallthru
    _
  // Predicated region
  $region18: #{tpu_custom_call.1} parent=0 // pred_check
    _
  $region19: #{tpu_custom_call.1} parent=0 // pred_check_branch
    %22 = sbr.rel (0) target = $region21
  $region20: #{tpu_custom_call.1} parent=0 // pred_region
    _
  $region21: #{tpu_custom_call.1} parent=0 // pred_fallthru
    _
  // Predicated region
  $region22: #{tpu_custom_call.1} parent=0 // pred_check
    _
  $region23: #{tpu_custom_call.1} parent=0 // pred_check_branch
    %24 = sbr.rel (0) target = $region25
  $region24: #{tpu_custom_call.1} parent=0 // pred_region
    _
  $region25: #{tpu_custom_call.1} parent=0 // pred_fallthru
    _
  // Predicated region
  $region26: #{tpu_custom_call.1} parent=0 // pred_check
    _
  $region27: #{tpu_custom_call.1} parent=0 // pred_check_branch
    %26 = sbr.rel (0) target = $region29
  $region28: #{tpu_custom_call.1} parent=0 // pred_region
    _
  $region29: #{tpu_custom_call.1} parent=0 // pred_fallthru
    _
  // Predicated region
  $region30: #{tpu_custom_call.1} parent=0 // pred_check
    _
  $region31: #{tpu_custom_call.1} parent=0 // pred_check_branch
    %28 = sbr.rel (0) target = $region33
  $region32: #{tpu_custom_call.1} parent=0 // pred_region
    _
  $region33: #{tpu_custom_call.1} parent=0 // pred_fallthru
    _
  %v30 = vld [vmem:[%s0] sm:$0xff]
  %v31 = vld [vmem:[%s0 + $0x8] sm:$0xff]
  %v32 = vld [vmem:[%s0 + $0x10] sm:$0xff]
  %v33 = vld [vmem:[%s0 + $0x18] sm:$0xff]
  %v34 = vld [vmem:[%s3] sm:$0xff]
  %v35 = vld [vmem:[%s3 + $0x8] sm:$0xff]
  %v36 = vld [vmem:[%s3 + $0x10] sm:$0xff]
  %v37 = vld [vmem:[%s3 + $0x18] sm:$0xf]
  %v38 = vld [vmem:[%s5] sm:$0x1]
  %v40 = vlaneseq
  %v41 = vshrl.u32 %v40, 7
  %v42 = vsub.s32 0, %v41
  %v43 = vrot.slane %v38, %v42
  %vm45 = vcmask 228352
  %v47 = vsel %vm45, %v30, 0
  %v50 = vsel %vm45, %v31, 0
  %v53 = vsel %vm45, %v32, 0
  %v56 = vsel %vm45, %v33, 0
  %vm58 = vcmask 1043456
  %v60 = vsel %vm58, %v37, 0
  %62 = vmatprep.subr.mxu0 0.0
  %63 = vmatpush1.msra.mxu0 0.0
  %64 = vmatprep.subr.mxu0 0.0
  %65 = vmatpush1.msra.mxu0 0.0
  %66 = vmatprep.subr.mxu0 0.0
  %67 = vmatpush1.msra.mxu0 0.0
  %68 = vmatprep.subr.mxu0 0.0
  %69 = vmatpush1.msra.mxu0 0.0
  %70 = vmatprep.subr.mxu0 0.0
  %71 = vmatpush1.msra.mxu0 0.0
  %72 = vmatprep.subr.mxu0 0.0
  %73 = vmatpush1.msra.mxu0 0.0
  %74 = vmatprep.subr.mxu0 0.0
  %75 = vmatpush1.msra.mxu0 0.0
  %76 = vmatprep.subr.mxu0 0.0
  %77 = vmatpush1.msra.mxu0 0.0
  %78 = vmatprep.subr.mxu0 0.0
  %79 = vmatpush1.msra.mxu0 0.0
  %80 = vmatprep.subr.mxu0 0.0
  %81 = vmatpush1.msra.mxu0 0.0
  %82 = vmatprep.subr.mxu0 0.0
  %83 = vmatpush1.msra.mxu0 0.0
  %84 = vmatprep.subr.mxu0 0.0
  %85 = vmatpush1.msra.mxu0 0.0
  %86 = vmatprep.subr.mxu0 0.0
  %87 = vmatpush1.msra.mxu0 %v60
  %88 = vmatprep.subr.mxu0 0.0
  %89 = vmatpush1.msra.mxu0 %v36
  %90 = vmatprep.subr.mxu0 0.0
  %91 = vmatpush1.msra.mxu0 %v35
  %92 = vmatprep.subr.mxu0 0.0
  %93 = vmatpush1.msra.mxu0 %v34
  %94 = vmatprep.subr.mxu0 0.0
  %95 = vmatpush2.msra.mxu0 0.0
  %96 = vmatprep.subr.mxu0 0.0
  %97 = vmatpush2.msra.mxu0 0.0
  %98 = vmatprep.subr.mxu0 0.0
  %99 = vmatpush2.msra.mxu0 0.0
  %100 = vmatprep.subr.mxu0 0.0
  %101 = vmatpush2.msra.mxu0 0.0
  %102 = vmatprep.subr.mxu0 0.0
  %103 = vmatpush2.msra.mxu0 0.0
  %104 = vmatprep.subr.mxu0 0.0
  %105 = vmatpush2.msra.mxu0 0.0
  %106 = vmatprep.subr.mxu0 0.0
  %107 = vmatpush2.msra.mxu0 0.0
  %108 = vmatprep.subr.mxu0 0.0
  %109 = vmatpush2.msra.mxu0 0.0
  %110 = vmatprep.subr.mxu0 0.0
  %111 = vmatpush2.msra.mxu0 0.0
  %112 = vmatprep.subr.mxu0 0.0
  %113 = vmatpush2.msra.mxu0 0.0
  %114 = vmatprep.subr.mxu0 0.0
  %115 = vmatpush2.msra.mxu0 0.0
  %116 = vmatprep.subr.mxu0 0.0
  %117 = vmatpush2.msra.mxu0 0.0
  %118 = vmatprep.subr.mxu0 0.0
  %119 = vmatpush2.msra.mxu0 0.0
  %120 = vmatprep.subr.mxu0 0.0
  %121 = vmatpush2.msra.mxu0 0.0
  %122 = vmatprep.subr.mxu0 0.0
  %123 = vmatpush2.msra.mxu0 0.0
  %124 = vmatprep.subr.mxu0 0.0
  %125 = vmatpush2.msra.mxu0 0.0
  %126 = vmatprep.mubr.f32.mxu0 0.0
  %127 = vmatmul.mubr.f32.gmra.mxu0 %v47
  %v128 = vpop.f32.mrf.mxu0
  %v129 = vadd.f32 %v43, %v128
  %v130 = vpop.f32.mrf.mxu0
  %131 = vmatprep.mubr.f32.mxu0 0.0
  %132 = vmatmul.mubr.f32.gmra.mxu0 %v50
  %v133 = vpop.f32.mrf.mxu0
  %v134 = vadd.f32 %v43, %v133
  %v135 = vpop.f32.mrf.mxu0
  %136 = vmatprep.mubr.f32.mxu0 0.0
  %137 = vmatmul.mubr.f32.gmra.mxu0 %v53
  %v138 = vpop.f32.mrf.mxu0
  %v139 = vadd.f32 %v43, %v138
  %v140 = vpop.f32.mrf.mxu0
  %141 = vmatprep.mubr.f32.mxu0 0.0
  %142 = vmatmul.mubr.f32.gmra.mxu0 %v56
  %v143 = vpop.f32.mrf.mxu0
  %v144 = vadd.f32 %v43, %v143
  %v145 = vpop.f32.mrf.mxu0
  %146 = vdwg.mxu0
  %v147 = vld [vmem:[%s1] sm:$0xff]
  %v148 = vld [vmem:[%s1 + $0x8] sm:$0xff]
  %v149 = vld [vmem:[%s1 + $0x10] sm:$0xff]
  %v150 = vld [vmem:[%s1 + $0x18] sm:$0xff]
  %v151 = vld [vmem:[%s1 + $0x20] sm:$0xff]
  %v152 = vld [vmem:[%s1 + $0x28] sm:$0xff]
  %v153 = vld [vmem:[%s1 + $0x30] sm:$0xff]
  %v154 = vld [vmem:[%s1 + $0x38] sm:$0xff]
  %v155 = vld [vmem:[%s4] sm:$0x1f]
  %vm156 = vcmask 39936
  %v158 = vsel %vm156, %v147, 0
  %v161 = vsel %vm156, %v148, 0
  %v164 = vsel %vm156, %v149, 0
  %v167 = vsel %vm156, %v150, 0
  %v170 = vsel %vm156, %v151, 0
  %v173 = vsel %vm156, %v152, 0
  %v176 = vsel %vm156, %v153, 0
  %v179 = vsel %vm156, %v154, 0
  %vm181 = vcmask 1044480
  %v183 = vsel %vm181, %v155, 0
  %185 = vmatprep.subr.mxu0 0.0
  %186 = vmatpush1.msra.mxu0 0.0
  %187 = vmatprep.subr.mxu0 0.0
  %188 = vmatpush1.msra.mxu0 0.0
  %189 = vmatprep.subr.mxu0 0.0
  %190 = vmatpush1.msra.mxu0 0.0
  %191 = vmatprep.subr.mxu0 0.0
  %192 = vmatpush1.msra.mxu0 0.0
  %193 = vmatprep.subr.mxu0 0.0
  %194 = vmatpush1.msra.mxu0 0.0
  %195 = vmatprep.subr.mxu0 0.0
  %196 = vmatpush1.msra.mxu0 0.0
  %197 = vmatprep.subr.mxu0 0.0
  %198 = vmatpush1.msra.mxu0 0.0
  %199 = vmatprep.subr.mxu0 0.0
  %200 = vmatpush1.msra.mxu0 0.0
  %201 = vmatprep.subr.mxu0 0.0
  %202 = vmatpush1.msra.mxu0 0.0
  %203 = vmatprep.subr.mxu0 0.0
  %204 = vmatpush1.msra.mxu0 0.0
  %205 = vmatprep.subr.mxu0 0.0
  %206 = vmatpush1.msra.mxu0 0.0
  %207 = vmatprep.subr.mxu0 0.0
  %208 = vmatpush1.msra.mxu0 0.0
  %209 = vmatprep.subr.mxu0 0.0
  %210 = vmatpush1.msra.mxu0 0.0
  %211 = vmatprep.subr.mxu0 0.0
  %212 = vmatpush1.msra.mxu0 0.0
  %213 = vmatprep.subr.mxu0 0.0
  %214 = vmatpush1.msra.mxu0 0.0
  %215 = vmatprep.subr.mxu0 0.0
  %216 = vmatpush1.msra.mxu0 %v183
  %217 = vmatprep.subr.mxu0 0.0
  %218 = vmatpush2.msra.mxu0 0.0
  %219 = vmatprep.subr.mxu0 0.0
  %220 = vmatpush2.msra.mxu0 0.0
  %221 = vmatprep.subr.mxu0 0.0
  %222 = vmatpush2.msra.mxu0 0.0
  %223 = vmatprep.subr.mxu0 0.0
  %224 = vmatpush2.msra.mxu0 0.0
  %225 = vmatprep.subr.mxu0 0.0
  %226 = vmatpush2.msra.mxu0 0.0
  %227 = vmatprep.subr.mxu0 0.0
  %228 = vmatpush2.msra.mxu0 0.0
  %229 = vmatprep.subr.mxu0 0.0
  %230 = vmatpush2.msra.mxu0 0.0
  %231 = vmatprep.subr.mxu0 0.0
  %232 = vmatpush2.msra.mxu0 0.0
  %233 = vmatprep.subr.mxu0 0.0
  %234 = vmatpush2.msra.mxu0 0.0
  %235 = vmatprep.subr.mxu0 0.0
  %236 = vmatpush2.msra.mxu0 0.0
  %237 = vmatprep.subr.mxu0 0.0
  %238 = vmatpush2.msra.mxu0 0.0
  %239 = vmatprep.subr.mxu0 0.0
  %240 = vmatpush2.msra.mxu0 0.0
  %241 = vmatprep.subr.mxu0 0.0
  %242 = vmatpush2.msra.mxu0 0.0
  %243 = vmatprep.subr.mxu0 0.0
  %244 = vmatpush2.msra.mxu0 0.0
  %245 = vmatprep.subr.mxu0 0.0
  %246 = vmatpush2.msra.mxu0 0.0
  %247 = vmatprep.subr.mxu0 0.0
  %248 = vmatpush2.msra.mxu0 0.0
  %249 = vmatprep.mubr.f32.mxu0 0.0
  %250 = vmatmul.mubr.f32.gmra.mxu0 %v158
  %v251 = vpop.f32.mrf.mxu0
  %v252 = vadd.f32 0.0, %v251
  %v253 = vpop.f32.mrf.mxu0
  %254 = vmatprep.mubr.f32.mxu0 0.0
  %255 = vmatmul.mubr.f32.gmra.mxu0 %v161
  %v256 = vpop.f32.mrf.mxu0
  %v257 = vadd.f32 0.0, %v256
  %v258 = vpop.f32.mrf.mxu0
  %259 = vmatprep.mubr.f32.mxu0 0.0
  %260 = vmatmul.mubr.f32.gmra.mxu0 %v164
  %v261 = vpop.f32.mrf.mxu0
  %v262 = vadd.f32 0.0, %v261
  %v263 = vpop.f32.mrf.mxu0
  %264 = vmatprep.mubr.f32.mxu0 0.0
  %265 = vmatmul.mubr.f32.gmra.mxu0 %v167
  %v266 = vpop.f32.mrf.mxu0
  %v267 = vadd.f32 0.0, %v266
  %v268 = vpop.f32.mrf.mxu0
  %269 = vmatprep.mubr.f32.mxu0 0.0
  %270 = vmatmul.mubr.f32.gmra.mxu0 %v170
  %v271 = vpop.f32.mrf.mxu0
  %v272 = vadd.f32 0.0, %v271
  %v273 = vpop.f32.mrf.mxu0
  %274 = vmatprep.mubr.f32.mxu0 0.0
  %275 = vmatmul.mubr.f32.gmra.mxu0 %v173
  %v276 = vpop.f32.mrf.mxu0
  %v277 = vadd.f32 0.0, %v276
  %v278 = vpop.f32.mrf.mxu0
  %279 = vmatprep.mubr.f32.mxu0 0.0
  %280 = vmatmul.mubr.f32.gmra.mxu0 %v176
  %v281 = vpop.f32.mrf.mxu0
  %v282 = vadd.f32 0.0, %v281
  %v283 = vpop.f32.mrf.mxu0
  %284 = vmatprep.mubr.f32.mxu0 0.0
  %285 = vmatmul.mubr.f32.gmra.mxu0 %v179
  %v286 = vpop.f32.mrf.mxu0
  %v287 = vadd.f32 0.0, %v286
  %v288 = vpop.f32.mrf.mxu0
  %289 = vdwg.mxu0
  %v290 = vld [vmem:[%s2] sm:$0x1f]
  %v291 = vld [vmem:[%s2 + $0x8] sm:$0x1f]
  %v292 = vld [vmem:[%s2 + $0x10] sm:$0x1f]
  %v293 = vld [vmem:[%s2 + $0x18] sm:$0x1f]
  %v294 = vld [vmem:[%s2 + $0x20] sm:$0x1f]
  %v295 = vld [vmem:[%s2 + $0x28] sm:$0x1f]
  %v296 = vld [vmem:[%s2 + $0x30] sm:$0x1f]
  %v297 = vld [vmem:[%s2 + $0x38] sm:$0x1f]
  %v298 = vld [vmem:[%s2 + $0x40] sm:$0x1f]
  %v299 = vld [vmem:[%s2 + $0x48] sm:$0x1f]
  %v300 = vld [vmem:[%s2 + $0x50] sm:$0x1f]
  %v301 = vld [vmem:[%s2 + $0x58] sm:$0x1f]
  %v302 = vld [vmem:[%s2 + $0x60] sm:$0x1f]
  %v303 = vld [vmem:[%s2 + $0x68] sm:$0x1f]
  %v304 = vld [vmem:[%s2 + $0x70] sm:$0x1f]
  %v305 = vld [vmem:[%s2 + $0x78] sm:$0x1f]
  %v306 = vld [vmem:[%s2 + $0x80] sm:$0x1f]
  %v307 = vld [vmem:[%s2 + $0x88] sm:$0x1f]
  %v308 = vld [vmem:[%s2 + $0x90] sm:$0x1f]
  %v309 = vld [vmem:[%s2 + $0x98] sm:$0x1f]
  %v310 = vld [vmem:[%s2 + $0xa0] sm:$0x1f]
  %v311 = vld [vmem:[%s2 + $0xa8] sm:$0x1f]
  %v312 = vld [vmem:[%s2 + $0xb0] sm:$0x1f]
  %v313 = vld [vmem:[%s2 + $0xb8] sm:$0x1f]
  %v314 = vld [vmem:[%s2 + $0xc0] sm:$0x1f]
  %v315 = vld [vmem:[%s2 + $0xc8] sm:$0x1f]
  %v316 = vld [vmem:[%s2 + $0xd0] sm:$0x1f]
  %v317 = vld [vmem:[%s2 + $0xd8] sm:$0x1f]
  %v318 = vld [vmem:[%s2 + $0xe0] sm:$0x1f]
  %v319 = vld [vmem:[%s2 + $0xe8] sm:$0x1f]
  %v320 = vld [vmem:[%s2 + $0xf0] sm:$0x1f]
  %v321 = vld [vmem:[%s2 + $0xf8] sm:$0x1f]
  %v323 = vsel %vm181, %v290, 0
  %325 = vmatprep.subr.mxu0 0.0
  %326 = vmatpush1.msra.mxu0 0.0
  %327 = vmatprep.subr.mxu0 0.0
  %328 = vmatpush1.msra.mxu0 0.0
  %329 = vmatprep.subr.mxu0 0.0
  %330 = vmatpush1.msra.mxu0 0.0
  %331 = vmatprep.subr.mxu0 0.0
  %332 = vmatpush1.msra.mxu0 0.0
  %333 = vmatprep.subr.mxu0 0.0
  %334 = vmatpush1.msra.mxu0 0.0
  %335 = vmatprep.subr.mxu0 0.0
  %336 = vmatpush1.msra.mxu0 0.0
  %337 = vmatprep.subr.mxu0 0.0
  %338 = vmatpush1.msra.mxu0 0.0
  %339 = vmatprep.subr.mxu0 0.0
  %340 = vmatpush1.msra.mxu0 0.0
  %341 = vmatprep.subr.mxu0 0.0
  %342 = vmatpush1.msra.mxu0 0.0
  %343 = vmatprep.subr.mxu0 0.0
  %344 = vmatpush1.msra.mxu0 0.0
  %345 = vmatprep.subr.mxu0 0.0
  %346 = vmatpush1.msra.mxu0 0.0
  %347 = vmatprep.subr.mxu0 0.0
  %348 = vmatpush1.msra.mxu0 0.0
  %349 = vmatprep.subr.mxu0 0.0
  %350 = vmatpush1.msra.mxu0 0.0
  %351 = vmatprep.subr.mxu0 0.0
  %352 = vmatpush1.msra.mxu0 0.0
  %353 = vmatprep.subr.mxu0 0.0
  %354 = vmatpush1.msra.mxu0 0.0
  %355 = vmatprep.subr.mxu0 0.0
  %356 = vmatpush1.msra.mxu0 %v323
  %357 = vmatprep.subr.mxu0 0.0
  %358 = vmatpush2.msra.mxu0 0.0
  %359 = vmatprep.subr.mxu0 0.0
  %360 = vmatpush2.msra.mxu0 0.0
  %361 = vmatprep.subr.mxu0 0.0
  %362 = vmatpush2.msra.mxu0 0.0
  %363 = vmatprep.subr.mxu0 0.0
  %364 = vmatpush2.msra.mxu0 0.0
  %365 = vmatprep.subr.mxu0 0.0
  %366 = vmatpush2.msra.mxu0 0.0
  %367 = vmatprep.subr.mxu0 0.0
  %368 = vmatpush2.msra.mxu0 0.0
  %369 = vmatprep.subr.mxu0 0.0
  %370 = vmatpush2.msra.mxu0 0.0
  %371 = vmatprep.subr.mxu0 0.0
  %372 = vmatpush2.msra.mxu0 0.0
  %373 = vmatprep.subr.mxu0 0.0
  %374 = vmatpush2.msra.mxu0 0.0
  %375 = vmatprep.subr.mxu0 0.0
  %376 = vmatpush2.msra.mxu0 0.0
  %377 = vmatprep.subr.mxu0 0.0
  %378 = vmatpush2.msra.mxu0 0.0
  %379 = vmatprep.subr.mxu0 0.0
  %380 = vmatpush2.msra.mxu0 0.0
  %381 = vmatprep.subr.mxu0 0.0
  %382 = vmatpush2.msra.mxu0 0.0
  %383 = vmatprep.subr.mxu0 0.0
  %384 = vmatpush2.msra.mxu0 0.0
  %385 = vmatprep.subr.mxu0 0.0
  %386 = vmatpush2.msra.mxu0 0.0
  %387 = vmatprep.subr.mxu0 0.0
  %388 = vmatpush2.msra.mxu0 0.0
  %389 = vmatprep.mubr.f32.mxu0 0.0
  %390 = vmatmul.mubr.f32.gmra.mxu0 %v158
  %v391 = vpop.f32.mrf.mxu0
  %v392 = vadd.f32 0.0, %v391
  %v393 = vpop.f32.mrf.mxu0
  %394 = vmatprep.mubr.f32.mxu0 0.0
  %395 = vmatmul.mubr.f32.gmra.mxu0 %v161
  %v396 = vpop.f32.mrf.mxu0
  %v397 = vadd.f32 0.0, %v396
  %v398 = vpop.f32.mrf.mxu0
  %399 = vmatprep.mubr.f32.mxu0 0.0
  %400 = vmatmul.mubr.f32.gmra.mxu0 %v164
  %v401 = vpop.f32.mrf.mxu0
  %v402 = vadd.f32 0.0, %v401
  %v403 = vpop.f32.mrf.mxu0
  %404 = vmatprep.mubr.f32.mxu0 0.0
  %405 = vmatmul.mubr.f32.gmra.mxu0 %v167
  %v406 = vpop.f32.mrf.mxu0
  %v407 = vadd.f32 0.0, %v406
  %v408 = vpop.f32.mrf.mxu0
  %409 = vdwg.mxu0
  %v411 = vsel %vm181, %v291, 0
  %413 = vmatprep.subr.mxu0 0.0
  %414 = vmatpush1.msra.mxu0 0.0
  %415 = vmatprep.subr.mxu0 0.0
  %416 = vmatpush1.msra.mxu0 0.0
  %417 = vmatprep.subr.mxu0 0.0
  %418 = vmatpush1.msra.mxu0 0.0
  %419 = vmatprep.subr.mxu0 0.0
  %420 = vmatpush1.msra.mxu0 0.0
  %421 = vmatprep.subr.mxu0 0.0
  %422 = vmatpush1.msra.mxu0 0.0
  %423 = vmatprep.subr.mxu0 0.0
  %424 = vmatpush1.msra.mxu0 0.0
  %425 = vmatprep.subr.mxu0 0.0
  %426 = vmatpush1.msra.mxu0 0.0
  %427 = vmatprep.subr.mxu0 0.0
  %428 = vmatpush1.msra.mxu0 0.0
  %429 = vmatprep.subr.mxu0 0.0
  %430 = vmatpush1.msra.mxu0 0.0
  %431 = vmatprep.subr.mxu0 0.0
  %432 = vmatpush1.msra.mxu0 0.0
  %433 = vmatprep.subr.mxu0 0.0
  %434 = vmatpush1.msra.mxu0 0.0
  %435 = vmatprep.subr.mxu0 0.0
  %436 = vmatpush1.msra.mxu0 0.0
  %437 = vmatprep.subr.mxu0 0.0
  %438 = vmatpush1.msra.mxu0 0.0
  %439 = vmatprep.subr.mxu0 0.0
  %440 = vmatpush1.msra.mxu0 0.0
  %441 = vmatprep.subr.mxu0 0.0
  %442 = vmatpush1.msra.mxu0 0.0
  %443 = vmatprep.subr.mxu0 0.0
  %444 = vmatpush1.msra.mxu0 %v411
  %445 = vmatprep.subr.mxu0 0.0
  %446 = vmatpush2.msra.mxu0 0.0
  %447 = vmatprep.subr.mxu0 0.0
  %448 = vmatpush2.msra.mxu0 0.0
  %449 = vmatprep.subr.mxu0 0.0
  %450 = vmatpush2.msra.mxu0 0.0
  %451 = vmatprep.subr.mxu0 0.0
  %452 = vmatpush2.msra.mxu0 0.0
  %453 = vmatprep.subr.mxu0 0.0
  %454 = vmatpush2.msra.mxu0 0.0
  %455 = vmatprep.subr.mxu0 0.0
  %456 = vmatpush2.msra.mxu0 0.0
  %457 = vmatprep.subr.mxu0 0.0
  %458 = vmatpush2.msra.mxu0 0.0
  %459 = vmatprep.subr.mxu0 0.0
  %460 = vmatpush2.msra.mxu0 0.0
  %461 = vmatprep.subr.mxu0 0.0
  %462 = vmatpush2.msra.mxu0 0.0
  %463 = vmatprep.subr.mxu0 0.0
  %464 = vmatpush2.msra.mxu0 0.0
  %465 = vmatprep.subr.mxu0 0.0
  %466 = vmatpush2.msra.mxu0 0.0
  %467 = vmatprep.subr.mxu0 0.0
  %468 = vmatpush2.msra.mxu0 0.0
  %469 = vmatprep.subr.mxu0 0.0
  %470 = vmatpush2.msra.mxu0 0.0
  %471 = vmatprep.subr.mxu0 0.0
  %472 = vmatpush2.msra.mxu0 0.0
  %473 = vmatprep.subr.mxu0 0.0
  %474 = vmatpush2.msra.mxu0 0.0
  %475 = vmatprep.subr.mxu0 0.0
  %476 = vmatpush2.msra.mxu0 0.0
  %477 = vmatprep.mubr.f32.mxu0 0.0
  %478 = vmatmul.mubr.f32.gmra.mxu0 %v158
  %v479 = vpop.f32.mrf.mxu0
  %v480 = vadd.f32 0.0, %v479
  %v481 = vpop.f32.mrf.mxu0
  %482 = vmatprep.mubr.f32.mxu0 0.0
  %483 = vmatmul.mubr.f32.gmra.mxu0 %v161
  %v484 = vpop.f32.mrf.mxu0
  %v485 = vadd.f32 0.0, %v484
  %v486 = vpop.f32.mrf.mxu0
  %487 = vmatprep.mubr.f32.mxu0 0.0
  %488 = vmatmul.mubr.f32.gmra.mxu0 %v164
  %v489 = vpop.f32.mrf.mxu0
  %v490 = vadd.f32 0.0, %v489
  %v491 = vpop.f32.mrf.mxu0
  %492 = vmatprep.mubr.f32.mxu0 0.0
  %493 = vmatmul.mubr.f32.gmra.mxu0 %v167
  %v494 = vpop.f32.mrf.mxu0
  %v495 = vadd.f32 0.0, %v494
  %v496 = vpop.f32.mrf.mxu0
  %497 = vdwg.mxu0
  %v499 = vsel %vm181, %v292, 0
  %501 = vmatprep.subr.mxu0 0.0
  %502 = vmatpush1.msra.mxu0 0.0
  %503 = vmatprep.subr.mxu0 0.0
  %504 = vmatpush1.msra.mxu0 0.0
  %505 = vmatprep.subr.mxu0 0.0
  %506 = vmatpush1.msra.mxu0 0.0
  %507 = vmatprep.subr.mxu0 0.0
  %508 = vmatpush1.msra.mxu0 0.0
  %509 = vmatprep.subr.mxu0 0.0
  %510 = vmatpush1.msra.mxu0 0.0
  %511 = vmatprep.subr.mxu0 0.0
  %512 = vmatpush1.msra.mxu0 0.0
  %513 = vmatprep.subr.mxu0 0.0
  %514 = vmatpush1.msra.mxu0 0.0
  %515 = vmatprep.subr.mxu0 0.0
  %516 = vmatpush1.msra.mxu0 0.0
  %517 = vmatprep.subr.mxu0 0.0
  %518 = vmatpush1.msra.mxu0 0.0
  %519 = vmatprep.subr.mxu0 0.0
  %520 = vmatpush1.msra.mxu0 0.0
  %521 = vmatprep.subr.mxu0 0.0
  %522 = vmatpush1.msra.mxu0 0.0
  %523 = vmatprep.subr.mxu0 0.0
  %524 = vmatpush1.msra.mxu0 0.0
  %525 = vmatprep.subr.mxu0 0.0
  %526 = vmatpush1.msra.mxu0 0.0
  %527 = vmatprep.subr.mxu0 0.0
  %528 = vmatpush1.msra.mxu0 0.0
  %529 = vmatprep.subr.mxu0 0.0
  %530 = vmatpush1.msra.mxu0 0.0
  %531 = vmatprep.subr.mxu0 0.0
  %532 = vmatpush1.msra.mxu0 %v499
  %533 = vmatprep.subr.mxu0 0.0
  %534 = vmatpush2.msra.mxu0 0.0
  %535 = vmatprep.subr.mxu0 0.0
  %536 = vmatpush2.msra.mxu0 0.0
  %537 = vmatprep.subr.mxu0 0.0
  %538 = vmatpush2.msra.mxu0 0.0
  %539 = vmatprep.subr.mxu0 0.0
  %540 = vmatpush2.msra.mxu0 0.0
  %541 = vmatprep.subr.mxu0 0.0
  %542 = vmatpush2.msra.mxu0 0.0
  %543 = vmatprep.subr.mxu0 0.0
  %544 = vmatpush2.msra.mxu0 0.0
  %545 = vmatprep.subr.mxu0 0.0
  %546 = vmatpush2.msra.mxu0 0.0
  %547 = vmatprep.subr.mxu0 0.0
  %548 = vmatpush2.msra.mxu0 0.0
  %549 = vmatprep.subr.mxu0 0.0
  %550 = vmatpush2.msra.mxu0 0.0
  %551 = vmatprep.subr.mxu0 0.0
  %552 = vmatpush2.msra.mxu0 0.0
  %553 = vmatprep.subr.mxu0 0.0
  %554 = vmatpush2.msra.mxu0 0.0
  %555 = vmatprep.subr.mxu0 0.0
  %556 = vmatpush2.msra.mxu0 0.0
  %557 = vmatprep.subr.mxu0 0.0
  %558 = vmatpush2.msra.mxu0 0.0
  %559 = vmatprep.subr.mxu0 0.0
  %560 = vmatpush2.msra.mxu0 0.0
  %561 = vmatprep.subr.mxu0 0.0
  %562 = vmatpush2.msra.mxu0 0.0
  %563 = vmatprep.subr.mxu0 0.0
  %564 = vmatpush2.msra.mxu0 0.0
  %565 = vmatprep.mubr.f32.mxu0 0.0
  %566 = vmatmul.mubr.f32.gmra.mxu0 %v158
  %v567 = vpop.f32.mrf.mxu0
  %v568 = vadd.f32 0.0, %v567
  %v569 = vpop.f32.mrf.mxu0
  %570 = vmatprep.mubr.f32.mxu0 0.0
  %571 = vmatmul.mubr.f32.gmra.mxu0 %v161
  %v572 = vpop.f32.mrf.mxu0
  %v573 = vadd.f32 0.0, %v572
  %v574 = vpop.f32.mrf.mxu0
  %575 = vmatprep.mubr.f32.mxu0 0.0
  %576 = vmatmul.mubr.f32.gmra.mxu0 %v164
  %v577 = vpop.f32.mrf.mxu0
  %v578 = vadd.f32 0.0, %v577
  %v579 = vpop.f32.mrf.mxu0
  %580 = vmatprep.mubr.f32.mxu0 0.0
  %581 = vmatmul.mubr.f32.gmra.mxu0 %v167
  %v582 = vpop.f32.mrf.mxu0
  %v583 = vadd.f32 0.0, %v582
  %v584 = vpop.f32.mrf.mxu0
  %585 = vdwg.mxu0
  %v587 = vsel %vm181, %v293, 0
  %589 = vmatprep.subr.mxu0 0.0
  %590 = vmatpush1.msra.mxu0 0.0
  %591 = vmatprep.subr.mxu0 0.0
  %592 = vmatpush1.msra.mxu0 0.0
  %593 = vmatprep.subr.mxu0 0.0
  %594 = vmatpush1.msra.mxu0 0.0
  %595 = vmatprep.subr.mxu0 0.0
  %596 = vmatpush1.msra.mxu0 0.0
  %597 = vmatprep.subr.mxu0 0.0
  %598 = vmatpush1.msra.mxu0 0.0
  %599 = vmatprep.subr.mxu0 0.0
  %600 = vmatpush1.msra.mxu0 0.0
  %601 = vmatprep.subr.mxu0 0.0
  %602 = vmatpush1.msra.mxu0 0.0
  %603 = vmatprep.subr.mxu0 0.0
  %604 = vmatpush1.msra.mxu0 0.0
  %605 = vmatprep.subr.mxu0 0.0
  %606 = vmatpush1.msra.mxu0 0.0
  %607 = vmatprep.subr.mxu0 0.0
  %608 = vmatpush1.msra.mxu0 0.0
  %609 = vmatprep.subr.mxu0 0.0
  %610 = vmatpush1.msra.mxu0 0.0
  %611 = vmatprep.subr.mxu0 0.0
  %612 = vmatpush1.msra.mxu0 0.0
  %613 = vmatprep.subr.mxu0 0.0
  %614 = vmatpush1.msra.mxu0 0.0
  %615 = vmatprep.subr.mxu0 0.0
  %616 = vmatpush1.msra.mxu0 0.0
  %617 = vmatprep.subr.mxu0 0.0
  %618 = vmatpush1.msra.mxu0 0.0
  %619 = vmatprep.subr.mxu0 0.0
  %620 = vmatpush1.msra.mxu0 %v587
  %621 = vmatprep.subr.mxu0 0.0
  %622 = vmatpush2.msra.mxu0 0.0
  %623 = vmatprep.subr.mxu0 0.0
  %624 = vmatpush2.msra.mxu0 0.0
  %625 = vmatprep.subr.mxu0 0.0
  %626 = vmatpush2.msra.mxu0 0.0
  %627 = vmatprep.subr.mxu0 0.0
  %628 = vmatpush2.msra.mxu0 0.0
  %629 = vmatprep.subr.mxu0 0.0
  %630 = vmatpush2.msra.mxu0 0.0
  %631 = vmatprep.subr.mxu0 0.0
  %632 = vmatpush2.msra.mxu0 0.0
  %633 = vmatprep.subr.mxu0 0.0
  %634 = vmatpush2.msra.mxu0 0.0
  %635 = vmatprep.subr.mxu0 0.0
  %636 = vmatpush2.msra.mxu0 0.0
  %637 = vmatprep.subr.mxu0 0.0
  %638 = vmatpush2.msra.mxu0 0.0
  %639 = vmatprep.subr.mxu0 0.0
  %640 = vmatpush2.msra.mxu0 0.0
  %641 = vmatprep.subr.mxu0 0.0
  %642 = vmatpush2.msra.mxu0 0.0
  %643 = vmatprep.subr.mxu0 0.0
  %644 = vmatpush2.msra.mxu0 0.0
  %645 = vmatprep.subr.mxu0 0.0
  %646 = vmatpush2.msra.mxu0 0.0
  %647 = vmatprep.subr.mxu0 0.0
  %648 = vmatpush2.msra.mxu0 0.0
  %649 = vmatprep.subr.mxu0 0.0
  %650 = vmatpush2.msra.mxu0 0.0
  %651 = vmatprep.subr.mxu0 0.0
  %652 = vmatpush2.msra.mxu0 0.0
  %653 = vmatprep.mubr.f32.mxu0 0.0
  %654 = vmatmul.mubr.f32.gmra.mxu0 %v158
  %v655 = vpop.f32.mrf.mxu0
  %v656 = vadd.f32 0.0, %v655
  %v657 = vpop.f32.mrf.mxu0
  %658 = vmatprep.mubr.f32.mxu0 0.0
  %659 = vmatmul.mubr.f32.gmra.mxu0 %v161
  %v660 = vpop.f32.mrf.mxu0
  %v661 = vadd.f32 0.0, %v660
  %v662 = vpop.f32.mrf.mxu0
  %663 = vmatprep.mubr.f32.mxu0 0.0
  %664 = vmatmul.mubr.f32.gmra.mxu0 %v164
  %v665 = vpop.f32.mrf.mxu0
  %v666 = vadd.f32 0.0, %v665
  %v667 = vpop.f32.mrf.mxu0
  %668 = vmatprep.mubr.f32.mxu0 0.0
  %669 = vmatmul.mubr.f32.gmra.mxu0 %v167
  %v670 = vpop.f32.mrf.mxu0
  %v671 = vadd.f32 0.0, %v670
  %v672 = vpop.f32.mrf.mxu0
  %673 = vdwg.mxu0
  %v675 = vsel %vm181, %v294, 0
  %677 = vmatprep.subr.mxu0 0.0
  %678 = vmatpush1.msra.mxu0 0.0
  %679 = vmatprep.subr.mxu0 0.0
  %680 = vmatpush1.msra.mxu0 0.0
  %681 = vmatprep.subr.mxu0 0.0
  %682 = vmatpush1.msra.mxu0 0.0
  %683 = vmatprep.subr.mxu0 0.0
  %684 = vmatpush1.msra.mxu0 0.0
  %685 = vmatprep.subr.mxu0 0.0
  %686 = vmatpush1.msra.mxu0 0.0
  %687 = vmatprep.subr.mxu0 0.0
  %688 = vmatpush1.msra.mxu0 0.0
  %689 = vmatprep.subr.mxu0 0.0
  %690 = vmatpush1.msra.mxu0 0.0
  %691 = vmatprep.subr.mxu0 0.0
  %692 = vmatpush1.msra.mxu0 0.0
  %693 = vmatprep.subr.mxu0 0.0
  %694 = vmatpush1.msra.mxu0 0.0
  %695 = vmatprep.subr.mxu0 0.0
  %696 = vmatpush1.msra.mxu0 0.0
  %697 = vmatprep.subr.mxu0 0.0
  %698 = vmatpush1.msra.mxu0 0.0
  %699 = vmatprep.subr.mxu0 0.0
  %700 = vmatpush1.msra.mxu0 0.0
  %701 = vmatprep.subr.mxu0 0.0
  %702 = vmatpush1.msra.mxu0 0.0
  %703 = vmatprep.subr.mxu0 0.0
  %704 = vmatpush1.msra.mxu0 0.0
  %705 = vmatprep.subr.mxu0 0.0
  %706 = vmatpush1.msra.mxu0 0.0
  %707 = vmatprep.subr.mxu0 0.0
  %708 = vmatpush1.msra.mxu0 %v675
  %709 = vmatprep.subr.mxu0 0.0
  %710 = vmatpush2.msra.mxu0 0.0
  %711 = vmatprep.subr.mxu0 0.0
  %712 = vmatpush2.msra.mxu0 0.0
  %713 = vmatprep.subr.mxu0 0.0
  %714 = vmatpush2.msra.mxu0 0.0
  %715 = vmatprep.subr.mxu0 0.0
  %716 = vmatpush2.msra.mxu0 0.0
  %717 = vmatprep.subr.mxu0 0.0
  %718 = vmatpush2.msra.mxu0 0.0
  %719 = vmatprep.subr.mxu0 0.0
  %720 = vmatpush2.msra.mxu0 0.0
  %721 = vmatprep.subr.mxu0 0.0
  %722 = vmatpush2.msra.mxu0 0.0
  %723 = vmatprep.subr.mxu0 0.0
  %724 = vmatpush2.msra.mxu0 0.0
  %725 = vmatprep.subr.mxu0 0.0
  %726 = vmatpush2.msra.mxu0 0.0
  %727 = vmatprep.subr.mxu0 0.0
  %728 = vmatpush2.msra.mxu0 0.0
  %729 = vmatprep.subr.mxu0 0.0
  %730 = vmatpush2.msra.mxu0 0.0
  %731 = vmatprep.subr.mxu0 0.0
  %732 = vmatpush2.msra.mxu0 0.0
  %733 = vmatprep.subr.mxu0 0.0
  %734 = vmatpush2.msra.mxu0 0.0
  %735 = vmatprep.subr.mxu0 0.0
  %736 = vmatpush2.msra.mxu0 0.0
  %737 = vmatprep.subr.mxu0 0.0
  %738 = vmatpush2.msra.mxu0 0.0
  %739 = vmatprep.subr.mxu0 0.0
  %740 = vmatpush2.msra.mxu0 0.0
  %741 = vmatprep.mubr.f32.mxu0 0.0
  %742 = vmatmul.mubr.f32.gmra.mxu0 %v158
  %v743 = vpop.f32.mrf.mxu0
  %v744 = vadd.f32 0.0, %v743
  %v745 = vpop.f32.mrf.mxu0
  %746 = vmatprep.mubr.f32.mxu0 0.0
  %747 = vmatmul.mubr.f32.gmra.mxu0 %v161
  %v748 = vpop.f32.mrf.mxu0
  %v749 = vadd.f32 0.0, %v748
  %v750 = vpop.f32.mrf.mxu0
  %751 = vmatprep.mubr.f32.mxu0 0.0
  %752 = vmatmul.mubr.f32.gmra.mxu0 %v164
  %v753 = vpop.f32.mrf.mxu0
  %v754 = vadd.f32 0.0, %v753
  %v755 = vpop.f32.mrf.mxu0
  %756 = vmatprep.mubr.f32.mxu0 0.0
  %757 = vmatmul.mubr.f32.gmra.mxu0 %v167
  %v758 = vpop.f32.mrf.mxu0
  %v759 = vadd.f32 0.0, %v758
  %v760 = vpop.f32.mrf.mxu0
  %761 = vdwg.mxu0
  %v763 = vsel %vm181, %v295, 0
  %765 = vmatprep.subr.mxu0 0.0
  %766 = vmatpush1.msra.mxu0 0.0
  %767 = vmatprep.subr.mxu0 0.0
  %768 = vmatpush1.msra.mxu0 0.0
  %769 = vmatprep.subr.mxu0 0.0
  %770 = vmatpush1.msra.mxu0 0.0
  %771 = vmatprep.subr.mxu0 0.0
  %772 = vmatpush1.msra.mxu0 0.0
  %773 = vmatprep.subr.mxu0 0.0
  %774 = vmatpush1.msra.mxu0 0.0
  %775 = vmatprep.subr.mxu0 0.0
  %776 = vmatpush1.msra.mxu0 0.0
  %777 = vmatprep.subr.mxu0 0.0
  %778 = vmatpush1.msra.mxu0 0.0
  %779 = vmatprep.subr.mxu0 0.0
  %780 = vmatpush1.msra.mxu0 0.0
  %781 = vmatprep.subr.mxu0 0.0
  %782 = vmatpush1.msra.mxu0 0.0
  %783 = vmatprep.subr.mxu0 0.0
  %784 = vmatpush1.msra.mxu0 0.0
  %785 = vmatprep.subr.mxu0 0.0
  %786 = vmatpush1.msra.mxu0 0.0
  %787 = vmatprep.subr.mxu0 0.0
  %788 = vmatpush1.msra.mxu0 0.0
  %789 = vmatprep.subr.mxu0 0.0
  %790 = vmatpush1.msra.mxu0 0.0
  %791 = vmatprep.subr.mxu0 0.0
  %792 = vmatpush1.msra.mxu0 0.0
  %793 = vmatprep.subr.mxu0 0.0
  %794 = vmatpush1.msra.mxu0 0.0
  %795 = vmatprep.subr.mxu0 0.0
  %796 = vmatpush1.msra.mxu0 %v763
  %797 = vmatprep.subr.mxu0 0.0
  %798 = vmatpush2.msra.mxu0 0.0
  %799 = vmatprep.subr.mxu0 0.0
  %800 = vmatpush2.msra.mxu0 0.0
  %801 = vmatprep.subr.mxu0 0.0
  %802 = vmatpush2.msra.mxu0 0.0
  %803 = vmatprep.subr.mxu0 0.0
  %804 = vmatpush2.msra.mxu0 0.0
  %805 = vmatprep.subr.mxu0 0.0
  %806 = vmatpush2.msra.mxu0 0.0
  %807 = vmatprep.subr.mxu0 0.0
  %808 = vmatpush2.msra.mxu0 0.0
  %809 = vmatprep.subr.mxu0 0.0
  %810 = vmatpush2.msra.mxu0 0.0
  %811 = vmatprep.subr.mxu0 0.0
  %812 = vmatpush2.msra.mxu0 0.0
  %813 = vmatprep.subr.mxu0 0.0
  %814 = vmatpush2.msra.mxu0 0.0
  %815 = vmatprep.subr.mxu0 0.0
  %816 = vmatpush2.msra.mxu0 0.0
  %817 = vmatprep.subr.mxu0 0.0
  %818 = vmatpush2.msra.mxu0 0.0
  %819 = vmatprep.subr.mxu0 0.0
  %820 = vmatpush2.msra.mxu0 0.0
  %821 = vmatprep.subr.mxu0 0.0
  %822 = vmatpush2.msra.mxu0 0.0
  %823 = vmatprep.subr.mxu0 0.0
  %824 = vmatpush2.msra.mxu0 0.0
  %825 = vmatprep.subr.mxu0 0.0
  %826 = vmatpush2.msra.mxu0 0.0
  %827 = vmatprep.subr.mxu0 0.0
  %828 = vmatpush2.msra.mxu0 0.0
  %829 = vmatprep.mubr.f32.mxu0 0.0
  %830 = vmatmul.mubr.f32.gmra.mxu0 %v158
  %v831 = vpop.f32.mrf.mxu0
  %v832 = vadd.f32 0.0, %v831
  %v833 = vpop.f32.mrf.mxu0
  %834 = vmatprep.mubr.f32.mxu0 0.0
  %835 = vmatmul.mubr.f32.gmra.mxu0 %v161
  %v836 = vpop.f32.mrf.mxu0
  %v837 = vadd.f32 0.0, %v836
  %v838 = vpop.f32.mrf.mxu0
  %839 = vmatprep.mubr.f32.mxu0 0.0
  %840 = vmatmul.mubr.f32.gmra.mxu0 %v164
  %v841 = vpop.f32.mrf.mxu0
  %v842 = vadd.f32 0.0, %v841
  %v843 = vpop.f32.mrf.mxu0
  %844 = vmatprep.mubr.f32.mxu0 0.0
  %845 = vmatmul.mubr.f32.gmra.mxu0 %v167
  %v846 = vpop.f32.mrf.mxu0
  %v847 = vadd.f32 0.0, %v846
  %v848 = vpop.f32.mrf.mxu0
  %849 = vdwg.mxu0
  %v851 = vsel %vm181, %v296, 0
  %853 = vmatprep.subr.mxu0 0.0
  %854 = vmatpush1.msra.mxu0 0.0
  %855 = vmatprep.subr.mxu0 0.0
  %856 = vmatpush1.msra.mxu0 0.0
  %857 = vmatprep.subr.mxu0 0.0
  %858 = vmatpush1.msra.mxu0 0.0
  %859 = vmatprep.subr.mxu0 0.0
  %860 = vmatpush1.msra.mxu0 0.0
  %861 = vmatprep.subr.mxu0 0.0
  %862 = vmatpush1.msra.mxu0 0.0
  %863 = vmatprep.subr.mxu0 0.0
  %864 = vmatpush1.msra.mxu0 0.0
  %865 = vmatprep.subr.mxu0 0.0
  %866 = vmatpush1.msra.mxu0 0.0
  %867 = vmatprep.subr.mxu0 0.0
  %868 = vmatpush1.msra.mxu0 0.0
  %869 = vmatprep.subr.mxu0 0.0
  %870 = vmatpush1.msra.mxu0 0.0
  %871 = vmatprep.subr.mxu0 0.0
  %872 = vmatpush1.msra.mxu0 0.0
  %873 = vmatprep.subr.mxu0 0.0
  %874 = vmatpush1.msra.mxu0 0.0
  %875 = vmatprep.subr.mxu0 0.0
  %876 = vmatpush1.msra.mxu0 0.0
  %877 = vmatprep.subr.mxu0 0.0
  %878 = vmatpush1.msra.mxu0 0.0
  %879 = vmatprep.subr.mxu0 0.0
  %880 = vmatpush1.msra.mxu0 0.0
  %881 = vmatprep.subr.mxu0 0.0
  %882 = vmatpush1.msra.mxu0 0.0
  %883 = vmatprep.subr.mxu0 0.0
  %884 = vmatpush1.msra.mxu0 %v851
  %885 = vmatprep.subr.mxu0 0.0
  %886 = vmatpush2.msra.mxu0 0.0
  %887 = vmatprep.subr.mxu0 0.0
  %888 = vmatpush2.msra.mxu0 0.0
  %889 = vmatprep.subr.mxu0 0.0
  %890 = vmatpush2.msra.mxu0 0.0
  %891 = vmatprep.subr.mxu0 0.0
  %892 = vmatpush2.msra.mxu0 0.0
  %893 = vmatprep.subr.mxu0 0.0
  %894 = vmatpush2.msra.mxu0 0.0
  %895 = vmatprep.subr.mxu0 0.0
  %896 = vmatpush2.msra.mxu0 0.0
  %897 = vmatprep.subr.mxu0 0.0
  %898 = vmatpush2.msra.mxu0 0.0
  %899 = vmatprep.subr.mxu0 0.0
  %900 = vmatpush2.msra.mxu0 0.0
  %901 = vmatprep.subr.mxu0 0.0
  %902 = vmatpush2.msra.mxu0 0.0
  %903 = vmatprep.subr.mxu0 0.0
  %904 = vmatpush2.msra.mxu0 0.0
  %905 = vmatprep.subr.mxu0 0.0
  %906 = vmatpush2.msra.mxu0 0.0
  %907 = vmatprep.subr.mxu0 0.0
  %908 = vmatpush2.msra.mxu0 0.0
  %909 = vmatprep.subr.mxu0 0.0
  %910 = vmatpush2.msra.mxu0 0.0
  %911 = vmatprep.subr.mxu0 0.0
  %912 = vmatpush2.msra.mxu0 0.0
  %913 = vmatprep.subr.mxu0 0.0
  %914 = vmatpush2.msra.mxu0 0.0
  %915 = vmatprep.subr.mxu0 0.0
  %916 = vmatpush2.msra.mxu0 0.0
  %917 = vmatprep.mubr.f32.mxu0 0.0
  %918 = vmatmul.mubr.f32.gmra.mxu0 %v158
  %v919 = vpop.f32.mrf.mxu0
  %v920 = vadd.f32 0.0, %v919
  %v921 = vpop.f32.mrf.mxu0
  %922 = vmatprep.mubr.f32.mxu0 0.0
  %923 = vmatmul.mubr.f32.gmra.mxu0 %v161
  %v924 = vpop.f32.mrf.mxu0
  %v925 = vadd.f32 0.0, %v924
  %v926 = vpop.f32.mrf.mxu0
  %927 = vmatprep.mubr.f32.mxu0 0.0
  %928 = vmatmul.mubr.f32.gmra.mxu0 %v164
  %v929 = vpop.f32.mrf.mxu0
  %v930 = vadd.f32 0.0, %v929
  %v931 = vpop.f32.mrf.mxu0
  %932 = vmatprep.mubr.f32.mxu0 0.0
  %933 = vmatmul.mubr.f32.gmra.mxu0 %v167
  %v934 = vpop.f32.mrf.mxu0
  %v935 = vadd.f32 0.0, %v934
  %v936 = vpop.f32.mrf.mxu0
  %937 = vdwg.mxu0
  %v939 = vsel %vm181, %v297, 0
  %941 = vmatprep.subr.mxu0 0.0
  %942 = vmatpush1.msra.mxu0 0.0
  %943 = vmatprep.subr.mxu0 0.0
  %944 = vmatpush1.msra.mxu0 0.0
  %945 = vmatprep.subr.mxu0 0.0
  %946 = vmatpush1.msra.mxu0 0.0
  %947 = vmatprep.subr.mxu0 0.0
  %948 = vmatpush1.msra.mxu0 0.0
  %949 = vmatprep.subr.mxu0 0.0
  %950 = vmatpush1.msra.mxu0 0.0
  %951 = vmatprep.subr.mxu0 0.0
  %952 = vmatpush1.msra.mxu0 0.0
  %953 = vmatprep.subr.mxu0 0.0
  %954 = vmatpush1.msra.mxu0 0.0
  %955 = vmatprep.subr.mxu0 0.0
  %956 = vmatpush1.msra.mxu0 0.0
  %957 = vmatprep.subr.mxu0 0.0
  %958 = vmatpush1.msra.mxu0 0.0
  %959 = vmatprep.subr.mxu0 0.0
  %960 = vmatpush1.msra.mxu0 0.0
  %961 = vmatprep.subr.mxu0 0.0
  %962 = vmatpush1.msra.mxu0 0.0
  %963 = vmatprep.subr.mxu0 0.0
  %964 = vmatpush1.msra.mxu0 0.0
  %965 = vmatprep.subr.mxu0 0.0
  %966 = vmatpush1.msra.mxu0 0.0
  %967 = vmatprep.subr.mxu0 0.0
  %968 = vmatpush1.msra.mxu0 0.0
  %969 = vmatprep.subr.mxu0 0.0
  %970 = vmatpush1.msra.mxu0 0.0
  %971 = vmatprep.subr.mxu0 0.0
  %972 = vmatpush1.msra.mxu0 %v939
  %973 = vmatprep.subr.mxu0 0.0
  %974 = vmatpush2.msra.mxu0 0.0
  %975 = vmatprep.subr.mxu0 0.0
  %976 = vmatpush2.msra.mxu0 0.0
  %977 = vmatprep.subr.mxu0 0.0
  %978 = vmatpush2.msra.mxu0 0.0
  %979 = vmatprep.subr.mxu0 0.0
  %980 = vmatpush2.msra.mxu0 0.0
  %981 = vmatprep.subr.mxu0 0.0
  %982 = vmatpush2.msra.mxu0 0.0
  %983 = vmatprep.subr.mxu0 0.0
  %984 = vmatpush2.msra.mxu0 0.0
  %985 = vmatprep.subr.mxu0 0.0
  %986 = vmatpush2.msra.mxu0 0.0
  %987 = vmatprep.subr.mxu0 0.0
  %988 = vmatpush2.msra.mxu0 0.0
  %989 = vmatprep.subr.mxu0 0.0
  %990 = vmatpush2.msra.mxu0 0.0
  %991 = vmatprep.subr.mxu0 0.0
  %992 = vmatpush2.msra.mxu0 0.0
  %993 = vmatprep.subr.mxu0 0.0
  %994 = vmatpush2.msra.mxu0 0.0
  %995 = vmatprep.subr.mxu0 0.0
  %996 = vmatpush2.msra.mxu0 0.0
  %997 = vmatprep.subr.mxu0 0.0
  %998 = vmatpush2.msra.mxu0 0.0
  %999 = vmatprep.subr.mxu0 0.0
  %1000 = vmatpush2.msra.mxu0 0.0
  %1001 = vmatprep.subr.mxu0 0.0
  %1002 = vmatpush2.msra.mxu0 0.0
  %1003 = vmatprep.subr.mxu0 0.0
  %1004 = vmatpush2.msra.mxu0 0.0
  %1005 = vmatprep.mubr.f32.mxu0 0.0
  %1006 = vmatmul.mubr.f32.gmra.mxu0 %v158
  %v1007 = vpop.f32.mrf.mxu0
  %v1008 = vadd.f32 0.0, %v1007
  %v1009 = vpop.f32.mrf.mxu0
  %1010 = vmatprep.mubr.f32.mxu0 0.0
  %1011 = vmatmul.mubr.f32.gmra.mxu0 %v161
  %v1012 = vpop.f32.mrf.mxu0
  %v1013 = vadd.f32 0.0, %v1012
  %v1014 = vpop.f32.mrf.mxu0
  %1015 = vmatprep.mubr.f32.mxu0 0.0
  %1016 = vmatmul.mubr.f32.gmra.mxu0 %v164
  %v1017 = vpop.f32.mrf.mxu0
  %v1018 = vadd.f32 0.0, %v1017
  %v1019 = vpop.f32.mrf.mxu0
  %1020 = vmatprep.mubr.f32.mxu0 0.0
  %1021 = vmatmul.mubr.f32.gmra.mxu0 %v167
  %v1022 = vpop.f32.mrf.mxu0
  %v1023 = vadd.f32 0.0, %v1022
  %v1024 = vpop.f32.mrf.mxu0
  %1025 = vdwg.mxu0
  %v1027 = vsel %vm181, %v298, 0
  %1029 = vmatprep.subr.mxu0 0.0
  %1030 = vmatpush1.msra.mxu0 0.0
  %1031 = vmatprep.subr.mxu0 0.0
  %1032 = vmatpush1.msra.mxu0 0.0
  %1033 = vmatprep.subr.mxu0 0.0
  %1034 = vmatpush1.msra.mxu0 0.0
  %1035 = vmatprep.subr.mxu0 0.0
  %1036 = vmatpush1.msra.mxu0 0.0
  %1037 = vmatprep.subr.mxu0 0.0
  %1038 = vmatpush1.msra.mxu0 0.0
  %1039 = vmatprep.subr.mxu0 0.0
  %1040 = vmatpush1.msra.mxu0 0.0
  %1041 = vmatprep.subr.mxu0 0.0
  %1042 = vmatpush1.msra.mxu0 0.0
  %1043 = vmatprep.subr.mxu0 0.0
  %1044 = vmatpush1.msra.mxu0 0.0
  %1045 = vmatprep.subr.mxu0 0.0
  %1046 = vmatpush1.msra.mxu0 0.0
  %1047 = vmatprep.subr.mxu0 0.0
  %1048 = vmatpush1.msra.mxu0 0.0
  %1049 = vmatprep.subr.mxu0 0.0
  %1050 = vmatpush1.msra.mxu0 0.0
  %1051 = vmatprep.subr.mxu0 0.0
  %1052 = vmatpush1.msra.mxu0 0.0
  %1053 = vmatprep.subr.mxu0 0.0
  %1054 = vmatpush1.msra.mxu0 0.0
  %1055 = vmatprep.subr.mxu0 0.0
  %1056 = vmatpush1.msra.mxu0 0.0
  %1057 = vmatprep.subr.mxu0 0.0
  %1058 = vmatpush1.msra.mxu0 0.0
  %1059 = vmatprep.subr.mxu0 0.0
  %1060 = vmatpush1.msra.mxu0 %v1027
  %1061 = vmatprep.subr.mxu0 0.0
  %1062 = vmatpush2.msra.mxu0 0.0
  %1063 = vmatprep.subr.mxu0 0.0
  %1064 = vmatpush2.msra.mxu0 0.0
  %1065 = vmatprep.subr.mxu0 0.0
  %1066 = vmatpush2.msra.mxu0 0.0
  %1067 = vmatprep.subr.mxu0 0.0
  %1068 = vmatpush2.msra.mxu0 0.0
  %1069 = vmatprep.subr.mxu0 0.0
  %1070 = vmatpush2.msra.mxu0 0.0
  %1071 = vmatprep.subr.mxu0 0.0
  %1072 = vmatpush2.msra.mxu0 0.0
  %1073 = vmatprep.subr.mxu0 0.0
  %1074 = vmatpush2.msra.mxu0 0.0
  %1075 = vmatprep.subr.mxu0 0.0
  %1076 = vmatpush2.msra.mxu0 0.0
  %1077 = vmatprep.subr.mxu0 0.0
  %1078 = vmatpush2.msra.mxu0 0.0
  %1079 = vmatprep.subr.mxu0 0.0
  %1080 = vmatpush2.msra.mxu0 0.0
  %1081 = vmatprep.subr.mxu0 0.0
  %1082 = vmatpush2.msra.mxu0 0.0
  %1083 = vmatprep.subr.mxu0 0.0
  %1084 = vmatpush2.msra.mxu0 0.0
  %1085 = vmatprep.subr.mxu0 0.0
  %1086 = vmatpush2.msra.mxu0 0.0
  %1087 = vmatprep.subr.mxu0 0.0
  %1088 = vmatpush2.msra.mxu0 0.0
  %1089 = vmatprep.subr.mxu0 0.0
  %1090 = vmatpush2.msra.mxu0 0.0
  %1091 = vmatprep.subr.mxu0 0.0
  %1092 = vmatpush2.msra.mxu0 0.0
  %1093 = vmatprep.mubr.f32.mxu0 0.0
  %1094 = vmatmul.mubr.f32.gmra.mxu0 %v158
  %v1095 = vpop.f32.mrf.mxu0
  %v1096 = vadd.f32 0.0, %v1095
  %v1097 = vpop.f32.mrf.mxu0
  %1098 = vmatprep.mubr.f32.mxu0 0.0
  %1099 = vmatmul.mubr.f32.gmra.mxu0 %v161
  %v1100 = vpop.f32.mrf.mxu0
  %v1101 = vadd.f32 0.0, %v1100
  %v1102 = vpop.f32.mrf.mxu0
  %1103 = vmatprep.mubr.f32.mxu0 0.0
  %1104 = vmatmul.mubr.f32.gmra.mxu0 %v164
  %v1105 = vpop.f32.mrf.mxu0
  %v1106 = vadd.f32 0.0, %v1105
  %v1107 = vpop.f32.mrf.mxu0
  %1108 = vmatprep.mubr.f32.mxu0 0.0
  %1109 = vmatmul.mubr.f32.gmra.mxu0 %v167
  %v1110 = vpop.f32.mrf.mxu0
  %v1111 = vadd.f32 0.0, %v1110
  %v1112 = vpop.f32.mrf.mxu0
  %1113 = vdwg.mxu0
  %v1115 = vsel %vm181, %v299, 0
  %1117 = vmatprep.subr.mxu0 0.0
  %1118 = vmatpush1.msra.mxu0 0.0
  %1119 = vmatprep.subr.mxu0 0.0
  %1120 = vmatpush1.msra.mxu0 0.0
  %1121 = vmatprep.subr.mxu0 0.0
  %1122 = vmatpush1.msra.mxu0 0.0
  %1123 = vmatprep.subr.mxu0 0.0
  %1124 = vmatpush1.msra.mxu0 0.0
  %1125 = vmatprep.subr.mxu0 0.0
  %1126 = vmatpush1.msra.mxu0 0.0
  %1127 = vmatprep.subr.mxu0 0.0
  %1128 = vmatpush1.msra.mxu0 0.0
  %1129 = vmatprep.subr.mxu0 0.0
  %1130 = vmatpush1.msra.mxu0 0.0
  %1131 = vmatprep.subr.mxu0 0.0
  %1132 = vmatpush1.msra.mxu0 0.0
  %1133 = vmatprep.subr.mxu0 0.0
  %1134 = vmatpush1.msra.mxu0 0.0
  %1135 = vmatprep.subr.mxu0 0.0
  %1136 = vmatpush1.msra.mxu0 0.0
  %1137 = vmatprep.subr.mxu0 0.0
  %1138 = vmatpush1.msra.mxu0 0.0
  %1139 = vmatprep.subr.mxu0 0.0
  %1140 = vmatpush1.msra.mxu0 0.0
  %1141 = vmatprep.subr.mxu0 0.0
  %1142 = vmatpush1.msra.mxu0 0.0
  %1143 = vmatprep.subr.mxu0 0.0
  %1144 = vmatpush1.msra.mxu0 0.0
  %1145 = vmatprep.subr.mxu0 0.0
  %1146 = vmatpush1.msra.mxu0 0.0
  %1147 = vmatprep.subr.mxu0 0.0
  %1148 = vmatpush1.msra.mxu0 %v1115
  %1149 = vmatprep.subr.mxu0 0.0
  %1150 = vmatpush2.msra.mxu0 0.0
  %1151 = vmatprep.subr.mxu0 0.0
  %1152 = vmatpush2.msra.mxu0 0.0
  %1153 = vmatprep.subr.mxu0 0.0
  %1154 = vmatpush2.msra.mxu0 0.0
  %1155 = vmatprep.subr.mxu0 0.0
  %1156 = vmatpush2.msra.mxu0 0.0
  %1157 = vmatprep.subr.mxu0 0.0
  %1158 = vmatpush2.msra.mxu0 0.0
  %1159 = vmatprep.subr.mxu0 0.0
  %1160 = vmatpush2.msra.mxu0 0.0
  %1161 = vmatprep.subr.mxu0 0.0
  %1162 = vmatpush2.msra.mxu0 0.0
  %1163 = vmatprep.subr.mxu0 0.0
  %1164 = vmatpush2.msra.mxu0 0.0
  %1165 = vmatprep.subr.mxu0 0.0
  %1166 = vmatpush2.msra.mxu0 0.0
  %1167 = vmatprep.subr.mxu0 0.0
  %1168 = vmatpush2.msra.mxu0 0.0
  %1169 = vmatprep.subr.mxu0 0.0
  %1170 = vmatpush2.msra.mxu0 0.0
  %1171 = vmatprep.subr.mxu0 0.0
  %1172 = vmatpush2.msra.mxu0 0.0
  %1173 = vmatprep.subr.mxu0 0.0
  %1174 = vmatpush2.msra.mxu0 0.0
  %1175 = vmatprep.subr.mxu0 0.0
  %1176 = vmatpush2.msra.mxu0 0.0
  %1177 = vmatprep.subr.mxu0 0.0
  %1178 = vmatpush2.msra.mxu0 0.0
  %1179 = vmatprep.subr.mxu0 0.0
  %1180 = vmatpush2.msra.mxu0 0.0
  %1181 = vmatprep.mubr.f32.mxu0 0.0
  %1182 = vmatmul.mubr.f32.gmra.mxu0 %v158
  %v1183 = vpop.f32.mrf.mxu0
  %v1184 = vadd.f32 0.0, %v1183
  %v1185 = vpop.f32.mrf.mxu0
  %1186 = vmatprep.mubr.f32.mxu0 0.0
  %1187 = vmatmul.mubr.f32.gmra.mxu0 %v161
  %v1188 = vpop.f32.mrf.mxu0
  %v1189 = vadd.f32 0.0, %v1188
  %v1190 = vpop.f32.mrf.mxu0
  %1191 = vmatprep.mubr.f32.mxu0 0.0
  %1192 = vmatmul.mubr.f32.gmra.mxu0 %v164
  %v1193 = vpop.f32.mrf.mxu0
  %v1194 = vadd.f32 0.0, %v1193
  %v1195 = vpop.f32.mrf.mxu0
  %1196 = vmatprep.mubr.f32.mxu0 0.0
  %1197 = vmatmul.mubr.f32.gmra.mxu0 %v167
  %v1198 = vpop.f32.mrf.mxu0
  %v1199 = vadd.f32 0.0, %v1198
  %v1200 = vpop.f32.mrf.mxu0
  %1201 = vdwg.mxu0
  %v1203 = vsel %vm181, %v300, 0
  %1205 = vmatprep.subr.mxu0 0.0
  %1206 = vmatpush1.msra.mxu0 0.0
  %1207 = vmatprep.subr.mxu0 0.0
  %1208 = vmatpush1.msra.mxu0 0.0
  %1209 = vmatprep.subr.mxu0 0.0
  %1210 = vmatpush1.msra.mxu0 0.0
  %1211 = vmatprep.subr.mxu0 0.0
  %1212 = vmatpush1.msra.mxu0 0.0
  %1213 = vmatprep.subr.mxu0 0.0
  %1214 = vmatpush1.msra.mxu0 0.0
  %1215 = vmatprep.subr.mxu0 0.0
  %1216 = vmatpush1.msra.mxu0 0.0
  %1217 = vmatprep.subr.mxu0 0.0
  %1218 = vmatpush1.msra.mxu0 0.0
  %1219 = vmatprep.subr.mxu0 0.0
  %1220 = vmatpush1.msra.mxu0 0.0
  %1221 = vmatprep.subr.mxu0 0.0
  %1222 = vmatpush1.msra.mxu0 0.0
  %1223 = vmatprep.subr.mxu0 0.0
  %1224 = vmatpush1.msra.mxu0 0.0
  %1225 = vmatprep.subr.mxu0 0.0
  %1226 = vmatpush1.msra.mxu0 0.0
  %1227 = vmatprep.subr.mxu0 0.0
  %1228 = vmatpush1.msra.mxu0 0.0
  %1229 = vmatprep.subr.mxu0 0.0
  %1230 = vmatpush1.msra.mxu0 0.0
  %1231 = vmatprep.subr.mxu0 0.0
  %1232 = vmatpush1.msra.mxu0 0.0
  %1233 = vmatprep.subr.mxu0 0.0
  %1234 = vmatpush1.msra.mxu0 0.0
  %1235 = vmatprep.subr.mxu0 0.0
  %1236 = vmatpush1.msra.mxu0 %v1203
  %1237 = vmatprep.subr.mxu0 0.0
  %1238 = vmatpush2.msra.mxu0 0.0
  %1239 = vmatprep.subr.mxu0 0.0
  %1240 = vmatpush2.msra.mxu0 0.0
  %1241 = vmatprep.subr.mxu0 0.0
  %1242 = vmatpush2.msra.mxu0 0.0
  %1243 = vmatprep.subr.mxu0 0.0
  %1244 = vmatpush2.msra.mxu0 0.0
  %1245 = vmatprep.subr.mxu0 0.0
  %1246 = vmatpush2.msra.mxu0 0.0
  %1247 = vmatprep.subr.mxu0 0.0
  %1248 = vmatpush2.msra.mxu0 0.0
  %1249 = vmatprep.subr.mxu0 0.0
  %1250 = vmatpush2.msra.mxu0 0.0
  %1251 = vmatprep.subr.mxu0 0.0
  %1252 = vmatpush2.msra.mxu0 0.0
  %1253 = vmatprep.subr.mxu0 0.0
  %1254 = vmatpush2.msra.mxu0 0.0
  %1255 = vmatprep.subr.mxu0 0.0
  %1256 = vmatpush2.msra.mxu0 0.0
  %1257 = vmatprep.subr.mxu0 0.0
  %1258 = vmatpush2.msra.mxu0 0.0
  %1259 = vmatprep.subr.mxu0 0.0
  %1260 = vmatpush2.msra.mxu0 0.0
  %1261 = vmatprep.subr.mxu0 0.0
  %1262 = vmatpush2.msra.mxu0 0.0
  %1263 = vmatprep.subr.mxu0 0.0
  %1264 = vmatpush2.msra.mxu0 0.0
  %1265 = vmatprep.subr.mxu0 0.0
  %1266 = vmatpush2.msra.mxu0 0.0
  %1267 = vmatprep.subr.mxu0 0.0
  %1268 = vmatpush2.msra.mxu0 0.0
  %1269 = vmatprep.mubr.f32.mxu0 0.0
  %1270 = vmatmul.mubr.f32.gmra.mxu0 %v158
  %v1271 = vpop.f32.mrf.mxu0
  %v1272 = vadd.f32 0.0, %v1271
  %v1273 = vpop.f32.mrf.mxu0
  %1274 = vmatprep.mubr.f32.mxu0 0.0
  %1275 = vmatmul.mubr.f32.gmra.mxu0 %v161
  %v1276 = vpop.f32.mrf.mxu0
  %v1277 = vadd.f32 0.0, %v1276
  %v1278 = vpop.f32.mrf.mxu0
  %1279 = vmatprep.mubr.f32.mxu0 0.0
  %1280 = vmatmul.mubr.f32.gmra.mxu0 %v164
  %v1281 = vpop.f32.mrf.mxu0
  %v1282 = vadd.f32 0.0, %v1281
  %v1283 = vpop.f32.mrf.mxu0
  %1284 = vmatprep.mubr.f32.mxu0 0.0
  %1285 = vmatmul.mubr.f32.gmra.mxu0 %v167
  %v1286 = vpop.f32.mrf.mxu0
  %v1287 = vadd.f32 0.0, %v1286
  %v1288 = vpop.f32.mrf.mxu0
  %1289 = vdwg.mxu0
  %v1291 = vsel %vm181, %v301, 0
  %1293 = vmatprep.subr.mxu0 0.0
  %1294 = vmatpush1.msra.mxu0 0.0
  %1295 = vmatprep.subr.mxu0 0.0
  %1296 = vmatpush1.msra.mxu0 0.0
  %1297 = vmatprep.subr.mxu0 0.0
  %1298 = vmatpush1.msra.mxu0 0.0
  %1299 = vmatprep.subr.mxu0 0.0
  %1300 = vmatpush1.msra.mxu0 0.0
  %1301 = vmatprep.subr.mxu0 0.0
  %1302 = vmatpush1.msra.mxu0 0.0
  %1303 = vmatprep.subr.mxu0 0.0
  %1304 = vmatpush1.msra.mxu0 0.0
  %1305 = vmatprep.subr.mxu0 0.0
  %1306 = vmatpush1.msra.mxu0 0.0
  %1307 = vmatprep.subr.mxu0 0.0
  %1308 = vmatpush1.msra.mxu0 0.0
  %1309 = vmatprep.subr.mxu0 0.0
  %1310 = vmatpush1.msra.mxu0 0.0
  %1311 = vmatprep.subr.mxu0 0.0
  %1312 = vmatpush1.msra.mxu0 0.0
  %1313 = vmatprep.subr.mxu0 0.0
  %1314 = vmatpush1.msra.mxu0 0.0
  %1315 = vmatprep.subr.mxu0 0.0
  %1316 = vmatpush1.msra.mxu0 0.0
  %1317 = vmatprep.subr.mxu0 0.0
  %1318 = vmatpush1.msra.mxu0 0.0
  %1319 = vmatprep.subr.mxu0 0.0
  %1320 = vmatpush1.msra.mxu0 0.0
  %1321 = vmatprep.subr.mxu0 0.0
  %1322 = vmatpush1.msra.mxu0 0.0
  %1323 = vmatprep.subr.mxu0 0.0
  %1324 = vmatpush1.msra.mxu0 %v1291
  %1325 = vmatprep.subr.mxu0 0.0
  %1326 = vmatpush2.msra.mxu0 0.0
  %1327 = vmatprep.subr.mxu0 0.0
  %1328 = vmatpush2.msra.mxu0 0.0
  %1329 = vmatprep.subr.mxu0 0.0
  %1330 = vmatpush2.msra.mxu0 0.0
  %1331 = vmatprep.subr.mxu0 0.0
  %1332 = vmatpush2.msra.mxu0 0.0
  %1333 = vmatprep.subr.mxu0 0.0
  %1334 = vmatpush2.msra.mxu0 0.0
  %1335 = vmatprep.subr.mxu0 0.0
  %1336 = vmatpush2.msra.mxu0 0.0
  %1337 = vmatprep.subr.mxu0 0.0
  %1338 = vmatpush2.msra.mxu0 0.0
  %1339 = vmatprep.subr.mxu0 0.0
  %1340 = vmatpush2.msra.mxu0 0.0
  %1341 = vmatprep.subr.mxu0 0.0
  %1342 = vmatpush2.msra.mxu0 0.0
  %1343 = vmatprep.subr.mxu0 0.0
  %1344 = vmatpush2.msra.mxu0 0.0
  %1345 = vmatprep.subr.mxu0 0.0
  %1346 = vmatpush2.msra.mxu0 0.0
  %1347 = vmatprep.subr.mxu0 0.0
  %1348 = vmatpush2.msra.mxu0 0.0
  %1349 = vmatprep.subr.mxu0 0.0
  %1350 = vmatpush2.msra.mxu0 0.0
  %1351 = vmatprep.subr.mxu0 0.0
  %1352 = vmatpush2.msra.mxu0 0.0
  %1353 = vmatprep.subr.mxu0 0.0
  %1354 = vmatpush2.msra.mxu0 0.0
  %1355 = vmatprep.subr.mxu0 0.0
  %1356 = vmatpush2.msra.mxu0 0.0
  %1357 = vmatprep.mubr.f32.mxu0 0.0
  %1358 = vmatmul.mubr.f32.gmra.mxu0 %v158
  %v1359 = vpop.f32.mrf.mxu0
  %v1360 = vadd.f32 0.0, %v1359
  %v1361 = vpop.f32.mrf.mxu0
  %1362 = vmatprep.mubr.f32.mxu0 0.0
  %1363 = vmatmul.mubr.f32.gmra.mxu0 %v161
  %v1364 = vpop.f32.mrf.mxu0
  %v1365 = vadd.f32 0.0, %v1364
  %v1366 = vpop.f32.mrf.mxu0
  %1367 = vmatprep.mubr.f32.mxu0 0.0
  %1368 = vmatmul.mubr.f32.gmra.mxu0 %v164
  %v1369 = vpop.f32.mrf.mxu0
  %v1370 = vadd.f32 0.0, %v1369
  %v1371 = vpop.f32.mrf.mxu0
  %1372 = vmatprep.mubr.f32.mxu0 0.0
  %1373 = vmatmul.mubr.f32.gmra.mxu0 %v167
  %v1374 = vpop.f32.mrf.mxu0
  %v1375 = vadd.f32 0.0, %v1374
  %v1376 = vpop.f32.mrf.mxu0
  %1377 = vdwg.mxu0
  %v1379 = vsel %vm181, %v302, 0
  %1381 = vmatprep.subr.mxu0 0.0
  %1382 = vmatpush1.msra.mxu0 0.0
  %1383 = vmatprep.subr.mxu0 0.0
  %1384 = vmatpush1.msra.mxu0 0.0
  %1385 = vmatprep.subr.mxu0 0.0
  %1386 = vmatpush1.msra.mxu0 0.0
  %1387 = vmatprep.subr.mxu0 0.0
  %1388 = vmatpush1.msra.mxu0 0.0
  %1389 = vmatprep.subr.mxu0 0.0
  %1390 = vmatpush1.msra.mxu0 0.0
  %1391 = vmatprep.subr.mxu0 0.0
  %1392 = vmatpush1.msra.mxu0 0.0
  %1393 = vmatprep.subr.mxu0 0.0
  %1394 = vmatpush1.msra.mxu0 0.0
  %1395 = vmatprep.subr.mxu0 0.0
  %1396 = vmatpush1.msra.mxu0 0.0
  %1397 = vmatprep.subr.mxu0 0.0
  %1398 = vmatpush1.msra.mxu0 0.0
  %1399 = vmatprep.subr.mxu0 0.0
  %1400 = vmatpush1.msra.mxu0 0.0
  %1401 = vmatprep.subr.mxu0 0.0
  %1402 = vmatpush1.msra.mxu0 0.0
  %1403 = vmatprep.subr.mxu0 0.0
  %1404 = vmatpush1.msra.mxu0 0.0
  %1405 = vmatprep.subr.mxu0 0.0
  %1406 = vmatpush1.msra.mxu0 0.0
  %1407 = vmatprep.subr.mxu0 0.0
  %1408 = vmatpush1.msra.mxu0 0.0
  %1409 = vmatprep.subr.mxu0 0.0
  %1410 = vmatpush1.msra.mxu0 0.0
  %1411 = vmatprep.subr.mxu0 0.0
  %1412 = vmatpush1.msra.mxu0 %v1379
  %1413 = vmatprep.subr.mxu0 0.0
  %1414 = vmatpush2.msra.mxu0 0.0
  %1415 = vmatprep.subr.mxu0 0.0
  %1416 = vmatpush2.msra.mxu0 0.0
  %1417 = vmatprep.subr.mxu0 0.0
  %1418 = vmatpush2.msra.mxu0 0.0
  %1419 = vmatprep.subr.mxu0 0.0
  %1420 = vmatpush2.msra.mxu0 0.0
  %1421 = vmatprep.subr.mxu0 0.0
  %1422 = vmatpush2.msra.mxu0 0.0
  %1423 = vmatprep.subr.mxu0 0.0
  %1424 = vmatpush2.msra.mxu0 0.0
  %1425 = vmatprep.subr.mxu0 0.0
  %1426 = vmatpush2.msra.mxu0 0.0
  %1427 = vmatprep.subr.mxu0 0.0
  %1428 = vmatpush2.msra.mxu0 0.0
  %1429 = vmatprep.subr.mxu0 0.0
  %1430 = vmatpush2.msra.mxu0 0.0
  %1431 = vmatprep.subr.mxu0 0.0
  %1432 = vmatpush2.msra.mxu0 0.0
  %1433 = vmatprep.subr.mxu0 0.0
  %1434 = vmatpush2.msra.mxu0 0.0
  %1435 = vmatprep.subr.mxu0 0.0
  %1436 = vmatpush2.msra.mxu0 0.0
  %1437 = vmatprep.subr.mxu0 0.0
  %1438 = vmatpush2.msra.mxu0 0.0
  %1439 = vmatprep.subr.mxu0 0.0
  %1440 = vmatpush2.msra.mxu0 0.0
  %1441 = vmatprep.subr.mxu0 0.0
  %1442 = vmatpush2.msra.mxu0 0.0
  %1443 = vmatprep.subr.mxu0 0.0
  %1444 = vmatpush2.msra.mxu0 0.0
  %1445 = vmatprep.mubr.f32.mxu0 0.0
  %1446 = vmatmul.mubr.f32.gmra.mxu0 %v158
  %v1447 = vpop.f32.mrf.mxu0
  %v1448 = vadd.f32 0.0, %v1447
  %v1449 = vpop.f32.mrf.mxu0
  %1450 = vmatprep.mubr.f32.mxu0 0.0
  %1451 = vmatmul.mubr.f32.gmra.mxu0 %v161
  %v1452 = vpop.f32.mrf.mxu0
  %v1453 = vadd.f32 0.0, %v1452
  %v1454 = vpop.f32.mrf.mxu0
  %1455 = vmatprep.mubr.f32.mxu0 0.0
  %1456 = vmatmul.mubr.f32.gmra.mxu0 %v164
  %v1457 = vpop.f32.mrf.mxu0
  %v1458 = vadd.f32 0.0, %v1457
  %v1459 = vpop.f32.mrf.mxu0
  %1460 = vmatprep.mubr.f32.mxu0 0.0
  %1461 = vmatmul.mubr.f32.gmra.mxu0 %v167
  %v1462 = vpop.f32.mrf.mxu0
  %v1463 = vadd.f32 0.0, %v1462
  %v1464 = vpop.f32.mrf.mxu0
  %1465 = vdwg.mxu0
  %v1467 = vsel %vm181, %v303, 0
  %1469 = vmatprep.subr.mxu0 0.0
  %1470 = vmatpush1.msra.mxu0 0.0
  %1471 = vmatprep.subr.mxu0 0.0
  %1472 = vmatpush1.msra.mxu0 0.0
  %1473 = vmatprep.subr.mxu0 0.0
  %1474 = vmatpush1.msra.mxu0 0.0
  %1475 = vmatprep.subr.mxu0 0.0
  %1476 = vmatpush1.msra.mxu0 0.0
  %1477 = vmatprep.subr.mxu0 0.0
  %1478 = vmatpush1.msra.mxu0 0.0
  %1479 = vmatprep.subr.mxu0 0.0
  %1480 = vmatpush1.msra.mxu0 0.0
  %1481 = vmatprep.subr.mxu0 0.0
  %1482 = vmatpush1.msra.mxu0 0.0
  %1483 = vmatprep.subr.mxu0 0.0
  %1484 = vmatpush1.msra.mxu0 0.0
  %1485 = vmatprep.subr.mxu0 0.0
  %1486 = vmatpush1.msra.mxu0 0.0
  %1487 = vmatprep.subr.mxu0 0.0
  %1488 = vmatpush1.msra.mxu0 0.0
  %1489 = vmatprep.subr.mxu0 0.0
  %1490 = vmatpush1.msra.mxu0 0.0
  %1491 = vmatprep.subr.mxu0 0.0
  %1492 = vmatpush1.msra.mxu0 0.0
  %1493 = vmatprep.subr.mxu0 0.0
  %1494 = vmatpush1.msra.mxu0 0.0
  %1495 = vmatprep.subr.mxu0 0.0
  %1496 = vmatpush1.msra.mxu0 0.0
  %1497 = vmatprep.subr.mxu0 0.0
  %1498 = vmatpush1.msra.mxu0 0.0
  %1499 = vmatprep.subr.mxu0 0.0
  %1500 = vmatpush1.msra.mxu0 %v1467
  %1501 = vmatprep.subr.mxu0 0.0
  %1502 = vmatpush2.msra.mxu0 0.0
  %1503 = vmatprep.subr.mxu0 0.0
  %1504 = vmatpush2.msra.mxu0 0.0
  %1505 = vmatprep.subr.mxu0 0.0
  %1506 = vmatpush2.msra.mxu0 0.0
  %1507 = vmatprep.subr.mxu0 0.0
  %1508 = vmatpush2.msra.mxu0 0.0
  %1509 = vmatprep.subr.mxu0 0.0
  %1510 = vmatpush2.msra.mxu0 0.0
  %1511 = vmatprep.subr.mxu0 0.0
  %1512 = vmatpush2.msra.mxu0 0.0
  %1513 = vmatprep.subr.mxu0 0.0
  %1514 = vmatpush2.msra.mxu0 0.0
  %1515 = vmatprep.subr.mxu0 0.0
  %1516 = vmatpush2.msra.mxu0 0.0
  %1517 = vmatprep.subr.mxu0 0.0
  %1518 = vmatpush2.msra.mxu0 0.0
  %1519 = vmatprep.subr.mxu0 0.0
  %1520 = vmatpush2.msra.mxu0 0.0
  %1521 = vmatprep.subr.mxu0 0.0
  %1522 = vmatpush2.msra.mxu0 0.0
  %1523 = vmatprep.subr.mxu0 0.0
  %1524 = vmatpush2.msra.mxu0 0.0
  %1525 = vmatprep.subr.mxu0 0.0
  %1526 = vmatpush2.msra.mxu0 0.0
  %1527 = vmatprep.subr.mxu0 0.0
  %1528 = vmatpush2.msra.mxu0 0.0
  %1529 = vmatprep.subr.mxu0 0.0
  %1530 = vmatpush2.msra.mxu0 0.0
  %1531 = vmatprep.subr.mxu0 0.0
  %1532 = vmatpush2.msra.mxu0 0.0
  %1533 = vmatprep.mubr.f32.mxu0 0.0
  %1534 = vmatmul.mubr.f32.gmra.mxu0 %v158
  %v1535 = vpop.f32.mrf.mxu0
  %v1536 = vadd.f32 0.0, %v1535
  %v1537 = vpop.f32.mrf.mxu0
  %1538 = vmatprep.mubr.f32.mxu0 0.0
  %1539 = vmatmul.mubr.f32.gmra.mxu0 %v161
  %v1540 = vpop.f32.mrf.mxu0
  %v1541 = vadd.f32 0.0, %v1540
  %v1542 = vpop.f32.mrf.mxu0
  %1543 = vmatprep.mubr.f32.mxu0 0.0
  %1544 = vmatmul.mubr.f32.gmra.mxu0 %v164
  %v1545 = vpop.f32.mrf.mxu0
  %v1546 = vadd.f32 0.0, %v1545
  %v1547 = vpop.f32.mrf.mxu0
  %1548 = vmatprep.mubr.f32.mxu0 0.0
  %1549 = vmatmul.mubr.f32.gmra.mxu0 %v167
  %v1550 = vpop.f32.mrf.mxu0
  %v1551 = vadd.f32 0.0, %v1550
  %v1552 = vpop.f32.mrf.mxu0
  %1553 = vdwg.mxu0
  %v1555 = vsel %vm181, %v304, 0
  %1557 = vmatprep.subr.mxu0 0.0
  %1558 = vmatpush1.msra.mxu0 0.0
  %1559 = vmatprep.subr.mxu0 0.0
  %1560 = vmatpush1.msra.mxu0 0.0
  %1561 = vmatprep.subr.mxu0 0.0
  %1562 = vmatpush1.msra.mxu0 0.0
  %1563 = vmatprep.subr.mxu0 0.0
  %1564 = vmatpush1.msra.mxu0 0.0
  %1565 = vmatprep.subr.mxu0 0.0
  %1566 = vmatpush1.msra.mxu0 0.0
  %1567 = vmatprep.subr.mxu0 0.0
  %1568 = vmatpush1.msra.mxu0 0.0
  %1569 = vmatprep.subr.mxu0 0.0
  %1570 = vmatpush1.msra.mxu0 0.0
  %1571 = vmatprep.subr.mxu0 0.0
  %1572 = vmatpush1.msra.mxu0 0.0
  %1573 = vmatprep.subr.mxu0 0.0
  %1574 = vmatpush1.msra.mxu0 0.0
  %1575 = vmatprep.subr.mxu0 0.0
  %1576 = vmatpush1.msra.mxu0 0.0
  %1577 = vmatprep.subr.mxu0 0.0
  %1578 = vmatpush1.msra.mxu0 0.0
  %1579 = vmatprep.subr.mxu0 0.0
  %1580 = vmatpush1.msra.mxu0 0.0
  %1581 = vmatprep.subr.mxu0 0.0
  %1582 = vmatpush1.msra.mxu0 0.0
  %1583 = vmatprep.subr.mxu0 0.0
  %1584 = vmatpush1.msra.mxu0 0.0
  %1585 = vmatprep.subr.mxu0 0.0
  %1586 = vmatpush1.msra.mxu0 0.0
  %1587 = vmatprep.subr.mxu0 0.0
  %1588 = vmatpush1.msra.mxu0 %v1555
  %1589 = vmatprep.subr.mxu0 0.0
  %1590 = vmatpush2.msra.mxu0 0.0
  %1591 = vmatprep.subr.mxu0 0.0
  %1592 = vmatpush2.msra.mxu0 0.0
  %1593 = vmatprep.subr.mxu0 0.0
  %1594 = vmatpush2.msra.mxu0 0.0
  %1595 = vmatprep.subr.mxu0 0.0
  %1596 = vmatpush2.msra.mxu0 0.0
  %1597 = vmatprep.subr.mxu0 0.0
  %1598 = vmatpush2.msra.mxu0 0.0
  %1599 = vmatprep.subr.mxu0 0.0
  %1600 = vmatpush2.msra.mxu0 0.0
  %1601 = vmatprep.subr.mxu0 0.0
  %1602 = vmatpush2.msra.mxu0 0.0
  %1603 = vmatprep.subr.mxu0 0.0
  %1604 = vmatpush2.msra.mxu0 0.0
  %1605 = vmatprep.subr.mxu0 0.0
  %1606 = vmatpush2.msra.mxu0 0.0
  %1607 = vmatprep.subr.mxu0 0.0
  %1608 = vmatpush2.msra.mxu0 0.0
  %1609 = vmatprep.subr.mxu0 0.0
  %1610 = vmatpush2.msra.mxu0 0.0
  %1611 = vmatprep.subr.mxu0 0.0
  %1612 = vmatpush2.msra.mxu0 0.0
  %1613 = vmatprep.subr.mxu0 0.0
  %1614 = vmatpush2.msra.mxu0 0.0
  %1615 = vmatprep.subr.mxu0 0.0
  %1616 = vmatpush2.msra.mxu0 0.0
  %1617 = vmatprep.subr.mxu0 0.0
  %1618 = vmatpush2.msra.mxu0 0.0
  %1619 = vmatprep.subr.mxu0 0.0
  %1620 = vmatpush2.msra.mxu0 0.0
  %1621 = vmatprep.mubr.f32.mxu0 0.0
  %1622 = vmatmul.mubr.f32.gmra.mxu0 %v158
  %v1623 = vpop.f32.mrf.mxu0
  %v1624 = vadd.f32 0.0, %v1623
  %v1625 = vpop.f32.mrf.mxu0
  %1626 = vmatprep.mubr.f32.mxu0 0.0
  %1627 = vmatmul.mubr.f32.gmra.mxu0 %v161
  %v1628 = vpop.f32.mrf.mxu0
  %v1629 = vadd.f32 0.0, %v1628
  %v1630 = vpop.f32.mrf.mxu0
  %1631 = vmatprep.mubr.f32.mxu0 0.0
  %1632 = vmatmul.mubr.f32.gmra.mxu0 %v164
  %v1633 = vpop.f32.mrf.mxu0
  %v1634 = vadd.f32 0.0, %v1633
  %v1635 = vpop.f32.mrf.mxu0
  %1636 = vmatprep.mubr.f32.mxu0 0.0
  %1637 = vmatmul.mubr.f32.gmra.mxu0 %v167
  %v1638 = vpop.f32.mrf.mxu0
  %v1639 = vadd.f32 0.0, %v1638
  %v1640 = vpop.f32.mrf.mxu0
  %1641 = vdwg.mxu0
  %v1643 = vsel %vm181, %v305, 0
  %1645 = vmatprep.subr.mxu0 0.0
  %1646 = vmatpush1.msra.mxu0 0.0
  %1647 = vmatprep.subr.mxu0 0.0
  %1648 = vmatpush1.msra.mxu0 0.0
  %1649 = vmatprep.subr.mxu0 0.0
  %1650 = vmatpush1.msra.mxu0 0.0
  %1651 = vmatprep.subr.mxu0 0.0
  %1652 = vmatpush1.msra.mxu0 0.0
  %1653 = vmatprep.subr.mxu0 0.0
  %1654 = vmatpush1.msra.mxu0 0.0
  %1655 = vmatprep.subr.mxu0 0.0
  %1656 = vmatpush1.msra.mxu0 0.0
  %1657 = vmatprep.subr.mxu0 0.0
  %1658 = vmatpush1.msra.mxu0 0.0
  %1659 = vmatprep.subr.mxu0 0.0
  %1660 = vmatpush1.msra.mxu0 0.0
  %1661 = vmatprep.subr.mxu0 0.0
  %1662 = vmatpush1.msra.mxu0 0.0
  %1663 = vmatprep.subr.mxu0 0.0
  %1664 = vmatpush1.msra.mxu0 0.0
  %1665 = vmatprep.subr.mxu0 0.0
  %1666 = vmatpush1.msra.mxu0 0.0
  %1667 = vmatprep.subr.mxu0 0.0
  %1668 = vmatpush1.msra.mxu0 0.0
  %1669 = vmatprep.subr.mxu0 0.0
  %1670 = vmatpush1.msra.mxu0 0.0
  %1671 = vmatprep.subr.mxu0 0.0
  %1672 = vmatpush1.msra.mxu0 0.0
  %1673 = vmatprep.subr.mxu0 0.0
  %1674 = vmatpush1.msra.mxu0 0.0
  %1675 = vmatprep.subr.mxu0 0.0
  %1676 = vmatpush1.msra.mxu0 %v1643
  %1677 = vmatprep.subr.mxu0 0.0
  %1678 = vmatpush2.msra.mxu0 0.0
  %1679 = vmatprep.subr.mxu0 0.0
  %1680 = vmatpush2.msra.mxu0 0.0
  %1681 = vmatprep.subr.mxu0 0.0
  %1682 = vmatpush2.msra.mxu0 0.0
  %1683 = vmatprep.subr.mxu0 0.0
  %1684 = vmatpush2.msra.mxu0 0.0
  %1685 = vmatprep.subr.mxu0 0.0
  %1686 = vmatpush2.msra.mxu0 0.0
  %1687 = vmatprep.subr.mxu0 0.0
  %1688 = vmatpush2.msra.mxu0 0.0
  %1689 = vmatprep.subr.mxu0 0.0
  %1690 = vmatpush2.msra.mxu0 0.0
  %1691 = vmatprep.subr.mxu0 0.0
  %1692 = vmatpush2.msra.mxu0 0.0
  %1693 = vmatprep.subr.mxu0 0.0
  %1694 = vmatpush2.msra.mxu0 0.0
  %1695 = vmatprep.subr.mxu0 0.0
  %1696 = vmatpush2.msra.mxu0 0.0
  %1697 = vmatprep.subr.mxu0 0.0
  %1698 = vmatpush2.msra.mxu0 0.0
  %1699 = vmatprep.subr.mxu0 0.0
  %1700 = vmatpush2.msra.mxu0 0.0
  %1701 = vmatprep.subr.mxu0 0.0
  %1702 = vmatpush2.msra.mxu0 0.0
  %1703 = vmatprep.subr.mxu0 0.0
  %1704 = vmatpush2.msra.mxu0 0.0
  %1705 = vmatprep.subr.mxu0 0.0
  %1706 = vmatpush2.msra.mxu0 0.0
  %1707 = vmatprep.subr.mxu0 0.0
  %1708 = vmatpush2.msra.mxu0 0.0
  %1709 = vmatprep.mubr.f32.mxu0 0.0
  %1710 = vmatmul.mubr.f32.gmra.mxu0 %v158
  %v1711 = vpop.f32.mrf.mxu0
  %v1712 = vadd.f32 0.0, %v1711
  %v1713 = vpop.f32.mrf.mxu0
  %1714 = vmatprep.mubr.f32.mxu0 0.0
  %1715 = vmatmul.mubr.f32.gmra.mxu0 %v161
  %v1716 = vpop.f32.mrf.mxu0
  %v1717 = vadd.f32 0.0, %v1716
  %v1718 = vpop.f32.mrf.mxu0
  %1719 = vmatprep.mubr.f32.mxu0 0.0
  %1720 = vmatmul.mubr.f32.gmra.mxu0 %v164
  %v1721 = vpop.f32.mrf.mxu0
  %v1722 = vadd.f32 0.0, %v1721
  %v1723 = vpop.f32.mrf.mxu0
  %1724 = vmatprep.mubr.f32.mxu0 0.0
  %1725 = vmatmul.mubr.f32.gmra.mxu0 %v167
  %v1726 = vpop.f32.mrf.mxu0
  %v1727 = vadd.f32 0.0, %v1726
  %v1728 = vpop.f32.mrf.mxu0
  %1729 = vdwg.mxu0
  %v1731 = vsel %vm181, %v306, 0
  %1733 = vmatprep.subr.mxu0 0.0
  %1734 = vmatpush1.msra.mxu0 0.0
  %1735 = vmatprep.subr.mxu0 0.0
  %1736 = vmatpush1.msra.mxu0 0.0
  %1737 = vmatprep.subr.mxu0 0.0
  %1738 = vmatpush1.msra.mxu0 0.0
  %1739 = vmatprep.subr.mxu0 0.0
  %1740 = vmatpush1.msra.mxu0 0.0
  %1741 = vmatprep.subr.mxu0 0.0
  %1742 = vmatpush1.msra.mxu0 0.0
  %1743 = vmatprep.subr.mxu0 0.0
  %1744 = vmatpush1.msra.mxu0 0.0
  %1745 = vmatprep.subr.mxu0 0.0
  %1746 = vmatpush1.msra.mxu0 0.0
  %1747 = vmatprep.subr.mxu0 0.0
  %1748 = vmatpush1.msra.mxu0 0.0
  %1749 = vmatprep.subr.mxu0 0.0
  %1750 = vmatpush1.msra.mxu0 0.0
  %1751 = vmatprep.subr.mxu0 0.0
  %1752 = vmatpush1.msra.mxu0 0.0
  %1753 = vmatprep.subr.mxu0 0.0
  %1754 = vmatpush1.msra.mxu0 0.0
  %1755 = vmatprep.subr.mxu0 0.0
  %1756 = vmatpush1.msra.mxu0 0.0
  %1757 = vmatprep.subr.mxu0 0.0
  %1758 = vmatpush1.msra.mxu0 0.0
  %1759 = vmatprep.subr.mxu0 0.0
  %1760 = vmatpush1.msra.mxu0 0.0
  %1761 = vmatprep.subr.mxu0 0.0
  %1762 = vmatpush1.msra.mxu0 0.0
  %1763 = vmatprep.subr.mxu0 0.0
  %1764 = vmatpush1.msra.mxu0 %v1731
  %1765 = vmatprep.subr.mxu0 0.0
  %1766 = vmatpush2.msra.mxu0 0.0
  %1767 = vmatprep.subr.mxu0 0.0
  %1768 = vmatpush2.msra.mxu0 0.0
  %1769 = vmatprep.subr.mxu0 0.0
  %1770 = vmatpush2.msra.mxu0 0.0
  %1771 = vmatprep.subr.mxu0 0.0
  %1772 = vmatpush2.msra.mxu0 0.0
  %1773 = vmatprep.subr.mxu0 0.0
  %1774 = vmatpush2.msra.mxu0 0.0
  %1775 = vmatprep.subr.mxu0 0.0
  %1776 = vmatpush2.msra.mxu0 0.0
  %1777 = vmatprep.subr.mxu0 0.0
  %1778 = vmatpush2.msra.mxu0 0.0
  %1779 = vmatprep.subr.mxu0 0.0
  %1780 = vmatpush2.msra.mxu0 0.0
  %1781 = vmatprep.subr.mxu0 0.0
  %1782 = vmatpush2.msra.mxu0 0.0
  %1783 = vmatprep.subr.mxu0 0.0
  %1784 = vmatpush2.msra.mxu0 0.0
  %1785 = vmatprep.subr.mxu0 0.0
  %1786 = vmatpush2.msra.mxu0 0.0
  %1787 = vmatprep.subr.mxu0 0.0
  %1788 = vmatpush2.msra.mxu0 0.0
  %1789 = vmatprep.subr.mxu0 0.0
  %1790 = vmatpush2.msra.mxu0 0.0
  %1791 = vmatprep.subr.mxu0 0.0
  %1792 = vmatpush2.msra.mxu0 0.0
  %1793 = vmatprep.subr.mxu0 0.0
  %1794 = vmatpush2.msra.mxu0 0.0
  %1795 = vmatprep.subr.mxu0 0.0
  %1796 = vmatpush2.msra.mxu0 0.0
  %1797 = vmatprep.mubr.f32.mxu0 0.0
  %1798 = vmatmul.mubr.f32.gmra.mxu0 %v170
  %v1799 = vpop.f32.mrf.mxu0
  %v1800 = vadd.f32 0.0, %v1799
  %v1801 = vpop.f32.mrf.mxu0
  %1802 = vmatprep.mubr.f32.mxu0 0.0
  %1803 = vmatmul.mubr.f32.gmra.mxu0 %v173
  %v1804 = vpop.f32.mrf.mxu0
  %v1805 = vadd.f32 0.0, %v1804
  %v1806 = vpop.f32.mrf.mxu0
  %1807 = vmatprep.mubr.f32.mxu0 0.0
  %1808 = vmatmul.mubr.f32.gmra.mxu0 %v176
  %v1809 = vpop.f32.mrf.mxu0
  %v1810 = vadd.f32 0.0, %v1809
  %v1811 = vpop.f32.mrf.mxu0
  %1812 = vmatprep.mubr.f32.mxu0 0.0
  %1813 = vmatmul.mubr.f32.gmra.mxu0 %v179
  %v1814 = vpop.f32.mrf.mxu0
  %v1815 = vadd.f32 0.0, %v1814
  %v1816 = vpop.f32.mrf.mxu0
  %1817 = vdwg.mxu0
  %v1819 = vsel %vm181, %v307, 0
  %1821 = vmatprep.subr.mxu0 0.0
  %1822 = vmatpush1.msra.mxu0 0.0
  %1823 = vmatprep.subr.mxu0 0.0
  %1824 = vmatpush1.msra.mxu0 0.0
  %1825 = vmatprep.subr.mxu0 0.0
  %1826 = vmatpush1.msra.mxu0 0.0
  %1827 = vmatprep.subr.mxu0 0.0
  %1828 = vmatpush1.msra.mxu0 0.0
  %1829 = vmatprep.subr.mxu0 0.0
  %1830 = vmatpush1.msra.mxu0 0.0
  %1831 = vmatprep.subr.mxu0 0.0
  %1832 = vmatpush1.msra.mxu0 0.0
  %1833 = vmatprep.subr.mxu0 0.0
  %1834 = vmatpush1.msra.mxu0 0.0
  %1835 = vmatprep.subr.mxu0 0.0
  %1836 = vmatpush1.msra.mxu0 0.0
  %1837 = vmatprep.subr.mxu0 0.0
  %1838 = vmatpush1.msra.mxu0 0.0
  %1839 = vmatprep.subr.mxu0 0.0
  %1840 = vmatpush1.msra.mxu0 0.0
  %1841 = vmatprep.subr.mxu0 0.0
  %1842 = vmatpush1.msra.mxu0 0.0
  %1843 = vmatprep.subr.mxu0 0.0
  %1844 = vmatpush1.msra.mxu0 0.0
  %1845 = vmatprep.subr.mxu0 0.0
  %1846 = vmatpush1.msra.mxu0 0.0
  %1847 = vmatprep.subr.mxu0 0.0
  %1848 = vmatpush1.msra.mxu0 0.0
  %1849 = vmatprep.subr.mxu0 0.0
  %1850 = vmatpush1.msra.mxu0 0.0
  %1851 = vmatprep.subr.mxu0 0.0
  %1852 = vmatpush1.msra.mxu0 %v1819
  %1853 = vmatprep.subr.mxu0 0.0
  %1854 = vmatpush2.msra.mxu0 0.0
  %1855 = vmatprep.subr.mxu0 0.0
  %1856 = vmatpush2.msra.mxu0 0.0
  %1857 = vmatprep.subr.mxu0 0.0
  %1858 = vmatpush2.msra.mxu0 0.0
  %1859 = vmatprep.subr.mxu0 0.0
  %1860 = vmatpush2.msra.mxu0 0.0
  %1861 = vmatprep.subr.mxu0 0.0
  %1862 = vmatpush2.msra.mxu0 0.0
  %1863 = vmatprep.subr.mxu0 0.0
  %1864 = vmatpush2.msra.mxu0 0.0
  %1865 = vmatprep.subr.mxu0 0.0
  %1866 = vmatpush2.msra.mxu0 0.0
  %1867 = vmatprep.subr.mxu0 0.0
  %1868 = vmatpush2.msra.mxu0 0.0
  %1869 = vmatprep.subr.mxu0 0.0
  %1870 = vmatpush2.msra.mxu0 0.0
  %1871 = vmatprep.subr.mxu0 0.0
  %1872 = vmatpush2.msra.mxu0 0.0
  %1873 = vmatprep.subr.mxu0 0.0
  %1874 = vmatpush2.msra.mxu0 0.0
  %1875 = vmatprep.subr.mxu0 0.0
  %1876 = vmatpush2.msra.mxu0 0.0
  %1877 = vmatprep.subr.mxu0 0.0
  %1878 = vmatpush2.msra.mxu0 0.0
  %1879 = vmatprep.subr.mxu0 0.0
  %1880 = vmatpush2.msra.mxu0 0.0
  %1881 = vmatprep.subr.mxu0 0.0
  %1882 = vmatpush2.msra.mxu0 0.0
  %1883 = vmatprep.subr.mxu0 0.0
  %1884 = vmatpush2.msra.mxu0 0.0
  %1885 = vmatprep.mubr.f32.mxu0 0.0
  %1886 = vmatmul.mubr.f32.gmra.mxu0 %v170
  %v1887 = vpop.f32.mrf.mxu0
  %v1888 = vadd.f32 0.0, %v1887
  %v1889 = vpop.f32.mrf.mxu0
  %1890 = vmatprep.mubr.f32.mxu0 0.0
  %1891 = vmatmul.mubr.f32.gmra.mxu0 %v173
  %v1892 = vpop.f32.mrf.mxu0
  %v1893 = vadd.f32 0.0, %v1892
  %v1894 = vpop.f32.mrf.mxu0
  %1895 = vmatprep.mubr.f32.mxu0 0.0
  %1896 = vmatmul.mubr.f32.gmra.mxu0 %v176
  %v1897 = vpop.f32.mrf.mxu0
  %v1898 = vadd.f32 0.0, %v1897
  %v1899 = vpop.f32.mrf.mxu0
  %1900 = vmatprep.mubr.f32.mxu0 0.0
  %1901 = vmatmul.mubr.f32.gmra.mxu0 %v179
  %v1902 = vpop.f32.mrf.mxu0
  %v1903 = vadd.f32 0.0, %v1902
  %v1904 = vpop.f32.mrf.mxu0
  %1905 = vdwg.mxu0
  %v1907 = vsel %vm181, %v308, 0
  %1909 = vmatprep.subr.mxu0 0.0
  %1910 = vmatpush1.msra.mxu0 0.0
  %1911 = vmatprep.subr.mxu0 0.0
  %1912 = vmatpush1.msra.mxu0 0.0
  %1913 = vmatprep.subr.mxu0 0.0
  %1914 = vmatpush1.msra.mxu0 0.0
  %1915 = vmatprep.subr.mxu0 0.0
  %1916 = vmatpush1.msra.mxu0 0.0
  %1917 = vmatprep.subr.mxu0 0.0
  %1918 = vmatpush1.msra.mxu0 0.0
  %1919 = vmatprep.subr.mxu0 0.0
  %1920 = vmatpush1.msra.mxu0 0.0
  %1921 = vmatprep.subr.mxu0 0.0
  %1922 = vmatpush1.msra.mxu0 0.0
  %1923 = vmatprep.subr.mxu0 0.0
  %1924 = vmatpush1.msra.mxu0 0.0
  %1925 = vmatprep.subr.mxu0 0.0
  %1926 = vmatpush1.msra.mxu0 0.0
  %1927 = vmatprep.subr.mxu0 0.0
  %1928 = vmatpush1.msra.mxu0 0.0
  %1929 = vmatprep.subr.mxu0 0.0
  %1930 = vmatpush1.msra.mxu0 0.0
  %1931 = vmatprep.subr.mxu0 0.0
  %1932 = vmatpush1.msra.mxu0 0.0
  %1933 = vmatprep.subr.mxu0 0.0
  %1934 = vmatpush1.msra.mxu0 0.0
  %1935 = vmatprep.subr.mxu0 0.0
  %1936 = vmatpush1.msra.mxu0 0.0
  %1937 = vmatprep.subr.mxu0 0.0
  %1938 = vmatpush1.msra.mxu0 0.0
  %1939 = vmatprep.subr.mxu0 0.0
  %1940 = vmatpush1.msra.mxu0 %v1907
  %1941 = vmatprep.subr.mxu0 0.0
  %1942 = vmatpush2.msra.mxu0 0.0
  %1943 = vmatprep.subr.mxu0 0.0
  %1944 = vmatpush2.msra.mxu0 0.0
  %1945 = vmatprep.subr.mxu0 0.0
  %1946 = vmatpush2.msra.mxu0 0.0
  %1947 = vmatprep.subr.mxu0 0.0
  %1948 = vmatpush2.msra.mxu0 0.0
  %1949 = vmatprep.subr.mxu0 0.0
  %1950 = vmatpush2.msra.mxu0 0.0
  %1951 = vmatprep.subr.mxu0 0.0
  %1952 = vmatpush2.msra.mxu0 0.0
  %1953 = vmatprep.subr.mxu0 0.0
  %1954 = vmatpush2.msra.mxu0 0.0
  %1955 = vmatprep.subr.mxu0 0.0
  %1956 = vmatpush2.msra.mxu0 0.0
  %1957 = vmatprep.subr.mxu0 0.0
  %1958 = vmatpush2.msra.mxu0 0.0
  %1959 = vmatprep.subr.mxu0 0.0
  %1960 = vmatpush2.msra.mxu0 0.0
  %1961 = vmatprep.subr.mxu0 0.0
  %1962 = vmatpush2.msra.mxu0 0.0
  %1963 = vmatprep.subr.mxu0 0.0
  %1964 = vmatpush2.msra.mxu0 0.0
  %1965 = vmatprep.subr.mxu0 0.0
  %1966 = vmatpush2.msra.mxu0 0.0
  %1967 = vmatprep.subr.mxu0 0.0
  %1968 = vmatpush2.msra.mxu0 0.0
  %1969 = vmatprep.subr.mxu0 0.0
  %1970 = vmatpush2.msra.mxu0 0.0
  %1971 = vmatprep.subr.mxu0 0.0
  %1972 = vmatpush2.msra.mxu0 0.0
  %1973 = vmatprep.mubr.f32.mxu0 0.0
  %1974 = vmatmul.mubr.f32.gmra.mxu0 %v170
  %v1975 = vpop.f32.mrf.mxu0
  %v1976 = vadd.f32 0.0, %v1975
  %v1977 = vpop.f32.mrf.mxu0
  %1978 = vmatprep.mubr.f32.mxu0 0.0
  %1979 = vmatmul.mubr.f32.gmra.mxu0 %v173
  %v1980 = vpop.f32.mrf.mxu0
  %v1981 = vadd.f32 0.0, %v1980
  %v1982 = vpop.f32.mrf.mxu0
  %1983 = vmatprep.mubr.f32.mxu0 0.0
  %1984 = vmatmul.mubr.f32.gmra.mxu0 %v176
  %v1985 = vpop.f32.mrf.mxu0
  %v1986 = vadd.f32 0.0, %v1985
  %v1987 = vpop.f32.mrf.mxu0
  %1988 = vmatprep.mubr.f32.mxu0 0.0
  %1989 = vmatmul.mubr.f32.gmra.mxu0 %v179
  %v1990 = vpop.f32.mrf.mxu0
  %v1991 = vadd.f32 0.0, %v1990
  %v1992 = vpop.f32.mrf.mxu0
  %1993 = vdwg.mxu0
  %v1995 = vsel %vm181, %v309, 0
  %1997 = vmatprep.subr.mxu0 0.0
  %1998 = vmatpush1.msra.mxu0 0.0
  %1999 = vmatprep.subr.mxu0 0.0
  %2000 = vmatpush1.msra.mxu0 0.0
  %2001 = vmatprep.subr.mxu0 0.0
  %2002 = vmatpush1.msra.mxu0 0.0
  %2003 = vmatprep.subr.mxu0 0.0
  %2004 = vmatpush1.msra.mxu0 0.0
  %2005 = vmatprep.subr.mxu0 0.0
  %2006 = vmatpush1.msra.mxu0 0.0
  %2007 = vmatprep.subr.mxu0 0.0
  %2008 = vmatpush1.msra.mxu0 0.0
  %2009 = vmatprep.subr.mxu0 0.0
  %2010 = vmatpush1.msra.mxu0 0.0
  %2011 = vmatprep.subr.mxu0 0.0
  %2012 = vmatpush1.msra.mxu0 0.0
  %2013 = vmatprep.subr.mxu0 0.0
  %2014 = vmatpush1.msra.mxu0 0.0
  %2015 = vmatprep.subr.mxu0 0.0
  %2016 = vmatpush1.msra.mxu0 0.0
  %2017 = vmatprep.subr.mxu0 0.0
  %2018 = vmatpush1.msra.mxu0 0.0
  %2019 = vmatprep.subr.mxu0 0.0
  %2020 = vmatpush1.msra.mxu0 0.0
  %2021 = vmatprep.subr.mxu0 0.0
  %2022 = vmatpush1.msra.mxu0 0.0
  %2023 = vmatprep.subr.mxu0 0.0
  %2024 = vmatpush1.msra.mxu0 0.0
  %2025 = vmatprep.subr.mxu0 0.0
  %2026 = vmatpush1.msra.mxu0 0.0
  %2027 = vmatprep.subr.mxu0 0.0
  %2028 = vmatpush1.msra.mxu0 %v1995
  %2029 = vmatprep.subr.mxu0 0.0
  %2030 = vmatpush2.msra.mxu0 0.0
  %2031 = vmatprep.subr.mxu0 0.0
  %2032 = vmatpush2.msra.mxu0 0.0
  %2033 = vmatprep.subr.mxu0 0.0
  %2034 = vmatpush2.msra.mxu0 0.0
  %2035 = vmatprep.subr.mxu0 0.0
  %2036 = vmatpush2.msra.mxu0 0.0
  %2037 = vmatprep.subr.mxu0 0.0
  %2038 = vmatpush2.msra.mxu0 0.0
  %2039 = vmatprep.subr.mxu0 0.0
  %2040 = vmatpush2.msra.mxu0 0.0
  %2041 = vmatprep.subr.mxu0 0.0
  %2042 = vmatpush2.msra.mxu0 0.0
  %2043 = vmatprep.subr.mxu0 0.0
  %2044 = vmatpush2.msra.mxu0 0.0
  %2045 = vmatprep.subr.mxu0 0.0
  %2046 = vmatpush2.msra.mxu0 0.0
  %2047 = vmatprep.subr.mxu0 0.0
  %2048 = vmatpush2.msra.mxu0 0.0
  %2049 = vmatprep.subr.mxu0 0.0
  %2050 = vmatpush2.msra.mxu0 0.0
  %2051 = vmatprep.subr.mxu0 0.0
  %2052 = vmatpush2.msra.mxu0 0.0
  %2053 = vmatprep.subr.mxu0 0.0
  %2054 = vmatpush2.msra.mxu0 0.0
  %2055 = vmatprep.subr.mxu0 0.0
  %2056 = vmatpush2.msra.mxu0 0.0
  %2057 = vmatprep.subr.mxu0 0.0
  %2058 = vmatpush2.msra.mxu0 0.0
  %2059 = vmatprep.subr.mxu0 0.0
  %2060 = vmatpush2.msra.mxu0 0.0
  %2061 = vmatprep.mubr.f32.mxu0 0.0
  %2062 = vmatmul.mubr.f32.gmra.mxu0 %v170
  %v2063 = vpop.f32.mrf.mxu0
  %v2064 = vadd.f32 0.0, %v2063
  %v2065 = vpop.f32.mrf.mxu0
  %2066 = vmatprep.mubr.f32.mxu0 0.0
  %2067 = vmatmul.mubr.f32.gmra.mxu0 %v173
  %v2068 = vpop.f32.mrf.mxu0
  %v2069 = vadd.f32 0.0, %v2068
  %v2070 = vpop.f32.mrf.mxu0
  %2071 = vmatprep.mubr.f32.mxu0 0.0
  %2072 = vmatmul.mubr.f32.gmra.mxu0 %v176
  %v2073 = vpop.f32.mrf.mxu0
  %v2074 = vadd.f32 0.0, %v2073
  %v2075 = vpop.f32.mrf.mxu0
  %2076 = vmatprep.mubr.f32.mxu0 0.0
  %2077 = vmatmul.mubr.f32.gmra.mxu0 %v179
  %v2078 = vpop.f32.mrf.mxu0
  %v2079 = vadd.f32 0.0, %v2078
  %v2080 = vpop.f32.mrf.mxu0
  %2081 = vdwg.mxu0
  %v2083 = vsel %vm181, %v310, 0
  %2085 = vmatprep.subr.mxu0 0.0
  %2086 = vmatpush1.msra.mxu0 0.0
  %2087 = vmatprep.subr.mxu0 0.0
  %2088 = vmatpush1.msra.mxu0 0.0
  %2089 = vmatprep.subr.mxu0 0.0
  %2090 = vmatpush1.msra.mxu0 0.0
  %2091 = vmatprep.subr.mxu0 0.0
  %2092 = vmatpush1.msra.mxu0 0.0
  %2093 = vmatprep.subr.mxu0 0.0
  %2094 = vmatpush1.msra.mxu0 0.0
  %2095 = vmatprep.subr.mxu0 0.0
  %2096 = vmatpush1.msra.mxu0 0.0
  %2097 = vmatprep.subr.mxu0 0.0
  %2098 = vmatpush1.msra.mxu0 0.0
  %2099 = vmatprep.subr.mxu0 0.0
  %2100 = vmatpush1.msra.mxu0 0.0
  %2101 = vmatprep.subr.mxu0 0.0
  %2102 = vmatpush1.msra.mxu0 0.0
  %2103 = vmatprep.subr.mxu0 0.0
  %2104 = vmatpush1.msra.mxu0 0.0
  %2105 = vmatprep.subr.mxu0 0.0
  %2106 = vmatpush1.msra.mxu0 0.0
  %2107 = vmatprep.subr.mxu0 0.0
  %2108 = vmatpush1.msra.mxu0 0.0
  %2109 = vmatprep.subr.mxu0 0.0
  %2110 = vmatpush1.msra.mxu0 0.0
  %2111 = vmatprep.subr.mxu0 0.0
  %2112 = vmatpush1.msra.mxu0 0.0
  %2113 = vmatprep.subr.mxu0 0.0
  %2114 = vmatpush1.msra.mxu0 0.0
  %2115 = vmatprep.subr.mxu0 0.0
  %2116 = vmatpush1.msra.mxu0 %v2083
  %2117 = vmatprep.subr.mxu0 0.0
  %2118 = vmatpush2.msra.mxu0 0.0
  %2119 = vmatprep.subr.mxu0 0.0
  %2120 = vmatpush2.msra.mxu0 0.0
  %2121 = vmatprep.subr.mxu0 0.0
  %2122 = vmatpush2.msra.mxu0 0.0
  %2123 = vmatprep.subr.mxu0 0.0
  %2124 = vmatpush2.msra.mxu0 0.0
  %2125 = vmatprep.subr.mxu0 0.0
  %2126 = vmatpush2.msra.mxu0 0.0
  %2127 = vmatprep.subr.mxu0 0.0
  %2128 = vmatpush2.msra.mxu0 0.0
  %2129 = vmatprep.subr.mxu0 0.0
  %2130 = vmatpush2.msra.mxu0 0.0
  %2131 = vmatprep.subr.mxu0 0.0
  %2132 = vmatpush2.msra.mxu0 0.0
  %2133 = vmatprep.subr.mxu0 0.0
  %2134 = vmatpush2.msra.mxu0 0.0
  %2135 = vmatprep.subr.mxu0 0.0
  %2136 = vmatpush2.msra.mxu0 0.0
  %2137 = vmatprep.subr.mxu0 0.0
  %2138 = vmatpush2.msra.mxu0 0.0
  %2139 = vmatprep.subr.mxu0 0.0
  %2140 = vmatpush2.msra.mxu0 0.0
  %2141 = vmatprep.subr.mxu0 0.0
  %2142 = vmatpush2.msra.mxu0 0.0
  %2143 = vmatprep.subr.mxu0 0.0
  %2144 = vmatpush2.msra.mxu0 0.0
  %2145 = vmatprep.subr.mxu0 0.0
  %2146 = vmatpush2.msra.mxu0 0.0
  %2147 = vmatprep.subr.mxu0 0.0
  %2148 = vmatpush2.msra.mxu0 0.0
  %2149 = vmatprep.mubr.f32.mxu0 0.0
  %2150 = vmatmul.mubr.f32.gmra.mxu0 %v170
  %v2151 = vpop.f32.mrf.mxu0
  %v2152 = vadd.f32 0.0, %v2151
  %v2153 = vpop.f32.mrf.mxu0
  %2154 = vmatprep.mubr.f32.mxu0 0.0
  %2155 = vmatmul.mubr.f32.gmra.mxu0 %v173
  %v2156 = vpop.f32.mrf.mxu0
  %v2157 = vadd.f32 0.0, %v2156
  %v2158 = vpop.f32.mrf.mxu0
  %2159 = vmatprep.mubr.f32.mxu0 0.0
  %2160 = vmatmul.mubr.f32.gmra.mxu0 %v176
  %v2161 = vpop.f32.mrf.mxu0
  %v2162 = vadd.f32 0.0, %v2161
  %v2163 = vpop.f32.mrf.mxu0
  %2164 = vmatprep.mubr.f32.mxu0 0.0
  %2165 = vmatmul.mubr.f32.gmra.mxu0 %v179
  %v2166 = vpop.f32.mrf.mxu0
  %v2167 = vadd.f32 0.0, %v2166
  %v2168 = vpop.f32.mrf.mxu0
  %2169 = vdwg.mxu0
  %v2171 = vsel %vm181, %v311, 0
  %2173 = vmatprep.subr.mxu0 0.0
  %2174 = vmatpush1.msra.mxu0 0.0
  %2175 = vmatprep.subr.mxu0 0.0
  %2176 = vmatpush1.msra.mxu0 0.0
  %2177 = vmatprep.subr.mxu0 0.0
  %2178 = vmatpush1.msra.mxu0 0.0
  %2179 = vmatprep.subr.mxu0 0.0
  %2180 = vmatpush1.msra.mxu0 0.0
  %2181 = vmatprep.subr.mxu0 0.0
  %2182 = vmatpush1.msra.mxu0 0.0
  %2183 = vmatprep.subr.mxu0 0.0
  %2184 = vmatpush1.msra.mxu0 0.0
  %2185 = vmatprep.subr.mxu0 0.0
  %2186 = vmatpush1.msra.mxu0 0.0
  %2187 = vmatprep.subr.mxu0 0.0
  %2188 = vmatpush1.msra.mxu0 0.0
  %2189 = vmatprep.subr.mxu0 0.0
  %2190 = vmatpush1.msra.mxu0 0.0
  %2191 = vmatprep.subr.mxu0 0.0
  %2192 = vmatpush1.msra.mxu0 0.0
  %2193 = vmatprep.subr.mxu0 0.0
  %2194 = vmatpush1.msra.mxu0 0.0
  %2195 = vmatprep.subr.mxu0 0.0
  %2196 = vmatpush1.msra.mxu0 0.0
  %2197 = vmatprep.subr.mxu0 0.0
  %2198 = vmatpush1.msra.mxu0 0.0
  %2199 = vmatprep.subr.mxu0 0.0
  %2200 = vmatpush1.msra.mxu0 0.0
  %2201 = vmatprep.subr.mxu0 0.0
  %2202 = vmatpush1.msra.mxu0 0.0
  %2203 = vmatprep.subr.mxu0 0.0
  %2204 = vmatpush1.msra.mxu0 %v2171
  %2205 = vmatprep.subr.mxu0 0.0
  %2206 = vmatpush2.msra.mxu0 0.0
  %2207 = vmatprep.subr.mxu0 0.0
  %2208 = vmatpush2.msra.mxu0 0.0
  %2209 = vmatprep.subr.mxu0 0.0
  %2210 = vmatpush2.msra.mxu0 0.0
  %2211 = vmatprep.subr.mxu0 0.0
  %2212 = vmatpush2.msra.mxu0 0.0
  %2213 = vmatprep.subr.mxu0 0.0
  %2214 = vmatpush2.msra.mxu0 0.0
  %2215 = vmatprep.subr.mxu0 0.0
  %2216 = vmatpush2.msra.mxu0 0.0
  %2217 = vmatprep.subr.mxu0 0.0
  %2218 = vmatpush2.msra.mxu0 0.0
  %2219 = vmatprep.subr.mxu0 0.0
  %2220 = vmatpush2.msra.mxu0 0.0
  %2221 = vmatprep.subr.mxu0 0.0
  %2222 = vmatpush2.msra.mxu0 0.0
  %2223 = vmatprep.subr.mxu0 0.0
  %2224 = vmatpush2.msra.mxu0 0.0
  %2225 = vmatprep.subr.mxu0 0.0
  %2226 = vmatpush2.msra.mxu0 0.0
  %2227 = vmatprep.subr.mxu0 0.0
  %2228 = vmatpush2.msra.mxu0 0.0
  %2229 = vmatprep.subr.mxu0 0.0
  %2230 = vmatpush2.msra.mxu0 0.0
  %2231 = vmatprep.subr.mxu0 0.0
  %2232 = vmatpush2.msra.mxu0 0.0
  %2233 = vmatprep.subr.mxu0 0.0
  %2234 = vmatpush2.msra.mxu0 0.0
  %2235 = vmatprep.subr.mxu0 0.0
  %2236 = vmatpush2.msra.mxu0 0.0
  %2237 = vmatprep.mubr.f32.mxu0 0.0
  %2238 = vmatmul.mubr.f32.gmra.mxu0 %v170
  %v2239 = vpop.f32.mrf.mxu0
  %v2240 = vadd.f32 0.0, %v2239
  %v2241 = vpop.f32.mrf.mxu0
  %2242 = vmatprep.mubr.f32.mxu0 0.0
  %2243 = vmatmul.mubr.f32.gmra.mxu0 %v173
  %v2244 = vpop.f32.mrf.mxu0
  %v2245 = vadd.f32 0.0, %v2244
  %v2246 = vpop.f32.mrf.mxu0
  %2247 = vmatprep.mubr.f32.mxu0 0.0
  %2248 = vmatmul.mubr.f32.gmra.mxu0 %v176
  %v2249 = vpop.f32.mrf.mxu0
  %v2250 = vadd.f32 0.0, %v2249
  %v2251 = vpop.f32.mrf.mxu0
  %2252 = vmatprep.mubr.f32.mxu0 0.0
  %2253 = vmatmul.mubr.f32.gmra.mxu0 %v179
  %v2254 = vpop.f32.mrf.mxu0
  %v2255 = vadd.f32 0.0, %v2254
  %v2256 = vpop.f32.mrf.mxu0
  %2257 = vdwg.mxu0
  %v2259 = vsel %vm181, %v312, 0
  %2261 = vmatprep.subr.mxu0 0.0
  %2262 = vmatpush1.msra.mxu0 0.0
  %2263 = vmatprep.subr.mxu0 0.0
  %2264 = vmatpush1.msra.mxu0 0.0
  %2265 = vmatprep.subr.mxu0 0.0
  %2266 = vmatpush1.msra.mxu0 0.0
  %2267 = vmatprep.subr.mxu0 0.0
  %2268 = vmatpush1.msra.mxu0 0.0
  %2269 = vmatprep.subr.mxu0 0.0
  %2270 = vmatpush1.msra.mxu0 0.0
  %2271 = vmatprep.subr.mxu0 0.0
  %2272 = vmatpush1.msra.mxu0 0.0
  %2273 = vmatprep.subr.mxu0 0.0
  %2274 = vmatpush1.msra.mxu0 0.0
  %2275 = vmatprep.subr.mxu0 0.0
  %2276 = vmatpush1.msra.mxu0 0.0
  %2277 = vmatprep.subr.mxu0 0.0
  %2278 = vmatpush1.msra.mxu0 0.0
  %2279 = vmatprep.subr.mxu0 0.0
  %2280 = vmatpush1.msra.mxu0 0.0
  %2281 = vmatprep.subr.mxu0 0.0
  %2282 = vmatpush1.msra.mxu0 0.0
  %2283 = vmatprep.subr.mxu0 0.0
  %2284 = vmatpush1.msra.mxu0 0.0
  %2285 = vmatprep.subr.mxu0 0.0
  %2286 = vmatpush1.msra.mxu0 0.0
  %2287 = vmatprep.subr.mxu0 0.0
  %2288 = vmatpush1.msra.mxu0 0.0
  %2289 = vmatprep.subr.mxu0 0.0
  %2290 = vmatpush1.msra.mxu0 0.0
  %2291 = vmatprep.subr.mxu0 0.0
  %2292 = vmatpush1.msra.mxu0 %v2259
  %2293 = vmatprep.subr.mxu0 0.0
  %2294 = vmatpush2.msra.mxu0 0.0
  %2295 = vmatprep.subr.mxu0 0.0
  %2296 = vmatpush2.msra.mxu0 0.0
  %2297 = vmatprep.subr.mxu0 0.0
  %2298 = vmatpush2.msra.mxu0 0.0
  %2299 = vmatprep.subr.mxu0 0.0
  %2300 = vmatpush2.msra.mxu0 0.0
  %2301 = vmatprep.subr.mxu0 0.0
  %2302 = vmatpush2.msra.mxu0 0.0
  %2303 = vmatprep.subr.mxu0 0.0
  %2304 = vmatpush2.msra.mxu0 0.0
  %2305 = vmatprep.subr.mxu0 0.0
  %2306 = vmatpush2.msra.mxu0 0.0
  %2307 = vmatprep.subr.mxu0 0.0
  %2308 = vmatpush2.msra.mxu0 0.0
  %2309 = vmatprep.subr.mxu0 0.0
  %2310 = vmatpush2.msra.mxu0 0.0
  %2311 = vmatprep.subr.mxu0 0.0
  %2312 = vmatpush2.msra.mxu0 0.0
  %2313 = vmatprep.subr.mxu0 0.0
  %2314 = vmatpush2.msra.mxu0 0.0
  %2315 = vmatprep.subr.mxu0 0.0
  %2316 = vmatpush2.msra.mxu0 0.0
  %2317 = vmatprep.subr.mxu0 0.0
  %2318 = vmatpush2.msra.mxu0 0.0
  %2319 = vmatprep.subr.mxu0 0.0
  %2320 = vmatpush2.msra.mxu0 0.0
  %2321 = vmatprep.subr.mxu0 0.0
  %2322 = vmatpush2.msra.mxu0 0.0
  %2323 = vmatprep.subr.mxu0 0.0
  %2324 = vmatpush2.msra.mxu0 0.0
  %2325 = vmatprep.mubr.f32.mxu0 0.0
  %2326 = vmatmul.mubr.f32.gmra.mxu0 %v170
  %v2327 = vpop.f32.mrf.mxu0
  %v2328 = vadd.f32 0.0, %v2327
  %v2329 = vpop.f32.mrf.mxu0
  %2330 = vmatprep.mubr.f32.mxu0 0.0
  %2331 = vmatmul.mubr.f32.gmra.mxu0 %v173
  %v2332 = vpop.f32.mrf.mxu0
  %v2333 = vadd.f32 0.0, %v2332
  %v2334 = vpop.f32.mrf.mxu0
  %2335 = vmatprep.mubr.f32.mxu0 0.0
  %2336 = vmatmul.mubr.f32.gmra.mxu0 %v176
  %v2337 = vpop.f32.mrf.mxu0
  %v2338 = vadd.f32 0.0, %v2337
  %v2339 = vpop.f32.mrf.mxu0
  %2340 = vmatprep.mubr.f32.mxu0 0.0
  %2341 = vmatmul.mubr.f32.gmra.mxu0 %v179
  %v2342 = vpop.f32.mrf.mxu0
  %v2343 = vadd.f32 0.0, %v2342
  %v2344 = vpop.f32.mrf.mxu0
  %2345 = vdwg.mxu0
  %v2347 = vsel %vm181, %v313, 0
  %2349 = vmatprep.subr.mxu0 0.0
  %2350 = vmatpush1.msra.mxu0 0.0
  %2351 = vmatprep.subr.mxu0 0.0
  %2352 = vmatpush1.msra.mxu0 0.0
  %2353 = vmatprep.subr.mxu0 0.0
  %2354 = vmatpush1.msra.mxu0 0.0
  %2355 = vmatprep.subr.mxu0 0.0
  %2356 = vmatpush1.msra.mxu0 0.0
  %2357 = vmatprep.subr.mxu0 0.0
  %2358 = vmatpush1.msra.mxu0 0.0
  %2359 = vmatprep.subr.mxu0 0.0
  %2360 = vmatpush1.msra.mxu0 0.0
  %2361 = vmatprep.subr.mxu0 0.0
  %2362 = vmatpush1.msra.mxu0 0.0
  %2363 = vmatprep.subr.mxu0 0.0
  %2364 = vmatpush1.msra.mxu0 0.0
  %2365 = vmatprep.subr.mxu0 0.0
  %2366 = vmatpush1.msra.mxu0 0.0
  %2367 = vmatprep.subr.mxu0 0.0
  %2368 = vmatpush1.msra.mxu0 0.0
  %2369 = vmatprep.subr.mxu0 0.0
  %2370 = vmatpush1.msra.mxu0 0.0
  %2371 = vmatprep.subr.mxu0 0.0
  %2372 = vmatpush1.msra.mxu0 0.0
  %2373 = vmatprep.subr.mxu0 0.0
  %2374 = vmatpush1.msra.mxu0 0.0
  %2375 = vmatprep.subr.mxu0 0.0
  %2376 = vmatpush1.msra.mxu0 0.0
  %2377 = vmatprep.subr.mxu0 0.0
  %2378 = vmatpush1.msra.mxu0 0.0
  %2379 = vmatprep.subr.mxu0 0.0
  %2380 = vmatpush1.msra.mxu0 %v2347
  %2381 = vmatprep.subr.mxu0 0.0
  %2382 = vmatpush2.msra.mxu0 0.0
  %2383 = vmatprep.subr.mxu0 0.0
  %2384 = vmatpush2.msra.mxu0 0.0
  %2385 = vmatprep.subr.mxu0 0.0
  %2386 = vmatpush2.msra.mxu0 0.0
  %2387 = vmatprep.subr.mxu0 0.0
  %2388 = vmatpush2.msra.mxu0 0.0
  %2389 = vmatprep.subr.mxu0 0.0
  %2390 = vmatpush2.msra.mxu0 0.0
  %2391 = vmatprep.subr.mxu0 0.0
  %2392 = vmatpush2.msra.mxu0 0.0
  %2393 = vmatprep.subr.mxu0 0.0
  %2394 = vmatpush2.msra.mxu0 0.0
  %2395 = vmatprep.subr.mxu0 0.0
  %2396 = vmatpush2.msra.mxu0 0.0
  %2397 = vmatprep.subr.mxu0 0.0
  %2398 = vmatpush2.msra.mxu0 0.0
  %2399 = vmatprep.subr.mxu0 0.0
  %2400 = vmatpush2.msra.mxu0 0.0
  %2401 = vmatprep.subr.mxu0 0.0
  %2402 = vmatpush2.msra.mxu0 0.0
  %2403 = vmatprep.subr.mxu0 0.0
  %2404 = vmatpush2.msra.mxu0 0.0
  %2405 = vmatprep.subr.mxu0 0.0
  %2406 = vmatpush2.msra.mxu0 0.0
  %2407 = vmatprep.subr.mxu0 0.0
  %2408 = vmatpush2.msra.mxu0 0.0
  %2409 = vmatprep.subr.mxu0 0.0
  %2410 = vmatpush2.msra.mxu0 0.0
  %2411 = vmatprep.subr.mxu0 0.0
  %2412 = vmatpush2.msra.mxu0 0.0
  %2413 = vmatprep.mubr.f32.mxu0 0.0
  %2414 = vmatmul.mubr.f32.gmra.mxu0 %v170
  %v2415 = vpop.f32.mrf.mxu0
  %v2416 = vadd.f32 0.0, %v2415
  %v2417 = vpop.f32.mrf.mxu0
  %2418 = vmatprep.mubr.f32.mxu0 0.0
  %2419 = vmatmul.mubr.f32.gmra.mxu0 %v173
  %v2420 = vpop.f32.mrf.mxu0
  %v2421 = vadd.f32 0.0, %v2420
  %v2422 = vpop.f32.mrf.mxu0
  %2423 = vmatprep.mubr.f32.mxu0 0.0
  %2424 = vmatmul.mubr.f32.gmra.mxu0 %v176
  %v2425 = vpop.f32.mrf.mxu0
  %v2426 = vadd.f32 0.0, %v2425
  %v2427 = vpop.f32.mrf.mxu0
  %2428 = vmatprep.mubr.f32.mxu0 0.0
  %2429 = vmatmul.mubr.f32.gmra.mxu0 %v179
  %v2430 = vpop.f32.mrf.mxu0
  %v2431 = vadd.f32 0.0, %v2430
  %v2432 = vpop.f32.mrf.mxu0
  %2433 = vdwg.mxu0
  %v2435 = vsel %vm181, %v314, 0
  %2437 = vmatprep.subr.mxu0 0.0
  %2438 = vmatpush1.msra.mxu0 0.0
  %2439 = vmatprep.subr.mxu0 0.0
  %2440 = vmatpush1.msra.mxu0 0.0
  %2441 = vmatprep.subr.mxu0 0.0
  %2442 = vmatpush1.msra.mxu0 0.0
  %2443 = vmatprep.subr.mxu0 0.0
  %2444 = vmatpush1.msra.mxu0 0.0
  %2445 = vmatprep.subr.mxu0 0.0
  %2446 = vmatpush1.msra.mxu0 0.0
  %2447 = vmatprep.subr.mxu0 0.0
  %2448 = vmatpush1.msra.mxu0 0.0
  %2449 = vmatprep.subr.mxu0 0.0
  %2450 = vmatpush1.msra.mxu0 0.0
  %2451 = vmatprep.subr.mxu0 0.0
  %2452 = vmatpush1.msra.mxu0 0.0
  %2453 = vmatprep.subr.mxu0 0.0
  %2454 = vmatpush1.msra.mxu0 0.0
  %2455 = vmatprep.subr.mxu0 0.0
  %2456 = vmatpush1.msra.mxu0 0.0
  %2457 = vmatprep.subr.mxu0 0.0
  %2458 = vmatpush1.msra.mxu0 0.0
  %2459 = vmatprep.subr.mxu0 0.0
  %2460 = vmatpush1.msra.mxu0 0.0
  %2461 = vmatprep.subr.mxu0 0.0
  %2462 = vmatpush1.msra.mxu0 0.0
  %2463 = vmatprep.subr.mxu0 0.0
  %2464 = vmatpush1.msra.mxu0 0.0
  %2465 = vmatprep.subr.mxu0 0.0
  %2466 = vmatpush1.msra.mxu0 0.0
  %2467 = vmatprep.subr.mxu0 0.0
  %2468 = vmatpush1.msra.mxu0 %v2435
  %2469 = vmatprep.subr.mxu0 0.0
  %2470 = vmatpush2.msra.mxu0 0.0
  %2471 = vmatprep.subr.mxu0 0.0
  %2472 = vmatpush2.msra.mxu0 0.0
  %2473 = vmatprep.subr.mxu0 0.0
  %2474 = vmatpush2.msra.mxu0 0.0
  %2475 = vmatprep.subr.mxu0 0.0
  %2476 = vmatpush2.msra.mxu0 0.0
  %2477 = vmatprep.subr.mxu0 0.0
  %2478 = vmatpush2.msra.mxu0 0.0
  %2479 = vmatprep.subr.mxu0 0.0
  %2480 = vmatpush2.msra.mxu0 0.0
  %2481 = vmatprep.subr.mxu0 0.0
  %2482 = vmatpush2.msra.mxu0 0.0
  %2483 = vmatprep.subr.mxu0 0.0
  %2484 = vmatpush2.msra.mxu0 0.0
  %2485 = vmatprep.subr.mxu0 0.0
  %2486 = vmatpush2.msra.mxu0 0.0
  %2487 = vmatprep.subr.mxu0 0.0
  %2488 = vmatpush2.msra.mxu0 0.0
  %2489 = vmatprep.subr.mxu0 0.0
  %2490 = vmatpush2.msra.mxu0 0.0
  %2491 = vmatprep.subr.mxu0 0.0
  %2492 = vmatpush2.msra.mxu0 0.0
  %2493 = vmatprep.subr.mxu0 0.0
  %2494 = vmatpush2.msra.mxu0 0.0
  %2495 = vmatprep.subr.mxu0 0.0
  %2496 = vmatpush2.msra.mxu0 0.0
  %2497 = vmatprep.subr.mxu0 0.0
  %2498 = vmatpush2.msra.mxu0 0.0
  %2499 = vmatprep.subr.mxu0 0.0
  %2500 = vmatpush2.msra.mxu0 0.0
  %2501 = vmatprep.mubr.f32.mxu0 0.0
  %2502 = vmatmul.mubr.f32.gmra.mxu0 %v170
  %v2503 = vpop.f32.mrf.mxu0
  %v2504 = vadd.f32 0.0, %v2503
  %v2505 = vpop.f32.mrf.mxu0
  %2506 = vmatprep.mubr.f32.mxu0 0.0
  %2507 = vmatmul.mubr.f32.gmra.mxu0 %v173
  %v2508 = vpop.f32.mrf.mxu0
  %v2509 = vadd.f32 0.0, %v2508
  %v2510 = vpop.f32.mrf.mxu0
  %2511 = vmatprep.mubr.f32.mxu0 0.0
  %2512 = vmatmul.mubr.f32.gmra.mxu0 %v176
  %v2513 = vpop.f32.mrf.mxu0
  %v2514 = vadd.f32 0.0, %v2513
  %v2515 = vpop.f32.mrf.mxu0
  %2516 = vmatprep.mubr.f32.mxu0 0.0
  %2517 = vmatmul.mubr.f32.gmra.mxu0 %v179
  %v2518 = vpop.f32.mrf.mxu0
  %v2519 = vadd.f32 0.0, %v2518
  %v2520 = vpop.f32.mrf.mxu0
  %2521 = vdwg.mxu0
  %v2523 = vsel %vm181, %v315, 0
  %2525 = vmatprep.subr.mxu0 0.0
  %2526 = vmatpush1.msra.mxu0 0.0
  %2527 = vmatprep.subr.mxu0 0.0
  %2528 = vmatpush1.msra.mxu0 0.0
  %2529 = vmatprep.subr.mxu0 0.0
  %2530 = vmatpush1.msra.mxu0 0.0
  %2531 = vmatprep.subr.mxu0 0.0
  %2532 = vmatpush1.msra.mxu0 0.0
  %2533 = vmatprep.subr.mxu0 0.0
  %2534 = vmatpush1.msra.mxu0 0.0
  %2535 = vmatprep.subr.mxu0 0.0
  %2536 = vmatpush1.msra.mxu0 0.0
  %2537 = vmatprep.subr.mxu0 0.0
  %2538 = vmatpush1.msra.mxu0 0.0
  %2539 = vmatprep.subr.mxu0 0.0
  %2540 = vmatpush1.msra.mxu0 0.0
  %2541 = vmatprep.subr.mxu0 0.0
  %2542 = vmatpush1.msra.mxu0 0.0
  %2543 = vmatprep.subr.mxu0 0.0
  %2544 = vmatpush1.msra.mxu0 0.0
  %2545 = vmatprep.subr.mxu0 0.0
  %2546 = vmatpush1.msra.mxu0 0.0
  %2547 = vmatprep.subr.mxu0 0.0
  %2548 = vmatpush1.msra.mxu0 0.0
  %2549 = vmatprep.subr.mxu0 0.0
  %2550 = vmatpush1.msra.mxu0 0.0
  %2551 = vmatprep.subr.mxu0 0.0
  %2552 = vmatpush1.msra.mxu0 0.0
  %2553 = vmatprep.subr.mxu0 0.0
  %2554 = vmatpush1.msra.mxu0 0.0
  %2555 = vmatprep.subr.mxu0 0.0
  %2556 = vmatpush1.msra.mxu0 %v2523
  %2557 = vmatprep.subr.mxu0 0.0
  %2558 = vmatpush2.msra.mxu0 0.0
  %2559 = vmatprep.subr.mxu0 0.0
  %2560 = vmatpush2.msra.mxu0 0.0
  %2561 = vmatprep.subr.mxu0 0.0
  %2562 = vmatpush2.msra.mxu0 0.0
  %2563 = vmatprep.subr.mxu0 0.0
  %2564 = vmatpush2.msra.mxu0 0.0
  %2565 = vmatprep.subr.mxu0 0.0
  %2566 = vmatpush2.msra.mxu0 0.0
  %2567 = vmatprep.subr.mxu0 0.0
  %2568 = vmatpush2.msra.mxu0 0.0
  %2569 = vmatprep.subr.mxu0 0.0
  %2570 = vmatpush2.msra.mxu0 0.0
  %2571 = vmatprep.subr.mxu0 0.0
  %2572 = vmatpush2.msra.mxu0 0.0
  %2573 = vmatprep.subr.mxu0 0.0
  %2574 = vmatpush2.msra.mxu0 0.0
  %2575 = vmatprep.subr.mxu0 0.0
  %2576 = vmatpush2.msra.mxu0 0.0
  %2577 = vmatprep.subr.mxu0 0.0
  %2578 = vmatpush2.msra.mxu0 0.0
  %2579 = vmatprep.subr.mxu0 0.0
  %2580 = vmatpush2.msra.mxu0 0.0
  %2581 = vmatprep.subr.mxu0 0.0
  %2582 = vmatpush2.msra.mxu0 0.0
  %2583 = vmatprep.subr.mxu0 0.0
  %2584 = vmatpush2.msra.mxu0 0.0
  %2585 = vmatprep.subr.mxu0 0.0
  %2586 = vmatpush2.msra.mxu0 0.0
  %2587 = vmatprep.subr.mxu0 0.0
  %2588 = vmatpush2.msra.mxu0 0.0
  %2589 = vmatprep.mubr.f32.mxu0 0.0
  %2590 = vmatmul.mubr.f32.gmra.mxu0 %v170
  %v2591 = vpop.f32.mrf.mxu0
  %v2592 = vadd.f32 0.0, %v2591
  %v2593 = vpop.f32.mrf.mxu0
  %2594 = vmatprep.mubr.f32.mxu0 0.0
  %2595 = vmatmul.mubr.f32.gmra.mxu0 %v173
  %v2596 = vpop.f32.mrf.mxu0
  %v2597 = vadd.f32 0.0, %v2596
  %v2598 = vpop.f32.mrf.mxu0
  %2599 = vmatprep.mubr.f32.mxu0 0.0
  %2600 = vmatmul.mubr.f32.gmra.mxu0 %v176
  %v2601 = vpop.f32.mrf.mxu0
  %v2602 = vadd.f32 0.0, %v2601
  %v2603 = vpop.f32.mrf.mxu0
  %2604 = vmatprep.mubr.f32.mxu0 0.0
  %2605 = vmatmul.mubr.f32.gmra.mxu0 %v179
  %v2606 = vpop.f32.mrf.mxu0
  %v2607 = vadd.f32 0.0, %v2606
  %v2608 = vpop.f32.mrf.mxu0
  %2609 = vdwg.mxu0
  %v2611 = vsel %vm181, %v316, 0
  %2613 = vmatprep.subr.mxu0 0.0
  %2614 = vmatpush1.msra.mxu0 0.0
  %2615 = vmatprep.subr.mxu0 0.0
  %2616 = vmatpush1.msra.mxu0 0.0
  %2617 = vmatprep.subr.mxu0 0.0
  %2618 = vmatpush1.msra.mxu0 0.0
  %2619 = vmatprep.subr.mxu0 0.0
  %2620 = vmatpush1.msra.mxu0 0.0
  %2621 = vmatprep.subr.mxu0 0.0
  %2622 = vmatpush1.msra.mxu0 0.0
  %2623 = vmatprep.subr.mxu0 0.0
  %2624 = vmatpush1.msra.mxu0 0.0
  %2625 = vmatprep.subr.mxu0 0.0
  %2626 = vmatpush1.msra.mxu0 0.0
  %2627 = vmatprep.subr.mxu0 0.0
  %2628 = vmatpush1.msra.mxu0 0.0
  %2629 = vmatprep.subr.mxu0 0.0
  %2630 = vmatpush1.msra.mxu0 0.0
  %2631 = vmatprep.subr.mxu0 0.0
  %2632 = vmatpush1.msra.mxu0 0.0
  %2633 = vmatprep.subr.mxu0 0.0
  %2634 = vmatpush1.msra.mxu0 0.0
  %2635 = vmatprep.subr.mxu0 0.0
  %2636 = vmatpush1.msra.mxu0 0.0
  %2637 = vmatprep.subr.mxu0 0.0
  %2638 = vmatpush1.msra.mxu0 0.0
  %2639 = vmatprep.subr.mxu0 0.0
  %2640 = vmatpush1.msra.mxu0 0.0
  %2641 = vmatprep.subr.mxu0 0.0
  %2642 = vmatpush1.msra.mxu0 0.0
  %2643 = vmatprep.subr.mxu0 0.0
  %2644 = vmatpush1.msra.mxu0 %v2611
  %2645 = vmatprep.subr.mxu0 0.0
  %2646 = vmatpush2.msra.mxu0 0.0
  %2647 = vmatprep.subr.mxu0 0.0
  %2648 = vmatpush2.msra.mxu0 0.0
  %2649 = vmatprep.subr.mxu0 0.0
  %2650 = vmatpush2.msra.mxu0 0.0
  %2651 = vmatprep.subr.mxu0 0.0
  %2652 = vmatpush2.msra.mxu0 0.0
  %2653 = vmatprep.subr.mxu0 0.0
  %2654 = vmatpush2.msra.mxu0 0.0
  %2655 = vmatprep.subr.mxu0 0.0
  %2656 = vmatpush2.msra.mxu0 0.0
  %2657 = vmatprep.subr.mxu0 0.0
  %2658 = vmatpush2.msra.mxu0 0.0
  %2659 = vmatprep.subr.mxu0 0.0
  %2660 = vmatpush2.msra.mxu0 0.0
  %2661 = vmatprep.subr.mxu0 0.0
  %2662 = vmatpush2.msra.mxu0 0.0
  %2663 = vmatprep.subr.mxu0 0.0
  %2664 = vmatpush2.msra.mxu0 0.0
  %2665 = vmatprep.subr.mxu0 0.0
  %2666 = vmatpush2.msra.mxu0 0.0
  %2667 = vmatprep.subr.mxu0 0.0
  %2668 = vmatpush2.msra.mxu0 0.0
  %2669 = vmatprep.subr.mxu0 0.0
  %2670 = vmatpush2.msra.mxu0 0.0
  %2671 = vmatprep.subr.mxu0 0.0
  %2672 = vmatpush2.msra.mxu0 0.0
  %2673 = vmatprep.subr.mxu0 0.0
  %2674 = vmatpush2.msra.mxu0 0.0
  %2675 = vmatprep.subr.mxu0 0.0
  %2676 = vmatpush2.msra.mxu0 0.0
  %2677 = vmatprep.mubr.f32.mxu0 0.0
  %2678 = vmatmul.mubr.f32.gmra.mxu0 %v170
  %v2679 = vpop.f32.mrf.mxu0
  %v2680 = vadd.f32 0.0, %v2679
  %v2681 = vpop.f32.mrf.mxu0
  %2682 = vmatprep.mubr.f32.mxu0 0.0
  %2683 = vmatmul.mubr.f32.gmra.mxu0 %v173
  %v2684 = vpop.f32.mrf.mxu0
  %v2685 = vadd.f32 0.0, %v2684
  %v2686 = vpop.f32.mrf.mxu0
  %2687 = vmatprep.mubr.f32.mxu0 0.0
  %2688 = vmatmul.mubr.f32.gmra.mxu0 %v176
  %v2689 = vpop.f32.mrf.mxu0
  %v2690 = vadd.f32 0.0, %v2689
  %v2691 = vpop.f32.mrf.mxu0
  %2692 = vmatprep.mubr.f32.mxu0 0.0
  %2693 = vmatmul.mubr.f32.gmra.mxu0 %v179
  %v2694 = vpop.f32.mrf.mxu0
  %v2695 = vadd.f32 0.0, %v2694
  %v2696 = vpop.f32.mrf.mxu0
  %2697 = vdwg.mxu0
  %v2699 = vsel %vm181, %v317, 0
  %2701 = vmatprep.subr.mxu0 0.0
  %2702 = vmatpush1.msra.mxu0 0.0
  %2703 = vmatprep.subr.mxu0 0.0
  %2704 = vmatpush1.msra.mxu0 0.0
  %2705 = vmatprep.subr.mxu0 0.0
  %2706 = vmatpush1.msra.mxu0 0.0
  %2707 = vmatprep.subr.mxu0 0.0
  %2708 = vmatpush1.msra.mxu0 0.0
  %2709 = vmatprep.subr.mxu0 0.0
  %2710 = vmatpush1.msra.mxu0 0.0
  %2711 = vmatprep.subr.mxu0 0.0
  %2712 = vmatpush1.msra.mxu0 0.0
  %2713 = vmatprep.subr.mxu0 0.0
  %2714 = vmatpush1.msra.mxu0 0.0
  %2715 = vmatprep.subr.mxu0 0.0
  %2716 = vmatpush1.msra.mxu0 0.0
  %2717 = vmatprep.subr.mxu0 0.0
  %2718 = vmatpush1.msra.mxu0 0.0
  %2719 = vmatprep.subr.mxu0 0.0
  %2720 = vmatpush1.msra.mxu0 0.0
  %2721 = vmatprep.subr.mxu0 0.0
  %2722 = vmatpush1.msra.mxu0 0.0
  %2723 = vmatprep.subr.mxu0 0.0
  %2724 = vmatpush1.msra.mxu0 0.0
  %2725 = vmatprep.subr.mxu0 0.0
  %2726 = vmatpush1.msra.mxu0 0.0
  %2727 = vmatprep.subr.mxu0 0.0
  %2728 = vmatpush1.msra.mxu0 0.0
  %2729 = vmatprep.subr.mxu0 0.0
  %2730 = vmatpush1.msra.mxu0 0.0
  %2731 = vmatprep.subr.mxu0 0.0
  %2732 = vmatpush1.msra.mxu0 %v2699
  %2733 = vmatprep.subr.mxu0 0.0
  %2734 = vmatpush2.msra.mxu0 0.0
  %2735 = vmatprep.subr.mxu0 0.0
  %2736 = vmatpush2.msra.mxu0 0.0
  %2737 = vmatprep.subr.mxu0 0.0
  %2738 = vmatpush2.msra.mxu0 0.0
  %2739 = vmatprep.subr.mxu0 0.0
  %2740 = vmatpush2.msra.mxu0 0.0
  %2741 = vmatprep.subr.mxu0 0.0
  %2742 = vmatpush2.msra.mxu0 0.0
  %2743 = vmatprep.subr.mxu0 0.0
  %2744 = vmatpush2.msra.mxu0 0.0
  %2745 = vmatprep.subr.mxu0 0.0
  %2746 = vmatpush2.msra.mxu0 0.0
  %2747 = vmatprep.subr.mxu0 0.0
  %2748 = vmatpush2.msra.mxu0 0.0
  %2749 = vmatprep.subr.mxu0 0.0
  %2750 = vmatpush2.msra.mxu0 0.0
  %2751 = vmatprep.subr.mxu0 0.0
  %2752 = vmatpush2.msra.mxu0 0.0
  %2753 = vmatprep.subr.mxu0 0.0
  %2754 = vmatpush2.msra.mxu0 0.0
  %2755 = vmatprep.subr.mxu0 0.0
  %2756 = vmatpush2.msra.mxu0 0.0
  %2757 = vmatprep.subr.mxu0 0.0
  %2758 = vmatpush2.msra.mxu0 0.0
  %2759 = vmatprep.subr.mxu0 0.0
  %2760 = vmatpush2.msra.mxu0 0.0
  %2761 = vmatprep.subr.mxu0 0.0
  %2762 = vmatpush2.msra.mxu0 0.0
  %2763 = vmatprep.subr.mxu0 0.0
  %2764 = vmatpush2.msra.mxu0 0.0
  %2765 = vmatprep.mubr.f32.mxu0 0.0
  %2766 = vmatmul.mubr.f32.gmra.mxu0 %v170
  %v2767 = vpop.f32.mrf.mxu0
  %v2768 = vadd.f32 0.0, %v2767
  %v2769 = vpop.f32.mrf.mxu0
  %2770 = vmatprep.mubr.f32.mxu0 0.0
  %2771 = vmatmul.mubr.f32.gmra.mxu0 %v173
  %v2772 = vpop.f32.mrf.mxu0
  %v2773 = vadd.f32 0.0, %v2772
  %v2774 = vpop.f32.mrf.mxu0
  %2775 = vmatprep.mubr.f32.mxu0 0.0
  %2776 = vmatmul.mubr.f32.gmra.mxu0 %v176
  %v2777 = vpop.f32.mrf.mxu0
  %v2778 = vadd.f32 0.0, %v2777
  %v2779 = vpop.f32.mrf.mxu0
  %2780 = vmatprep.mubr.f32.mxu0 0.0
  %2781 = vmatmul.mubr.f32.gmra.mxu0 %v179
  %v2782 = vpop.f32.mrf.mxu0
  %v2783 = vadd.f32 0.0, %v2782
  %v2784 = vpop.f32.mrf.mxu0
  %2785 = vdwg.mxu0
  %v2787 = vsel %vm181, %v318, 0
  %2789 = vmatprep.subr.mxu0 0.0
  %2790 = vmatpush1.msra.mxu0 0.0
  %2791 = vmatprep.subr.mxu0 0.0
  %2792 = vmatpush1.msra.mxu0 0.0
  %2793 = vmatprep.subr.mxu0 0.0
  %2794 = vmatpush1.msra.mxu0 0.0
  %2795 = vmatprep.subr.mxu0 0.0
  %2796 = vmatpush1.msra.mxu0 0.0
  %2797 = vmatprep.subr.mxu0 0.0
  %2798 = vmatpush1.msra.mxu0 0.0
  %2799 = vmatprep.subr.mxu0 0.0
  %2800 = vmatpush1.msra.mxu0 0.0
  %2801 = vmatprep.subr.mxu0 0.0
  %2802 = vmatpush1.msra.mxu0 0.0
  %2803 = vmatprep.subr.mxu0 0.0
  %2804 = vmatpush1.msra.mxu0 0.0
  %2805 = vmatprep.subr.mxu0 0.0
  %2806 = vmatpush1.msra.mxu0 0.0
  %2807 = vmatprep.subr.mxu0 0.0
  %2808 = vmatpush1.msra.mxu0 0.0
  %2809 = vmatprep.subr.mxu0 0.0
  %2810 = vmatpush1.msra.mxu0 0.0
  %2811 = vmatprep.subr.mxu0 0.0
  %2812 = vmatpush1.msra.mxu0 0.0
  %2813 = vmatprep.subr.mxu0 0.0
  %2814 = vmatpush1.msra.mxu0 0.0
  %2815 = vmatprep.subr.mxu0 0.0
  %2816 = vmatpush1.msra.mxu0 0.0
  %2817 = vmatprep.subr.mxu0 0.0
  %2818 = vmatpush1.msra.mxu0 0.0
  %2819 = vmatprep.subr.mxu0 0.0
  %2820 = vmatpush1.msra.mxu0 %v2787
  %2821 = vmatprep.subr.mxu0 0.0
  %2822 = vmatpush2.msra.mxu0 0.0
  %2823 = vmatprep.subr.mxu0 0.0
  %2824 = vmatpush2.msra.mxu0 0.0
  %2825 = vmatprep.subr.mxu0 0.0
  %2826 = vmatpush2.msra.mxu0 0.0
  %2827 = vmatprep.subr.mxu0 0.0
  %2828 = vmatpush2.msra.mxu0 0.0
  %2829 = vmatprep.subr.mxu0 0.0
  %2830 = vmatpush2.msra.mxu0 0.0
  %2831 = vmatprep.subr.mxu0 0.0
  %2832 = vmatpush2.msra.mxu0 0.0
  %2833 = vmatprep.subr.mxu0 0.0
  %2834 = vmatpush2.msra.mxu0 0.0
  %2835 = vmatprep.subr.mxu0 0.0
  %2836 = vmatpush2.msra.mxu0 0.0
  %2837 = vmatprep.subr.mxu0 0.0
  %2838 = vmatpush2.msra.mxu0 0.0
  %2839 = vmatprep.subr.mxu0 0.0
  %2840 = vmatpush2.msra.mxu0 0.0
  %2841 = vmatprep.subr.mxu0 0.0
  %2842 = vmatpush2.msra.mxu0 0.0
  %2843 = vmatprep.subr.mxu0 0.0
  %2844 = vmatpush2.msra.mxu0 0.0
  %2845 = vmatprep.subr.mxu0 0.0
  %2846 = vmatpush2.msra.mxu0 0.0
  %2847 = vmatprep.subr.mxu0 0.0
  %2848 = vmatpush2.msra.mxu0 0.0
  %2849 = vmatprep.subr.mxu0 0.0
  %2850 = vmatpush2.msra.mxu0 0.0
  %2851 = vmatprep.subr.mxu0 0.0
  %2852 = vmatpush2.msra.mxu0 0.0
  %2853 = vmatprep.mubr.f32.mxu0 0.0
  %2854 = vmatmul.mubr.f32.gmra.mxu0 %v170
  %v2855 = vpop.f32.mrf.mxu0
  %v2856 = vadd.f32 0.0, %v2855
  %v2857 = vpop.f32.mrf.mxu0
  %2858 = vmatprep.mubr.f32.mxu0 0.0
  %2859 = vmatmul.mubr.f32.gmra.mxu0 %v173
  %v2860 = vpop.f32.mrf.mxu0
  %v2861 = vadd.f32 0.0, %v2860
  %v2862 = vpop.f32.mrf.mxu0
  %2863 = vmatprep.mubr.f32.mxu0 0.0
  %2864 = vmatmul.mubr.f32.gmra.mxu0 %v176
  %v2865 = vpop.f32.mrf.mxu0
  %v2866 = vadd.f32 0.0, %v2865
  %v2867 = vpop.f32.mrf.mxu0
  %2868 = vmatprep.mubr.f32.mxu0 0.0
  %2869 = vmatmul.mubr.f32.gmra.mxu0 %v179
  %v2870 = vpop.f32.mrf.mxu0
  %v2871 = vadd.f32 0.0, %v2870
  %v2872 = vpop.f32.mrf.mxu0
  %2873 = vdwg.mxu0
  %v2875 = vsel %vm181, %v319, 0
  %2877 = vmatprep.subr.mxu0 0.0
  %2878 = vmatpush1.msra.mxu0 0.0
  %2879 = vmatprep.subr.mxu0 0.0
  %2880 = vmatpush1.msra.mxu0 0.0
  %2881 = vmatprep.subr.mxu0 0.0
  %2882 = vmatpush1.msra.mxu0 0.0
  %2883 = vmatprep.subr.mxu0 0.0
  %2884 = vmatpush1.msra.mxu0 0.0
  %2885 = vmatprep.subr.mxu0 0.0
  %2886 = vmatpush1.msra.mxu0 0.0
  %2887 = vmatprep.subr.mxu0 0.0
  %2888 = vmatpush1.msra.mxu0 0.0
  %2889 = vmatprep.subr.mxu0 0.0
  %2890 = vmatpush1.msra.mxu0 0.0
  %2891 = vmatprep.subr.mxu0 0.0
  %2892 = vmatpush1.msra.mxu0 0.0
  %2893 = vmatprep.subr.mxu0 0.0
  %2894 = vmatpush1.msra.mxu0 0.0
  %2895 = vmatprep.subr.mxu0 0.0
  %2896 = vmatpush1.msra.mxu0 0.0
  %2897 = vmatprep.subr.mxu0 0.0
  %2898 = vmatpush1.msra.mxu0 0.0
  %2899 = vmatprep.subr.mxu0 0.0
  %2900 = vmatpush1.msra.mxu0 0.0
  %2901 = vmatprep.subr.mxu0 0.0
  %2902 = vmatpush1.msra.mxu0 0.0
  %2903 = vmatprep.subr.mxu0 0.0
  %2904 = vmatpush1.msra.mxu0 0.0
  %2905 = vmatprep.subr.mxu0 0.0
  %2906 = vmatpush1.msra.mxu0 0.0
  %2907 = vmatprep.subr.mxu0 0.0
  %2908 = vmatpush1.msra.mxu0 %v2875
  %2909 = vmatprep.subr.mxu0 0.0
  %2910 = vmatpush2.msra.mxu0 0.0
  %2911 = vmatprep.subr.mxu0 0.0
  %2912 = vmatpush2.msra.mxu0 0.0
  %2913 = vmatprep.subr.mxu0 0.0
  %2914 = vmatpush2.msra.mxu0 0.0
  %2915 = vmatprep.subr.mxu0 0.0
  %2916 = vmatpush2.msra.mxu0 0.0
  %2917 = vmatprep.subr.mxu0 0.0
  %2918 = vmatpush2.msra.mxu0 0.0
  %2919 = vmatprep.subr.mxu0 0.0
  %2920 = vmatpush2.msra.mxu0 0.0
  %2921 = vmatprep.subr.mxu0 0.0
  %2922 = vmatpush2.msra.mxu0 0.0
  %2923 = vmatprep.subr.mxu0 0.0
  %2924 = vmatpush2.msra.mxu0 0.0
  %2925 = vmatprep.subr.mxu0 0.0
  %2926 = vmatpush2.msra.mxu0 0.0
  %2927 = vmatprep.subr.mxu0 0.0
  %2928 = vmatpush2.msra.mxu0 0.0
  %2929 = vmatprep.subr.mxu0 0.0
  %2930 = vmatpush2.msra.mxu0 0.0
  %2931 = vmatprep.subr.mxu0 0.0
  %2932 = vmatpush2.msra.mxu0 0.0
  %2933 = vmatprep.subr.mxu0 0.0
  %2934 = vmatpush2.msra.mxu0 0.0
  %2935 = vmatprep.subr.mxu0 0.0
  %2936 = vmatpush2.msra.mxu0 0.0
  %2937 = vmatprep.subr.mxu0 0.0
  %2938 = vmatpush2.msra.mxu0 0.0
  %2939 = vmatprep.subr.mxu0 0.0
  %2940 = vmatpush2.msra.mxu0 0.0
  %2941 = vmatprep.mubr.f32.mxu0 0.0
  %2942 = vmatmul.mubr.f32.gmra.mxu0 %v170
  %v2943 = vpop.f32.mrf.mxu0
  %v2944 = vadd.f32 0.0, %v2943
  %v2945 = vpop.f32.mrf.mxu0
  %2946 = vmatprep.mubr.f32.mxu0 0.0
  %2947 = vmatmul.mubr.f32.gmra.mxu0 %v173
  %v2948 = vpop.f32.mrf.mxu0
  %v2949 = vadd.f32 0.0, %v2948
  %v2950 = vpop.f32.mrf.mxu0
  %2951 = vmatprep.mubr.f32.mxu0 0.0
  %2952 = vmatmul.mubr.f32.gmra.mxu0 %v176
  %v2953 = vpop.f32.mrf.mxu0
  %v2954 = vadd.f32 0.0, %v2953
  %v2955 = vpop.f32.mrf.mxu0
  %2956 = vmatprep.mubr.f32.mxu0 0.0
  %2957 = vmatmul.mubr.f32.gmra.mxu0 %v179
  %v2958 = vpop.f32.mrf.mxu0
  %v2959 = vadd.f32 0.0, %v2958
  %v2960 = vpop.f32.mrf.mxu0
  %2961 = vdwg.mxu0
  %v2963 = vsel %vm181, %v320, 0
  %2965 = vmatprep.subr.mxu0 0.0
  %2966 = vmatpush1.msra.mxu0 0.0
  %2967 = vmatprep.subr.mxu0 0.0
  %2968 = vmatpush1.msra.mxu0 0.0
  %2969 = vmatprep.subr.mxu0 0.0
  %2970 = vmatpush1.msra.mxu0 0.0
  %2971 = vmatprep.subr.mxu0 0.0
  %2972 = vmatpush1.msra.mxu0 0.0
  %2973 = vmatprep.subr.mxu0 0.0
  %2974 = vmatpush1.msra.mxu0 0.0
  %2975 = vmatprep.subr.mxu0 0.0
  %2976 = vmatpush1.msra.mxu0 0.0
  %2977 = vmatprep.subr.mxu0 0.0
  %2978 = vmatpush1.msra.mxu0 0.0
  %2979 = vmatprep.subr.mxu0 0.0
  %2980 = vmatpush1.msra.mxu0 0.0
  %2981 = vmatprep.subr.mxu0 0.0
  %2982 = vmatpush1.msra.mxu0 0.0
  %2983 = vmatprep.subr.mxu0 0.0
  %2984 = vmatpush1.msra.mxu0 0.0
  %2985 = vmatprep.subr.mxu0 0.0
  %2986 = vmatpush1.msra.mxu0 0.0
  %2987 = vmatprep.subr.mxu0 0.0
  %2988 = vmatpush1.msra.mxu0 0.0
  %2989 = vmatprep.subr.mxu0 0.0
  %2990 = vmatpush1.msra.mxu0 0.0
  %2991 = vmatprep.subr.mxu0 0.0
  %2992 = vmatpush1.msra.mxu0 0.0
  %2993 = vmatprep.subr.mxu0 0.0
  %2994 = vmatpush1.msra.mxu0 0.0
  %2995 = vmatprep.subr.mxu0 0.0
  %2996 = vmatpush1.msra.mxu0 %v2963
  %2997 = vmatprep.subr.mxu0 0.0
  %2998 = vmatpush2.msra.mxu0 0.0
  %2999 = vmatprep.subr.mxu0 0.0
  %3000 = vmatpush2.msra.mxu0 0.0
  %3001 = vmatprep.subr.mxu0 0.0
  %3002 = vmatpush2.msra.mxu0 0.0
  %3003 = vmatprep.subr.mxu0 0.0
  %3004 = vmatpush2.msra.mxu0 0.0
  %3005 = vmatprep.subr.mxu0 0.0
  %3006 = vmatpush2.msra.mxu0 0.0
  %3007 = vmatprep.subr.mxu0 0.0
  %3008 = vmatpush2.msra.mxu0 0.0
  %3009 = vmatprep.subr.mxu0 0.0
  %3010 = vmatpush2.msra.mxu0 0.0
  %3011 = vmatprep.subr.mxu0 0.0
  %3012 = vmatpush2.msra.mxu0 0.0
  %3013 = vmatprep.subr.mxu0 0.0
  %3014 = vmatpush2.msra.mxu0 0.0
  %3015 = vmatprep.subr.mxu0 0.0
  %3016 = vmatpush2.msra.mxu0 0.0
  %3017 = vmatprep.subr.mxu0 0.0
  %3018 = vmatpush2.msra.mxu0 0.0
  %3019 = vmatprep.subr.mxu0 0.0
  %3020 = vmatpush2.msra.mxu0 0.0
  %3021 = vmatprep.subr.mxu0 0.0
  %3022 = vmatpush2.msra.mxu0 0.0
  %3023 = vmatprep.subr.mxu0 0.0
  %3024 = vmatpush2.msra.mxu0 0.0
  %3025 = vmatprep.subr.mxu0 0.0
  %3026 = vmatpush2.msra.mxu0 0.0
  %3027 = vmatprep.subr.mxu0 0.0
  %3028 = vmatpush2.msra.mxu0 0.0
  %3029 = vmatprep.mubr.f32.mxu0 0.0
  %3030 = vmatmul.mubr.f32.gmra.mxu0 %v170
  %v3031 = vpop.f32.mrf.mxu0
  %v3032 = vadd.f32 0.0, %v3031
  %v3033 = vpop.f32.mrf.mxu0
  %3034 = vmatprep.mubr.f32.mxu0 0.0
  %3035 = vmatmul.mubr.f32.gmra.mxu0 %v173
  %v3036 = vpop.f32.mrf.mxu0
  %v3037 = vadd.f32 0.0, %v3036
  %v3038 = vpop.f32.mrf.mxu0
  %3039 = vmatprep.mubr.f32.mxu0 0.0
  %3040 = vmatmul.mubr.f32.gmra.mxu0 %v176
  %v3041 = vpop.f32.mrf.mxu0
  %v3042 = vadd.f32 0.0, %v3041
  %v3043 = vpop.f32.mrf.mxu0
  %3044 = vmatprep.mubr.f32.mxu0 0.0
  %3045 = vmatmul.mubr.f32.gmra.mxu0 %v179
  %v3046 = vpop.f32.mrf.mxu0
  %v3047 = vadd.f32 0.0, %v3046
  %v3048 = vpop.f32.mrf.mxu0
  %3049 = vdwg.mxu0
  %v3051 = vsel %vm181, %v321, 0
  %3053 = vmatprep.subr.mxu0 0.0
  %3054 = vmatpush1.msra.mxu0 0.0
  %3055 = vmatprep.subr.mxu0 0.0
  %3056 = vmatpush1.msra.mxu0 0.0
  %3057 = vmatprep.subr.mxu0 0.0
  %3058 = vmatpush1.msra.mxu0 0.0
  %3059 = vmatprep.subr.mxu0 0.0
  %3060 = vmatpush1.msra.mxu0 0.0
  %3061 = vmatprep.subr.mxu0 0.0
  %3062 = vmatpush1.msra.mxu0 0.0
  %3063 = vmatprep.subr.mxu0 0.0
  %3064 = vmatpush1.msra.mxu0 0.0
  %3065 = vmatprep.subr.mxu0 0.0
  %3066 = vmatpush1.msra.mxu0 0.0
  %3067 = vmatprep.subr.mxu0 0.0
  %3068 = vmatpush1.msra.mxu0 0.0
  %3069 = vmatprep.subr.mxu0 0.0
  %3070 = vmatpush1.msra.mxu0 0.0
  %3071 = vmatprep.subr.mxu0 0.0
  %3072 = vmatpush1.msra.mxu0 0.0
  %3073 = vmatprep.subr.mxu0 0.0
  %3074 = vmatpush1.msra.mxu0 0.0
  %3075 = vmatprep.subr.mxu0 0.0
  %3076 = vmatpush1.msra.mxu0 0.0
  %3077 = vmatprep.subr.mxu0 0.0
  %3078 = vmatpush1.msra.mxu0 0.0
  %3079 = vmatprep.subr.mxu0 0.0
  %3080 = vmatpush1.msra.mxu0 0.0
  %3081 = vmatprep.subr.mxu0 0.0
  %3082 = vmatpush1.msra.mxu0 0.0
  %3083 = vmatprep.subr.mxu0 0.0
  %3084 = vmatpush1.msra.mxu0 %v3051
  %3085 = vmatprep.subr.mxu0 0.0
  %3086 = vmatpush2.msra.mxu0 0.0
  %3087 = vmatprep.subr.mxu0 0.0
  %3088 = vmatpush2.msra.mxu0 0.0
  %3089 = vmatprep.subr.mxu0 0.0
  %3090 = vmatpush2.msra.mxu0 0.0
  %3091 = vmatprep.subr.mxu0 0.0
  %3092 = vmatpush2.msra.mxu0 0.0
  %3093 = vmatprep.subr.mxu0 0.0
  %3094 = vmatpush2.msra.mxu0 0.0
  %3095 = vmatprep.subr.mxu0 0.0
  %3096 = vmatpush2.msra.mxu0 0.0
  %3097 = vmatprep.subr.mxu0 0.0
  %3098 = vmatpush2.msra.mxu0 0.0
  %3099 = vmatprep.subr.mxu0 0.0
  %3100 = vmatpush2.msra.mxu0 0.0
  %3101 = vmatprep.subr.mxu0 0.0
  %3102 = vmatpush2.msra.mxu0 0.0
  %3103 = vmatprep.subr.mxu0 0.0
  %3104 = vmatpush2.msra.mxu0 0.0
  %3105 = vmatprep.subr.mxu0 0.0
  %3106 = vmatpush2.msra.mxu0 0.0
  %3107 = vmatprep.subr.mxu0 0.0
  %3108 = vmatpush2.msra.mxu0 0.0
  %3109 = vmatprep.subr.mxu0 0.0
  %3110 = vmatpush2.msra.mxu0 0.0
  %3111 = vmatprep.subr.mxu0 0.0
  %3112 = vmatpush2.msra.mxu0 0.0
  %3113 = vmatprep.subr.mxu0 0.0
  %3114 = vmatpush2.msra.mxu0 0.0
  %3115 = vmatprep.subr.mxu0 0.0
  %3116 = vmatpush2.msra.mxu0 0.0
  %3117 = vmatprep.mubr.f32.mxu0 0.0
  %3118 = vmatmul.mubr.f32.gmra.mxu0 %v170
  %v3119 = vpop.f32.mrf.mxu0
  %v3120 = vadd.f32 0.0, %v3119
  %v3121 = vpop.f32.mrf.mxu0
  %3122 = vmatprep.mubr.f32.mxu0 0.0
  %3123 = vmatmul.mubr.f32.gmra.mxu0 %v173
  %v3124 = vpop.f32.mrf.mxu0
  %v3125 = vadd.f32 0.0, %v3124
  %v3126 = vpop.f32.mrf.mxu0
  %3127 = vmatprep.mubr.f32.mxu0 0.0
  %3128 = vmatmul.mubr.f32.gmra.mxu0 %v176
  %v3129 = vpop.f32.mrf.mxu0
  %v3130 = vadd.f32 0.0, %v3129
  %v3131 = vpop.f32.mrf.mxu0
  %3132 = vmatprep.mubr.f32.mxu0 0.0
  %3133 = vmatmul.mubr.f32.gmra.mxu0 %v179
  %v3134 = vpop.f32.mrf.mxu0
  %v3135 = vadd.f32 0.0, %v3134
  %v3136 = vpop.f32.mrf.mxu0
  %3137 = vdwg.mxu0
  %vm3138 = vcmp.le.f32.partialorder %v392, 0.16
  %vm3139 = vcmp.le.f32.partialorder %v397, 0.16
  %vm3140 = vcmp.le.f32.partialorder %v402, 0.16
  %vm3141 = vcmp.le.f32.partialorder %v407, 0.16
  %vm3142 = vcmp.le.f32.partialorder %v480, 0.16
  %vm3143 = vcmp.le.f32.partialorder %v485, 0.16
  %vm3144 = vcmp.le.f32.partialorder %v490, 0.16
  %vm3145 = vcmp.le.f32.partialorder %v495, 0.16
  %vm3146 = vcmp.le.f32.partialorder %v568, 0.16
  %vm3147 = vcmp.le.f32.partialorder %v573, 0.16
  %vm3148 = vcmp.le.f32.partialorder %v578, 0.16
  %vm3149 = vcmp.le.f32.partialorder %v583, 0.16
  %vm3150 = vcmp.le.f32.partialorder %v656, 0.16
  %vm3151 = vcmp.le.f32.partialorder %v661, 0.16
  %vm3152 = vcmp.le.f32.partialorder %v666, 0.16
  %vm3153 = vcmp.le.f32.partialorder %v671, 0.16
  %vm3154 = vcmp.le.f32.partialorder %v744, 0.16
  %vm3155 = vcmp.le.f32.partialorder %v749, 0.16
  %vm3156 = vcmp.le.f32.partialorder %v754, 0.16
  %vm3157 = vcmp.le.f32.partialorder %v759, 0.16
  %vm3158 = vcmp.le.f32.partialorder %v832, 0.16
  %vm3159 = vcmp.le.f32.partialorder %v837, 0.16
  %vm3160 = vcmp.le.f32.partialorder %v842, 0.16
  %vm3161 = vcmp.le.f32.partialorder %v847, 0.16
  %vm3162 = vcmp.le.f32.partialorder %v920, 0.16
  %vm3163 = vcmp.le.f32.partialorder %v925, 0.16
  %vm3164 = vcmp.le.f32.partialorder %v930, 0.16
  %vm3165 = vcmp.le.f32.partialorder %v935, 0.16
  %vm3166 = vcmp.le.f32.partialorder %v1008, 0.16
  %vm3167 = vcmp.le.f32.partialorder %v1013, 0.16
  %vm3168 = vcmp.le.f32.partialorder %v1018, 0.16
  %vm3169 = vcmp.le.f32.partialorder %v1023, 0.16
  %vm3170 = vcmp.le.f32.partialorder %v1096, 0.16
  %vm3171 = vcmp.le.f32.partialorder %v1101, 0.16
  %vm3172 = vcmp.le.f32.partialorder %v1106, 0.16
  %vm3173 = vcmp.le.f32.partialorder %v1111, 0.16
  %vm3174 = vcmp.le.f32.partialorder %v1184, 0.16
  %vm3175 = vcmp.le.f32.partialorder %v1189, 0.16
  %vm3176 = vcmp.le.f32.partialorder %v1194, 0.16
  %vm3177 = vcmp.le.f32.partialorder %v1199, 0.16
  %vm3178 = vcmp.le.f32.partialorder %v1272, 0.16
  %vm3179 = vcmp.le.f32.partialorder %v1277, 0.16
  %vm3180 = vcmp.le.f32.partialorder %v1282, 0.16
  %vm3181 = vcmp.le.f32.partialorder %v1287, 0.16
  %vm3182 = vcmp.le.f32.partialorder %v1360, 0.16
  %vm3183 = vcmp.le.f32.partialorder %v1365, 0.16
  %vm3184 = vcmp.le.f32.partialorder %v1370, 0.16
  %vm3185 = vcmp.le.f32.partialorder %v1375, 0.16
  %vm3186 = vcmp.le.f32.partialorder %v1448, 0.16
  %vm3187 = vcmp.le.f32.partialorder %v1453, 0.16
  %vm3188 = vcmp.le.f32.partialorder %v1458, 0.16
  %vm3189 = vcmp.le.f32.partialorder %v1463, 0.16
  %vm3190 = vcmp.le.f32.partialorder %v1536, 0.16
  %vm3191 = vcmp.le.f32.partialorder %v1541, 0.16
  %vm3192 = vcmp.le.f32.partialorder %v1546, 0.16
  %vm3193 = vcmp.le.f32.partialorder %v1551, 0.16
  %vm3194 = vcmp.le.f32.partialorder %v1624, 0.16
  %vm3195 = vcmp.le.f32.partialorder %v1629, 0.16
  %vm3196 = vcmp.le.f32.partialorder %v1634, 0.16
  %vm3197 = vcmp.le.f32.partialorder %v1639, 0.16
  %vm3198 = vcmp.le.f32.partialorder %v1712, 0.16
  %vm3199 = vcmp.le.f32.partialorder %v1717, 0.16
  %vm3200 = vcmp.le.f32.partialorder %v1722, 0.16
  %vm3201 = vcmp.le.f32.partialorder %v1727, 0.16
  %vm3202 = vcmp.le.f32.partialorder %v1800, 0.16
  %vm3203 = vcmp.le.f32.partialorder %v1805, 0.16
  %vm3204 = vcmp.le.f32.partialorder %v1810, 0.16
  %vm3205 = vcmp.le.f32.partialorder %v1815, 0.16
  %vm3206 = vcmp.le.f32.partialorder %v1888, 0.16
  %vm3207 = vcmp.le.f32.partialorder %v1893, 0.16
  %vm3208 = vcmp.le.f32.partialorder %v1898, 0.16
  %vm3209 = vcmp.le.f32.partialorder %v1903, 0.16
  %vm3210 = vcmp.le.f32.partialorder %v1976, 0.16
  %vm3211 = vcmp.le.f32.partialorder %v1981, 0.16
  %vm3212 = vcmp.le.f32.partialorder %v1986, 0.16
  %vm3213 = vcmp.le.f32.partialorder %v1991, 0.16
  %vm3214 = vcmp.le.f32.partialorder %v2064, 0.16
  %vm3215 = vcmp.le.f32.partialorder %v2069, 0.16
  %vm3216 = vcmp.le.f32.partialorder %v2074, 0.16
  %vm3217 = vcmp.le.f32.partialorder %v2079, 0.16
  %vm3218 = vcmp.le.f32.partialorder %v2152, 0.16
  %vm3219 = vcmp.le.f32.partialorder %v2157, 0.16
  %vm3220 = vcmp.le.f32.partialorder %v2162, 0.16
  %vm3221 = vcmp.le.f32.partialorder %v2167, 0.16
  %vm3222 = vcmp.le.f32.partialorder %v2240, 0.16
  %vm3223 = vcmp.le.f32.partialorder %v2245, 0.16
  %vm3224 = vcmp.le.f32.partialorder %v2250, 0.16
  %vm3225 = vcmp.le.f32.partialorder %v2255, 0.16
  %vm3226 = vcmp.le.f32.partialorder %v2328, 0.16
  %vm3227 = vcmp.le.f32.partialorder %v2333, 0.16
  %vm3228 = vcmp.le.f32.partialorder %v2338, 0.16
  %vm3229 = vcmp.le.f32.partialorder %v2343, 0.16
  %vm3230 = vcmp.le.f32.partialorder %v2416, 0.16
  %vm3231 = vcmp.le.f32.partialorder %v2421, 0.16
  %vm3232 = vcmp.le.f32.partialorder %v2426, 0.16
  %vm3233 = vcmp.le.f32.partialorder %v2431, 0.16
  %vm3234 = vcmp.le.f32.partialorder %v2504, 0.16
  %vm3235 = vcmp.le.f32.partialorder %v2509, 0.16
  %vm3236 = vcmp.le.f32.partialorder %v2514, 0.16
  %vm3237 = vcmp.le.f32.partialorder %v2519, 0.16
  %vm3238 = vcmp.le.f32.partialorder %v2592, 0.16
  %vm3239 = vcmp.le.f32.partialorder %v2597, 0.16
  %vm3240 = vcmp.le.f32.partialorder %v2602, 0.16
  %vm3241 = vcmp.le.f32.partialorder %v2607, 0.16
  %vm3242 = vcmp.le.f32.partialorder %v2680, 0.16
  %vm3243 = vcmp.le.f32.partialorder %v2685, 0.16
  %vm3244 = vcmp.le.f32.partialorder %v2690, 0.16
  %vm3245 = vcmp.le.f32.partialorder %v2695, 0.16
  %vm3246 = vcmp.le.f32.partialorder %v2768, 0.16
  %vm3247 = vcmp.le.f32.partialorder %v2773, 0.16
  %vm3248 = vcmp.le.f32.partialorder %v2778, 0.16
  %vm3249 = vcmp.le.f32.partialorder %v2783, 0.16
  %vm3250 = vcmp.le.f32.partialorder %v2856, 0.16
  %vm3251 = vcmp.le.f32.partialorder %v2861, 0.16
  %vm3252 = vcmp.le.f32.partialorder %v2866, 0.16
  %vm3253 = vcmp.le.f32.partialorder %v2871, 0.16
  %vm3254 = vcmp.le.f32.partialorder %v2944, 0.16
  %vm3255 = vcmp.le.f32.partialorder %v2949, 0.16
  %vm3256 = vcmp.le.f32.partialorder %v2954, 0.16
  %vm3257 = vcmp.le.f32.partialorder %v2959, 0.16
  %vm3258 = vcmp.le.f32.partialorder %v3032, 0.16
  %vm3259 = vcmp.le.f32.partialorder %v3037, 0.16
  %vm3260 = vcmp.le.f32.partialorder %v3042, 0.16
  %vm3261 = vcmp.le.f32.partialorder %v3047, 0.16
  %vm3262 = vcmp.le.f32.partialorder %v3120, 0.16
  %vm3263 = vcmp.le.f32.partialorder %v3125, 0.16
  %vm3264 = vcmp.le.f32.partialorder %v3130, 0.16
  %vm3265 = vcmp.le.f32.partialorder %v3135, 0.16
  %v3270 = vcombine.high %v129, %v129
  %v3272 = vunpack.c.l.s4 1966171168
  %v3273 = vunpack.c.0.s8 %v3272
  %v3274 = vlaneseq
  %v3275 = vshrl.u32 %v3274, 7
  %v3276 = vsub.s32 %v3273, %v3275
  %v3277 = vrot.slane %v129, %v3276
  %v3279 = vunpack.c.l.s4 1966171168
  %v3280 = vunpack.c.0.s8 %v3279
  %v3281 = vlaneseq
  %v3282 = vshrl.u32 %v3281, 7
  %v3283 = vsub.s32 %v3280, %v3282
  %v3284 = vrot.slane %v3270, %v3283
  %v3285 = vcombine.high %v3277, %v3277
  %v3286 = vcombine.high %v3284, %v3284
  %v3288 = vunpack.c.l.s4 1966171168
  %v3289 = vunpack.c.0.s8 %v3288
  %v3290 = vlaneseq
  %v3291 = vshrl.u32 %v3290, 7
  %v3292 = vsub.s32 %v3289, %v3291
  %v3293 = vrot.slane %v3277, %v3292
  %v3295 = vunpack.c.l.s4 1966171168
  %v3296 = vunpack.c.0.s8 %v3295
  %v3297 = vlaneseq
  %v3298 = vshrl.u32 %v3297, 7
  %v3299 = vsub.s32 %v3296, %v3298
  %v3300 = vrot.slane %v3284, %v3299
  %v3302 = vunpack.c.l.s4 1966171168
  %v3303 = vunpack.c.0.s8 %v3302
  %v3304 = vlaneseq
  %v3305 = vshrl.u32 %v3304, 7
  %v3306 = vsub.s32 %v3303, %v3305
  %v3307 = vrot.slane %v3285, %v3306
  %v3309 = vunpack.c.l.s4 1966171168
  %v3310 = vunpack.c.0.s8 %v3309
  %v3311 = vlaneseq
  %v3312 = vshrl.u32 %v3311, 7
  %v3313 = vsub.s32 %v3310, %v3312
  %v3314 = vrot.slane %v3286, %v3313
  %v3315 = vcombine.high %v3293, %v3293
  %v3316 = vcombine.high %v3300, %v3300
  %v3317 = vcombine.high %v3307, %v3307
  %v3318 = vcombine.high %v3314, %v3314
  %v3319 = vcombine.high %v134, %v134
  %v3321 = vunpack.c.l.s4 1966171168
  %v3322 = vunpack.c.0.s8 %v3321
  %v3323 = vlaneseq
  %v3324 = vshrl.u32 %v3323, 7
  %v3325 = vsub.s32 %v3322, %v3324
  %v3326 = vrot.slane %v134, %v3325
  %v3328 = vunpack.c.l.s4 1966171168
  %v3329 = vunpack.c.0.s8 %v3328
  %v3330 = vlaneseq
  %v3331 = vshrl.u32 %v3330, 7
  %v3332 = vsub.s32 %v3329, %v3331
  %v3333 = vrot.slane %v3319, %v3332
  %v3334 = vcombine.high %v3326, %v3326
  %v3335 = vcombine.high %v3333, %v3333
  %v3337 = vunpack.c.l.s4 1966171168
  %v3338 = vunpack.c.0.s8 %v3337
  %v3339 = vlaneseq
  %v3340 = vshrl.u32 %v3339, 7
  %v3341 = vsub.s32 %v3338, %v3340
  %v3342 = vrot.slane %v3326, %v3341
  %v3344 = vunpack.c.l.s4 1966171168
  %v3345 = vunpack.c.0.s8 %v3344
  %v3346 = vlaneseq
  %v3347 = vshrl.u32 %v3346, 7
  %v3348 = vsub.s32 %v3345, %v3347
  %v3349 = vrot.slane %v3333, %v3348
  %v3351 = vunpack.c.l.s4 1966171168
  %v3352 = vunpack.c.0.s8 %v3351
  %v3353 = vlaneseq
  %v3354 = vshrl.u32 %v3353, 7
  %v3355 = vsub.s32 %v3352, %v3354
  %v3356 = vrot.slane %v3334, %v3355
  %v3358 = vunpack.c.l.s4 1966171168
  %v3359 = vunpack.c.0.s8 %v3358
  %v3360 = vlaneseq
  %v3361 = vshrl.u32 %v3360, 7
  %v3362 = vsub.s32 %v3359, %v3361
  %v3363 = vrot.slane %v3335, %v3362
  %v3364 = vcombine.high %v3342, %v3342
  %v3365 = vcombine.high %v3349, %v3349
  %v3366 = vcombine.high %v3356, %v3356
  %v3367 = vcombine.high %v3363, %v3363
  %v3368 = vcombine.high %v139, %v139
  %v3370 = vunpack.c.l.s4 1966171168
  %v3371 = vunpack.c.0.s8 %v3370
  %v3372 = vlaneseq
  %v3373 = vshrl.u32 %v3372, 7
  %v3374 = vsub.s32 %v3371, %v3373
  %v3375 = vrot.slane %v139, %v3374
  %v3377 = vunpack.c.l.s4 1966171168
  %v3378 = vunpack.c.0.s8 %v3377
  %v3379 = vlaneseq
  %v3380 = vshrl.u32 %v3379, 7
  %v3381 = vsub.s32 %v3378, %v3380
  %v3382 = vrot.slane %v3368, %v3381
  %v3383 = vcombine.high %v3375, %v3375
  %v3384 = vcombine.high %v3382, %v3382
  %v3386 = vunpack.c.l.s4 1966171168
  %v3387 = vunpack.c.0.s8 %v3386
  %v3388 = vlaneseq
  %v3389 = vshrl.u32 %v3388, 7
  %v3390 = vsub.s32 %v3387, %v3389
  %v3391 = vrot.slane %v3375, %v3390
  %v3393 = vunpack.c.l.s4 1966171168
  %v3394 = vunpack.c.0.s8 %v3393
  %v3395 = vlaneseq
  %v3396 = vshrl.u32 %v3395, 7
  %v3397 = vsub.s32 %v3394, %v3396
  %v3398 = vrot.slane %v3382, %v3397
  %v3400 = vunpack.c.l.s4 1966171168
  %v3401 = vunpack.c.0.s8 %v3400
  %v3402 = vlaneseq
  %v3403 = vshrl.u32 %v3402, 7
  %v3404 = vsub.s32 %v3401, %v3403
  %v3405 = vrot.slane %v3383, %v3404
  %v3407 = vunpack.c.l.s4 1966171168
  %v3408 = vunpack.c.0.s8 %v3407
  %v3409 = vlaneseq
  %v3410 = vshrl.u32 %v3409, 7
  %v3411 = vsub.s32 %v3408, %v3410
  %v3412 = vrot.slane %v3384, %v3411
  %v3413 = vcombine.high %v3391, %v3391
  %v3414 = vcombine.high %v3398, %v3398
  %v3415 = vcombine.high %v3405, %v3405
  %v3416 = vcombine.high %v3412, %v3412
  %v3417 = vcombine.high %v144, %v144
  %v3419 = vunpack.c.l.s4 1966171168
  %v3420 = vunpack.c.0.s8 %v3419
  %v3421 = vlaneseq
  %v3422 = vshrl.u32 %v3421, 7
  %v3423 = vsub.s32 %v3420, %v3422
  %v3424 = vrot.slane %v144, %v3423
  %v3426 = vunpack.c.l.s4 1966171168
  %v3427 = vunpack.c.0.s8 %v3426
  %v3428 = vlaneseq
  %v3429 = vshrl.u32 %v3428, 7
  %v3430 = vsub.s32 %v3427, %v3429
  %v3431 = vrot.slane %v3417, %v3430
  %v3432 = vcombine.high %v3424, %v3424
  %v3433 = vcombine.high %v3431, %v3431
  %v3435 = vunpack.c.l.s4 1966171168
  %v3436 = vunpack.c.0.s8 %v3435
  %v3437 = vlaneseq
  %v3438 = vshrl.u32 %v3437, 7
  %v3439 = vsub.s32 %v3436, %v3438
  %v3440 = vrot.slane %v3424, %v3439
  %v3442 = vunpack.c.l.s4 1966171168
  %v3443 = vunpack.c.0.s8 %v3442
  %v3444 = vlaneseq
  %v3445 = vshrl.u32 %v3444, 7
  %v3446 = vsub.s32 %v3443, %v3445
  %v3447 = vrot.slane %v3431, %v3446
  %v3449 = vunpack.c.l.s4 1966171168
  %v3450 = vunpack.c.0.s8 %v3449
  %v3451 = vlaneseq
  %v3452 = vshrl.u32 %v3451, 7
  %v3453 = vsub.s32 %v3450, %v3452
  %v3454 = vrot.slane %v3432, %v3453
  %v3456 = vunpack.c.l.s4 1966171168
  %v3457 = vunpack.c.0.s8 %v3456
  %v3458 = vlaneseq
  %v3459 = vshrl.u32 %v3458, 7
  %v3460 = vsub.s32 %v3457, %v3459
  %v3461 = vrot.slane %v3433, %v3460
  %v3462 = vcombine.high %v3440, %v3440
  %v3463 = vcombine.high %v3447, %v3447
  %v3464 = vcombine.high %v3454, %v3454
  %v3465 = vcombine.high %v3461, %v3461
  %v3466 = vlaneseq
  %v3467 = vshrl.u32 %v3466, 7
  %v3468 = vsub.s32 0, %v3467
  %v3469 = vrot.slane %v3293, %v3468
  %v3470 = vlaneseq
  %v3471 = vshrl.u32 %v3470, 7
  %v3472 = vsub.s32 0, %v3471
  %v3473 = vrot.slane %v3307, %v3472
  %v3474 = vlaneseq
  %v3475 = vshrl.u32 %v3474, 7
  %v3476 = vsub.s32 0, %v3475
  %v3477 = vrot.slane %v3315, %v3476
  %v3478 = vlaneseq
  %v3479 = vshrl.u32 %v3478, 7
  %v3480 = vsub.s32 0, %v3479
  %v3481 = vrot.slane %v3317, %v3480
  %v3482 = vlaneseq
  %v3483 = vshrl.u32 %v3482, 7
  %v3484 = vsub.s32 0, %v3483
  %v3485 = vrot.slane %v3300, %v3484
  %v3486 = vlaneseq
  %v3487 = vshrl.u32 %v3486, 7
  %v3488 = vsub.s32 0, %v3487
  %v3489 = vrot.slane %v3314, %v3488
  %v3490 = vlaneseq
  %v3491 = vshrl.u32 %v3490, 7
  %v3492 = vsub.s32 0, %v3491
  %v3493 = vrot.slane %v3316, %v3492
  %v3494 = vlaneseq
  %v3495 = vshrl.u32 %v3494, 7
  %v3496 = vsub.s32 0, %v3495
  %v3497 = vrot.slane %v3318, %v3496
  %v3498 = vlaneseq
  %v3499 = vshrl.u32 %v3498, 7
  %v3500 = vsub.s32 0, %v3499
  %v3501 = vrot.slane %v3342, %v3500
  %v3502 = vlaneseq
  %v3503 = vshrl.u32 %v3502, 7
  %v3504 = vsub.s32 0, %v3503
  %v3505 = vrot.slane %v3356, %v3504
  %v3506 = vlaneseq
  %v3507 = vshrl.u32 %v3506, 7
  %v3508 = vsub.s32 0, %v3507
  %v3509 = vrot.slane %v3364, %v3508
  %v3510 = vlaneseq
  %v3511 = vshrl.u32 %v3510, 7
  %v3512 = vsub.s32 0, %v3511
  %v3513 = vrot.slane %v3366, %v3512
  %v3514 = vlaneseq
  %v3515 = vshrl.u32 %v3514, 7
  %v3516 = vsub.s32 0, %v3515
  %v3517 = vrot.slane %v3349, %v3516
  %v3518 = vlaneseq
  %v3519 = vshrl.u32 %v3518, 7
  %v3520 = vsub.s32 0, %v3519
  %v3521 = vrot.slane %v3363, %v3520
  %v3522 = vlaneseq
  %v3523 = vshrl.u32 %v3522, 7
  %v3524 = vsub.s32 0, %v3523
  %v3525 = vrot.slane %v3365, %v3524
  %v3526 = vlaneseq
  %v3527 = vshrl.u32 %v3526, 7
  %v3528 = vsub.s32 0, %v3527
  %v3529 = vrot.slane %v3367, %v3528
  %v3530 = vlaneseq
  %v3531 = vshrl.u32 %v3530, 7
  %v3532 = vsub.s32 0, %v3531
  %v3533 = vrot.slane %v3391, %v3532
  %v3534 = vlaneseq
  %v3535 = vshrl.u32 %v3534, 7
  %v3536 = vsub.s32 0, %v3535
  %v3537 = vrot.slane %v3405, %v3536
  %v3538 = vlaneseq
  %v3539 = vshrl.u32 %v3538, 7
  %v3540 = vsub.s32 0, %v3539
  %v3541 = vrot.slane %v3413, %v3540
  %v3542 = vlaneseq
  %v3543 = vshrl.u32 %v3542, 7
  %v3544 = vsub.s32 0, %v3543
  %v3545 = vrot.slane %v3415, %v3544
  %v3546 = vlaneseq
  %v3547 = vshrl.u32 %v3546, 7
  %v3548 = vsub.s32 0, %v3547
  %v3549 = vrot.slane %v3398, %v3548
  %v3550 = vlaneseq
  %v3551 = vshrl.u32 %v3550, 7
  %v3552 = vsub.s32 0, %v3551
  %v3553 = vrot.slane %v3412, %v3552
  %v3554 = vlaneseq
  %v3555 = vshrl.u32 %v3554, 7
  %v3556 = vsub.s32 0, %v3555
  %v3557 = vrot.slane %v3414, %v3556
  %v3558 = vlaneseq
  %v3559 = vshrl.u32 %v3558, 7
  %v3560 = vsub.s32 0, %v3559
  %v3561 = vrot.slane %v3416, %v3560
  %v3562 = vlaneseq
  %v3563 = vshrl.u32 %v3562, 7
  %v3564 = vsub.s32 0, %v3563
  %v3565 = vrot.slane %v3440, %v3564
  %v3566 = vlaneseq
  %v3567 = vshrl.u32 %v3566, 7
  %v3568 = vsub.s32 0, %v3567
  %v3569 = vrot.slane %v3454, %v3568
  %v3570 = vlaneseq
  %v3571 = vshrl.u32 %v3570, 7
  %v3572 = vsub.s32 0, %v3571
  %v3573 = vrot.slane %v3462, %v3572
  %v3574 = vlaneseq
  %v3575 = vshrl.u32 %v3574, 7
  %v3576 = vsub.s32 0, %v3575
  %v3577 = vrot.slane %v3464, %v3576
  %v3578 = vlaneseq
  %v3579 = vshrl.u32 %v3578, 7
  %v3580 = vsub.s32 0, %v3579
  %v3581 = vrot.slane %v3447, %v3580
  %v3582 = vlaneseq
  %v3583 = vshrl.u32 %v3582, 7
  %v3584 = vsub.s32 0, %v3583
  %v3585 = vrot.slane %v3461, %v3584
  %v3586 = vlaneseq
  %v3587 = vshrl.u32 %v3586, 7
  %v3588 = vsub.s32 0, %v3587
  %v3589 = vrot.slane %v3463, %v3588
  %v3590 = vlaneseq
  %v3591 = vshrl.u32 %v3590, 7
  %v3592 = vsub.s32 0, %v3591
  %v3593 = vrot.slane %v3465, %v3592
  %v3626 = vsub.f32 %v3469, %v252
  %v3627 = vsub.f32 %v3469, %v257
  %v3628 = vsub.f32 %v3469, %v262
  %v3629 = vsub.f32 %v3469, %v267
  %v3630 = vsub.f32 %v3473, %v252
  %v3631 = vsub.f32 %v3473, %v257
  %v3632 = vsub.f32 %v3473, %v262
  %v3633 = vsub.f32 %v3473, %v267
  %v3634 = vsub.f32 %v3477, %v252
  %v3635 = vsub.f32 %v3477, %v257
  %v3636 = vsub.f32 %v3477, %v262
  %v3637 = vsub.f32 %v3477, %v267
  %v3638 = vsub.f32 %v3481, %v252
  %v3639 = vsub.f32 %v3481, %v257
  %v3640 = vsub.f32 %v3481, %v262
  %v3641 = vsub.f32 %v3481, %v267
  %v3642 = vsub.f32 %v3485, %v252
  %v3643 = vsub.f32 %v3485, %v257
  %v3644 = vsub.f32 %v3485, %v262
  %v3645 = vsub.f32 %v3485, %v267
  %v3646 = vsub.f32 %v3489, %v252
  %v3647 = vsub.f32 %v3489, %v257
  %v3648 = vsub.f32 %v3489, %v262
  %v3649 = vsub.f32 %v3489, %v267
  %v3650 = vsub.f32 %v3493, %v252
  %v3651 = vsub.f32 %v3493, %v257
  %v3652 = vsub.f32 %v3493, %v262
  %v3653 = vsub.f32 %v3493, %v267
  %v3654 = vsub.f32 %v3497, %v252
  %v3655 = vsub.f32 %v3497, %v257
  %v3656 = vsub.f32 %v3497, %v262
  %v3657 = vsub.f32 %v3497, %v267
  %v3658 = vsub.f32 %v3501, %v252
  %v3659 = vsub.f32 %v3501, %v257
  %v3660 = vsub.f32 %v3501, %v262
  %v3661 = vsub.f32 %v3501, %v267
  %v3662 = vsub.f32 %v3505, %v252
  %v3663 = vsub.f32 %v3505, %v257
  %v3664 = vsub.f32 %v3505, %v262
  %v3665 = vsub.f32 %v3505, %v267
  %v3666 = vsub.f32 %v3509, %v252
  %v3667 = vsub.f32 %v3509, %v257
  %v3668 = vsub.f32 %v3509, %v262
  %v3669 = vsub.f32 %v3509, %v267
  %v3670 = vsub.f32 %v3513, %v252
  %v3671 = vsub.f32 %v3513, %v257
  %v3672 = vsub.f32 %v3513, %v262
  %v3673 = vsub.f32 %v3513, %v267
  %v3674 = vsub.f32 %v3517, %v252
  %v3675 = vsub.f32 %v3517, %v257
  %v3676 = vsub.f32 %v3517, %v262
  %v3677 = vsub.f32 %v3517, %v267
  %v3678 = vsub.f32 %v3521, %v252
  %v3679 = vsub.f32 %v3521, %v257
  %v3680 = vsub.f32 %v3521, %v262
  %v3681 = vsub.f32 %v3521, %v267
  %v3682 = vsub.f32 %v3525, %v252
  %v3683 = vsub.f32 %v3525, %v257
  %v3684 = vsub.f32 %v3525, %v262
  %v3685 = vsub.f32 %v3525, %v267
  %v3686 = vsub.f32 %v3529, %v252
  %v3687 = vsub.f32 %v3529, %v257
  %v3688 = vsub.f32 %v3529, %v262
  %v3689 = vsub.f32 %v3529, %v267
  %v3690 = vsub.f32 %v3533, %v272
  %v3691 = vsub.f32 %v3533, %v277
  %v3692 = vsub.f32 %v3533, %v282
  %v3693 = vsub.f32 %v3533, %v287
  %v3694 = vsub.f32 %v3537, %v272
  %v3695 = vsub.f32 %v3537, %v277
  %v3696 = vsub.f32 %v3537, %v282
  %v3697 = vsub.f32 %v3537, %v287
  %v3698 = vsub.f32 %v3541, %v272
  %v3699 = vsub.f32 %v3541, %v277
  %v3700 = vsub.f32 %v3541, %v282
  %v3701 = vsub.f32 %v3541, %v287
  %v3702 = vsub.f32 %v3545, %v272
  %v3703 = vsub.f32 %v3545, %v277
  %v3704 = vsub.f32 %v3545, %v282
  %v3705 = vsub.f32 %v3545, %v287
  %v3706 = vsub.f32 %v3549, %v272
  %v3707 = vsub.f32 %v3549, %v277
  %v3708 = vsub.f32 %v3549, %v282
  %v3709 = vsub.f32 %v3549, %v287
  %v3710 = vsub.f32 %v3553, %v272
  %v3711 = vsub.f32 %v3553, %v277
  %v3712 = vsub.f32 %v3553, %v282
  %v3713 = vsub.f32 %v3553, %v287
  %v3714 = vsub.f32 %v3557, %v272
  %v3715 = vsub.f32 %v3557, %v277
  %v3716 = vsub.f32 %v3557, %v282
  %v3717 = vsub.f32 %v3557, %v287
  %v3718 = vsub.f32 %v3561, %v272
  %v3719 = vsub.f32 %v3561, %v277
  %v3720 = vsub.f32 %v3561, %v282
  %v3721 = vsub.f32 %v3561, %v287
  %v3722 = vsub.f32 %v3565, %v272
  %v3723 = vsub.f32 %v3565, %v277
  %v3724 = vsub.f32 %v3565, %v282
  %v3725 = vsub.f32 %v3565, %v287
  %v3726 = vsub.f32 %v3569, %v272
  %v3727 = vsub.f32 %v3569, %v277
  %v3728 = vsub.f32 %v3569, %v282
  %v3729 = vsub.f32 %v3569, %v287
  %v3730 = vsub.f32 %v3573, %v272
  %v3731 = vsub.f32 %v3573, %v277
  %v3732 = vsub.f32 %v3573, %v282
  %v3733 = vsub.f32 %v3573, %v287
  %v3734 = vsub.f32 %v3577, %v272
  %v3735 = vsub.f32 %v3577, %v277
  %v3736 = vsub.f32 %v3577, %v282
  %v3737 = vsub.f32 %v3577, %v287
  %v3738 = vsub.f32 %v3581, %v272
  %v3739 = vsub.f32 %v3581, %v277
  %v3740 = vsub.f32 %v3581, %v282
  %v3741 = vsub.f32 %v3581, %v287
  %v3742 = vsub.f32 %v3585, %v272
  %v3743 = vsub.f32 %v3585, %v277
  %v3744 = vsub.f32 %v3585, %v282
  %v3745 = vsub.f32 %v3585, %v287
  %v3746 = vsub.f32 %v3589, %v272
  %v3747 = vsub.f32 %v3589, %v277
  %v3748 = vsub.f32 %v3589, %v282
  %v3749 = vsub.f32 %v3589, %v287
  %v3750 = vsub.f32 %v3593, %v272
  %v3751 = vsub.f32 %v3593, %v277
  %v3752 = vsub.f32 %v3593, %v282
  %v3753 = vsub.f32 %v3593, %v287
  %v3754 = vmax.f32 %v3626, 0.0
  %v3755 = vmax.f32 %v3627, 0.0
  %v3756 = vmax.f32 %v3628, 0.0
  %v3757 = vmax.f32 %v3629, 0.0
  %v3758 = vmax.f32 %v3630, 0.0
  %v3759 = vmax.f32 %v3631, 0.0
  %v3760 = vmax.f32 %v3632, 0.0
  %v3761 = vmax.f32 %v3633, 0.0
  %v3762 = vmax.f32 %v3634, 0.0
  %v3763 = vmax.f32 %v3635, 0.0
  %v3764 = vmax.f32 %v3636, 0.0
  %v3765 = vmax.f32 %v3637, 0.0
  %v3766 = vmax.f32 %v3638, 0.0
  %v3767 = vmax.f32 %v3639, 0.0
  %v3768 = vmax.f32 %v3640, 0.0
  %v3769 = vmax.f32 %v3641, 0.0
  %v3770 = vmax.f32 %v3642, 0.0
  %v3771 = vmax.f32 %v3643, 0.0
  %v3772 = vmax.f32 %v3644, 0.0
  %v3773 = vmax.f32 %v3645, 0.0
  %v3774 = vmax.f32 %v3646, 0.0
  %v3775 = vmax.f32 %v3647, 0.0
  %v3776 = vmax.f32 %v3648, 0.0
  %v3777 = vmax.f32 %v3649, 0.0
  %v3778 = vmax.f32 %v3650, 0.0
  %v3779 = vmax.f32 %v3651, 0.0
  %v3780 = vmax.f32 %v3652, 0.0
  %v3781 = vmax.f32 %v3653, 0.0
  %v3782 = vmax.f32 %v3654, 0.0
  %v3783 = vmax.f32 %v3655, 0.0
  %v3784 = vmax.f32 %v3656, 0.0
  %v3785 = vmax.f32 %v3657, 0.0
  %v3786 = vmax.f32 %v3658, 0.0
  %v3787 = vmax.f32 %v3659, 0.0
  %v3788 = vmax.f32 %v3660, 0.0
  %v3789 = vmax.f32 %v3661, 0.0
  %v3790 = vmax.f32 %v3662, 0.0
  %v3791 = vmax.f32 %v3663, 0.0
  %v3792 = vmax.f32 %v3664, 0.0
  %v3793 = vmax.f32 %v3665, 0.0
  %v3794 = vmax.f32 %v3666, 0.0
  %v3795 = vmax.f32 %v3667, 0.0
  %v3796 = vmax.f32 %v3668, 0.0
  %v3797 = vmax.f32 %v3669, 0.0
  %v3798 = vmax.f32 %v3670, 0.0
  %v3799 = vmax.f32 %v3671, 0.0
  %v3800 = vmax.f32 %v3672, 0.0
  %v3801 = vmax.f32 %v3673, 0.0
  %v3802 = vmax.f32 %v3674, 0.0
  %v3803 = vmax.f32 %v3675, 0.0
  %v3804 = vmax.f32 %v3676, 0.0
  %v3805 = vmax.f32 %v3677, 0.0
  %v3806 = vmax.f32 %v3678, 0.0
  %v3807 = vmax.f32 %v3679, 0.0
  %v3808 = vmax.f32 %v3680, 0.0
  %v3809 = vmax.f32 %v3681, 0.0
  %v3810 = vmax.f32 %v3682, 0.0
  %v3811 = vmax.f32 %v3683, 0.0
  %v3812 = vmax.f32 %v3684, 0.0
  %v3813 = vmax.f32 %v3685, 0.0
  %v3814 = vmax.f32 %v3686, 0.0
  %v3815 = vmax.f32 %v3687, 0.0
  %v3816 = vmax.f32 %v3688, 0.0
  %v3817 = vmax.f32 %v3689, 0.0
  %v3818 = vmax.f32 %v3690, 0.0
  %v3819 = vmax.f32 %v3691, 0.0
  %v3820 = vmax.f32 %v3692, 0.0
  %v3821 = vmax.f32 %v3693, 0.0
  %v3822 = vmax.f32 %v3694, 0.0
  %v3823 = vmax.f32 %v3695, 0.0
  %v3824 = vmax.f32 %v3696, 0.0
  %v3825 = vmax.f32 %v3697, 0.0
  %v3826 = vmax.f32 %v3698, 0.0
  %v3827 = vmax.f32 %v3699, 0.0
  %v3828 = vmax.f32 %v3700, 0.0
  %v3829 = vmax.f32 %v3701, 0.0
  %v3830 = vmax.f32 %v3702, 0.0
  %v3831 = vmax.f32 %v3703, 0.0
  %v3832 = vmax.f32 %v3704, 0.0
  %v3833 = vmax.f32 %v3705, 0.0
  %v3834 = vmax.f32 %v3706, 0.0
  %v3835 = vmax.f32 %v3707, 0.0
  %v3836 = vmax.f32 %v3708, 0.0
  %v3837 = vmax.f32 %v3709, 0.0
  %v3838 = vmax.f32 %v3710, 0.0
  %v3839 = vmax.f32 %v3711, 0.0
  %v3840 = vmax.f32 %v3712, 0.0
  %v3841 = vmax.f32 %v3713, 0.0
  %v3842 = vmax.f32 %v3714, 0.0
  %v3843 = vmax.f32 %v3715, 0.0
  %v3844 = vmax.f32 %v3716, 0.0
  %v3845 = vmax.f32 %v3717, 0.0
  %v3846 = vmax.f32 %v3718, 0.0
  %v3847 = vmax.f32 %v3719, 0.0
  %v3848 = vmax.f32 %v3720, 0.0
  %v3849 = vmax.f32 %v3721, 0.0
  %v3850 = vmax.f32 %v3722, 0.0
  %v3851 = vmax.f32 %v3723, 0.0
  %v3852 = vmax.f32 %v3724, 0.0
  %v3853 = vmax.f32 %v3725, 0.0
  %v3854 = vmax.f32 %v3726, 0.0
  %v3855 = vmax.f32 %v3727, 0.0
  %v3856 = vmax.f32 %v3728, 0.0
  %v3857 = vmax.f32 %v3729, 0.0
  %v3858 = vmax.f32 %v3730, 0.0
  %v3859 = vmax.f32 %v3731, 0.0
  %v3860 = vmax.f32 %v3732, 0.0
  %v3861 = vmax.f32 %v3733, 0.0
  %v3862 = vmax.f32 %v3734, 0.0
  %v3863 = vmax.f32 %v3735, 0.0
  %v3864 = vmax.f32 %v3736, 0.0
  %v3865 = vmax.f32 %v3737, 0.0
  %v3866 = vmax.f32 %v3738, 0.0
  %v3867 = vmax.f32 %v3739, 0.0
  %v3868 = vmax.f32 %v3740, 0.0
  %v3869 = vmax.f32 %v3741, 0.0
  %v3870 = vmax.f32 %v3742, 0.0
  %v3871 = vmax.f32 %v3743, 0.0
  %v3872 = vmax.f32 %v3744, 0.0
  %v3873 = vmax.f32 %v3745, 0.0
  %v3874 = vmax.f32 %v3746, 0.0
  %v3875 = vmax.f32 %v3747, 0.0
  %v3876 = vmax.f32 %v3748, 0.0
  %v3877 = vmax.f32 %v3749, 0.0
  %v3878 = vmax.f32 %v3750, 0.0
  %v3879 = vmax.f32 %v3751, 0.0
  %v3880 = vmax.f32 %v3752, 0.0
  %v3881 = vmax.f32 %v3753, 0.0
  %v3882 = vpack.c.bf16 %v3755, %v3754
  %v3883 = vpack.c.bf16 %v3757, %v3756
  %v3884 = vpack.c.bf16 %v3759, %v3758
  %v3885 = vpack.c.bf16 %v3761, %v3760
  %v3886 = vpack.c.bf16 %v3763, %v3762
  %v3887 = vpack.c.bf16 %v3765, %v3764
  %v3888 = vpack.c.bf16 %v3767, %v3766
  %v3889 = vpack.c.bf16 %v3769, %v3768
  %v3890 = vpack.c.bf16 %v3771, %v3770
  %v3891 = vpack.c.bf16 %v3773, %v3772
  %v3892 = vpack.c.bf16 %v3775, %v3774
  %v3893 = vpack.c.bf16 %v3777, %v3776
  %v3894 = vpack.c.bf16 %v3779, %v3778
  %v3895 = vpack.c.bf16 %v3781, %v3780
  %v3896 = vpack.c.bf16 %v3783, %v3782
  %v3897 = vpack.c.bf16 %v3785, %v3784
  %v3898 = vpack.c.bf16 %v3787, %v3786
  %v3899 = vpack.c.bf16 %v3789, %v3788
  %v3900 = vpack.c.bf16 %v3791, %v3790
  %v3901 = vpack.c.bf16 %v3793, %v3792
  %v3902 = vpack.c.bf16 %v3795, %v3794
  %v3903 = vpack.c.bf16 %v3797, %v3796
  %v3904 = vpack.c.bf16 %v3799, %v3798
  %v3905 = vpack.c.bf16 %v3801, %v3800
  %v3906 = vpack.c.bf16 %v3803, %v3802
  %v3907 = vpack.c.bf16 %v3805, %v3804
  %v3908 = vpack.c.bf16 %v3807, %v3806
  %v3909 = vpack.c.bf16 %v3809, %v3808
  %v3910 = vpack.c.bf16 %v3811, %v3810
  %v3911 = vpack.c.bf16 %v3813, %v3812
  %v3912 = vpack.c.bf16 %v3815, %v3814
  %v3913 = vpack.c.bf16 %v3817, %v3816
  %v3914 = vpack.c.bf16 %v3819, %v3818
  %v3915 = vpack.c.bf16 %v3821, %v3820
  %v3916 = vpack.c.bf16 %v3823, %v3822
  %v3917 = vpack.c.bf16 %v3825, %v3824
  %v3918 = vpack.c.bf16 %v3827, %v3826
  %v3919 = vpack.c.bf16 %v3829, %v3828
  %v3920 = vpack.c.bf16 %v3831, %v3830
  %v3921 = vpack.c.bf16 %v3833, %v3832
  %v3922 = vpack.c.bf16 %v3835, %v3834
  %v3923 = vpack.c.bf16 %v3837, %v3836
  %v3924 = vpack.c.bf16 %v3839, %v3838
  %v3925 = vpack.c.bf16 %v3841, %v3840
  %v3926 = vpack.c.bf16 %v3843, %v3842
  %v3927 = vpack.c.bf16 %v3845, %v3844
  %v3928 = vpack.c.bf16 %v3847, %v3846
  %v3929 = vpack.c.bf16 %v3849, %v3848
  %v3930 = vpack.c.bf16 %v3851, %v3850
  %v3931 = vpack.c.bf16 %v3853, %v3852
  %v3932 = vpack.c.bf16 %v3855, %v3854
  %v3933 = vpack.c.bf16 %v3857, %v3856
  %v3934 = vpack.c.bf16 %v3859, %v3858
  %v3935 = vpack.c.bf16 %v3861, %v3860
  %v3936 = vpack.c.bf16 %v3863, %v3862
  %v3937 = vpack.c.bf16 %v3865, %v3864
  %v3938 = vpack.c.bf16 %v3867, %v3866
  %v3939 = vpack.c.bf16 %v3869, %v3868
  %v3940 = vpack.c.bf16 %v3871, %v3870
  %v3941 = vpack.c.bf16 %v3873, %v3872
  %v3942 = vpack.c.bf16 %v3875, %v3874
  %v3943 = vpack.c.bf16 %v3877, %v3876
  %v3944 = vpack.c.bf16 %v3879, %v3878
  %v3945 = vpack.c.bf16 %v3881, %v3880
  %v3946 = vld [vmem:[%s6] sm:$0xf]
  %v3947 = vld [vmem:[%s6 + $0x4] sm:$0xf]
  %v3948 = vld [vmem:[%s6 + $0x8] sm:$0xf]
  %v3949 = vld [vmem:[%s6 + $0xc] sm:$0xf]
  %v3950 = vld [vmem:[%s6 + $0x10] sm:$0xf]
  %v3951 = vld [vmem:[%s6 + $0x14] sm:$0xf]
  %v3952 = vld [vmem:[%s6 + $0x18] sm:$0xf]
  %v3953 = vld [vmem:[%s6 + $0x1c] sm:$0xf]
  %v3954 = vld [vmem:[%s6 + $0x20] sm:$0xf]
  %v3955 = vld [vmem:[%s6 + $0x24] sm:$0xf]
  %v3956 = vld [vmem:[%s6 + $0x28] sm:$0xf]
  %v3957 = vld [vmem:[%s6 + $0x2c] sm:$0xf]
  %v3958 = vld [vmem:[%s6 + $0x30] sm:$0xf]
  %v3959 = vld [vmem:[%s6 + $0x34] sm:$0xf]
  %v3960 = vld [vmem:[%s6 + $0x38] sm:$0xf]
  %v3961 = vld [vmem:[%s6 + $0x3c] sm:$0xf]
  %v3962 = vld [vmem:[%s7] sm:$0x1]
  %v3964 = vlaneseq
  %v3965 = vshrl.u32 %v3964, 7
  %v3966 = vsub.s32 0, %v3965
  %v3967 = vrot.slane %v3962, %v3966
  %v3985 = vunpack.c.l.b16 %v3946
  %v3986 = vunpack.c.l.b16 %v3947
  %v3987 = vunpack.c.l.b16 %v3948
  %v3988 = vunpack.c.l.b16 %v3949
  %v3989 = vunpack.c.l.b16 %v3950
  %v3990 = vunpack.c.l.b16 %v3951
  %v3991 = vunpack.c.l.b16 %v3952
  %v3992 = vunpack.c.l.b16 %v3953
  %v3993 = vunpack.c.l.b16 %v3954
  %v3994 = vunpack.c.l.b16 %v3955
  %v3995 = vunpack.c.l.b16 %v3956
  %v3996 = vunpack.c.l.b16 %v3957
  %v3997 = vunpack.c.l.b16 %v3958
  %v3998 = vunpack.c.l.b16 %v3959
  %v3999 = vunpack.c.l.b16 %v3960
  %v4000 = vunpack.c.l.b16 %v3961
  %v4001 = vpack.c.b16 %v3986, %v3985
  %v4002 = vpack.c.b16 %v3988, %v3987
  %v4003 = vpack.c.b16 %v3990, %v3989
  %v4004 = vpack.c.b16 %v3992, %v3991
  %v4005 = vpack.c.b16 %v3994, %v3993
  %v4006 = vpack.c.b16 %v3996, %v3995
  %v4007 = vpack.c.b16 %v3998, %v3997
  %v4008 = vpack.c.b16 %v4000, %v3999
  %4017 = vmatprep.subr.bf16.mxu0 0
  %4018 = vmatpush1.bf16.msra.mxu0 %v4008
  %4019 = vmatprep.subr.bf16.mxu0 0
  %4020 = vmatpush1.bf16.msra.mxu0 %v4007
  %4021 = vmatprep.subr.bf16.mxu0 0
  %4022 = vmatpush1.bf16.msra.mxu0 %v4006
  %4023 = vmatprep.subr.bf16.mxu0 0
  %4024 = vmatpush1.bf16.msra.mxu0 %v4005
  %4025 = vmatprep.subr.bf16.mxu0 0
  %4026 = vmatpush1.bf16.msra.mxu0 %v4004
  %4027 = vmatprep.subr.bf16.mxu0 0
  %4028 = vmatpush1.bf16.msra.mxu0 %v4003
  %4029 = vmatprep.subr.bf16.mxu0 0
  %4030 = vmatpush1.bf16.msra.mxu0 %v4002
  %4031 = vmatprep.subr.bf16.mxu0 0
  %4032 = vmatpush1.bf16.msra.mxu0 %v4001
  %4033 = vmatprep.subr.bf16.mxu0 0
  %4034 = vmatpush2.bf16.msra.mxu0 0
  %4035 = vmatprep.subr.bf16.mxu0 0
  %4036 = vmatpush2.bf16.msra.mxu0 0
  %4037 = vmatprep.subr.bf16.mxu0 0
  %4038 = vmatpush2.bf16.msra.mxu0 0
  %4039 = vmatprep.subr.bf16.mxu0 0
  %4040 = vmatpush2.bf16.msra.mxu0 0
  %4041 = vmatprep.subr.bf16.mxu0 0
  %4042 = vmatpush2.bf16.msra.mxu0 0
  %4043 = vmatprep.subr.bf16.mxu0 0
  %4044 = vmatpush2.bf16.msra.mxu0 0
  %4045 = vmatprep.subr.bf16.mxu0 0
  %4046 = vmatpush2.bf16.msra.mxu0 0
  %4047 = vmatprep.subr.bf16.mxu0 0
  %4048 = vmatpush2.bf16.msra.mxu0 0
  %4049 = vmatprep.mubr.bf16.mxu0 0
  %4050 = vmatmul.mubr.bf16.gmra.mxu0 %v3882
  %v4051 = vpop.f32.mrf.mxu0
  %v4052 = vadd.f32 %v3967, %v4051
  %v4053 = vpop.f32.mrf.mxu0
  %v4054 = vpop.f32.mrf.mxu0
  %v4055 = vadd.f32 %v3967, %v4054
  %v4056 = vpop.f32.mrf.mxu0
  %4057 = vmatprep.mubr.bf16.mxu0 0
  %4058 = vmatmul.mubr.bf16.gmra.mxu0 %v3883
  %v4059 = vpop.f32.mrf.mxu0
  %v4060 = vadd.f32 %v3967, %v4059
  %v4061 = vpop.f32.mrf.mxu0
  %v4062 = vpop.f32.mrf.mxu0
  %v4063 = vadd.f32 %v3967, %v4062
  %v4064 = vpop.f32.mrf.mxu0
  %4065 = vmatprep.mubr.bf16.mxu0 0
  %4066 = vmatmul.mubr.bf16.gmra.mxu0 %v3884
  %v4067 = vpop.f32.mrf.mxu0
  %v4068 = vadd.f32 %v3967, %v4067
  %v4069 = vpop.f32.mrf.mxu0
  %v4070 = vpop.f32.mrf.mxu0
  %v4071 = vadd.f32 %v3967, %v4070
  %v4072 = vpop.f32.mrf.mxu0
  %4073 = vmatprep.mubr.bf16.mxu0 0
  %4074 = vmatmul.mubr.bf16.gmra.mxu0 %v3885
  %v4075 = vpop.f32.mrf.mxu0
  %v4076 = vadd.f32 %v3967, %v4075
  %v4077 = vpop.f32.mrf.mxu0
  %v4078 = vpop.f32.mrf.mxu0
  %v4079 = vadd.f32 %v3967, %v4078
  %v4080 = vpop.f32.mrf.mxu0
  %4081 = vmatprep.mubr.bf16.mxu0 0
  %4082 = vmatmul.mubr.bf16.gmra.mxu0 %v3886
  %v4083 = vpop.f32.mrf.mxu0
  %v4084 = vadd.f32 %v3967, %v4083
  %v4085 = vpop.f32.mrf.mxu0
  %v4086 = vpop.f32.mrf.mxu0
  %v4087 = vadd.f32 %v3967, %v4086
  %v4088 = vpop.f32.mrf.mxu0
  %4089 = vmatprep.mubr.bf16.mxu0 0
  %4090 = vmatmul.mubr.bf16.gmra.mxu0 %v3887
  %v4091 = vpop.f32.mrf.mxu0
  %v4092 = vadd.f32 %v3967, %v4091
  %v4093 = vpop.f32.mrf.mxu0
  %v4094 = vpop.f32.mrf.mxu0
  %v4095 = vadd.f32 %v3967, %v4094
  %v4096 = vpop.f32.mrf.mxu0
  %4097 = vmatprep.mubr.bf16.mxu0 0
  %4098 = vmatmul.mubr.bf16.gmra.mxu0 %v3888
  %v4099 = vpop.f32.mrf.mxu0
  %v4100 = vadd.f32 %v3967, %v4099
  %v4101 = vpop.f32.mrf.mxu0
  %v4102 = vpop.f32.mrf.mxu0
  %v4103 = vadd.f32 %v3967, %v4102
  %v4104 = vpop.f32.mrf.mxu0
  %4105 = vmatprep.mubr.bf16.mxu0 0
  %4106 = vmatmul.mubr.bf16.gmra.mxu0 %v3889
  %v4107 = vpop.f32.mrf.mxu0
  %v4108 = vadd.f32 %v3967, %v4107
  %v4109 = vpop.f32.mrf.mxu0
  %v4110 = vpop.f32.mrf.mxu0
  %v4111 = vadd.f32 %v3967, %v4110
  %v4112 = vpop.f32.mrf.mxu0
  %4113 = vmatprep.mubr.bf16.mxu0 0
  %4114 = vmatmul.mubr.bf16.gmra.mxu0 %v3890
  %v4115 = vpop.f32.mrf.mxu0
  %v4116 = vadd.f32 %v3967, %v4115
  %v4117 = vpop.f32.mrf.mxu0
  %v4118 = vpop.f32.mrf.mxu0
  %v4119 = vadd.f32 %v3967, %v4118
  %v4120 = vpop.f32.mrf.mxu0
  %4121 = vmatprep.mubr.bf16.mxu0 0
  %4122 = vmatmul.mubr.bf16.gmra.mxu0 %v3891
  %v4123 = vpop.f32.mrf.mxu0
  %v4124 = vadd.f32 %v3967, %v4123
  %v4125 = vpop.f32.mrf.mxu0
  %v4126 = vpop.f32.mrf.mxu0
  %v4127 = vadd.f32 %v3967, %v4126
  %v4128 = vpop.f32.mrf.mxu0
  %4129 = vmatprep.mubr.bf16.mxu0 0
  %4130 = vmatmul.mubr.bf16.gmra.mxu0 %v3892
  %v4131 = vpop.f32.mrf.mxu0
  %v4132 = vadd.f32 %v3967, %v4131
  %v4133 = vpop.f32.mrf.mxu0
  %v4134 = vpop.f32.mrf.mxu0
  %v4135 = vadd.f32 %v3967, %v4134
  %v4136 = vpop.f32.mrf.mxu0
  %4137 = vmatprep.mubr.bf16.mxu0 0
  %4138 = vmatmul.mubr.bf16.gmra.mxu0 %v3893
  %v4139 = vpop.f32.mrf.mxu0
  %v4140 = vadd.f32 %v3967, %v4139
  %v4141 = vpop.f32.mrf.mxu0
  %v4142 = vpop.f32.mrf.mxu0
  %v4143 = vadd.f32 %v3967, %v4142
  %v4144 = vpop.f32.mrf.mxu0
  %4145 = vmatprep.mubr.bf16.mxu0 0
  %4146 = vmatmul.mubr.bf16.gmra.mxu0 %v3894
  %v4147 = vpop.f32.mrf.mxu0
  %v4148 = vadd.f32 %v3967, %v4147
  %v4149 = vpop.f32.mrf.mxu0
  %v4150 = vpop.f32.mrf.mxu0
  %v4151 = vadd.f32 %v3967, %v4150
  %v4152 = vpop.f32.mrf.mxu0
  %4153 = vmatprep.mubr.bf16.mxu0 0
  %4154 = vmatmul.mubr.bf16.gmra.mxu0 %v3895
  %v4155 = vpop.f32.mrf.mxu0
  %v4156 = vadd.f32 %v3967, %v4155
  %v4157 = vpop.f32.mrf.mxu0
  %v4158 = vpop.f32.mrf.mxu0
  %v4159 = vadd.f32 %v3967, %v4158
  %v4160 = vpop.f32.mrf.mxu0
  %4161 = vmatprep.mubr.bf16.mxu0 0
  %4162 = vmatmul.mubr.bf16.gmra.mxu0 %v3896
  %v4163 = vpop.f32.mrf.mxu0
  %v4164 = vadd.f32 %v3967, %v4163
  %v4165 = vpop.f32.mrf.mxu0
  %v4166 = vpop.f32.mrf.mxu0
  %v4167 = vadd.f32 %v3967, %v4166
  %v4168 = vpop.f32.mrf.mxu0
  %4169 = vmatprep.mubr.bf16.mxu0 0
  %4170 = vmatmul.mubr.bf16.gmra.mxu0 %v3897
  %v4171 = vpop.f32.mrf.mxu0
  %v4172 = vadd.f32 %v3967, %v4171
  %v4173 = vpop.f32.mrf.mxu0
  %v4174 = vpop.f32.mrf.mxu0
  %v4175 = vadd.f32 %v3967, %v4174
  %v4176 = vpop.f32.mrf.mxu0
  %4177 = vmatprep.mubr.bf16.mxu0 0
  %4178 = vmatmul.mubr.bf16.gmra.mxu0 %v3898
  %v4179 = vpop.f32.mrf.mxu0
  %v4180 = vadd.f32 %v3967, %v4179
  %v4181 = vpop.f32.mrf.mxu0
  %v4182 = vpop.f32.mrf.mxu0
  %v4183 = vadd.f32 %v3967, %v4182
  %v4184 = vpop.f32.mrf.mxu0
  %4185 = vmatprep.mubr.bf16.mxu0 0
  %4186 = vmatmul.mubr.bf16.gmra.mxu0 %v3899
  %v4187 = vpop.f32.mrf.mxu0
  %v4188 = vadd.f32 %v3967, %v4187
  %v4189 = vpop.f32.mrf.mxu0
  %v4190 = vpop.f32.mrf.mxu0
  %v4191 = vadd.f32 %v3967, %v4190
  %v4192 = vpop.f32.mrf.mxu0
  %4193 = vmatprep.mubr.bf16.mxu0 0
  %4194 = vmatmul.mubr.bf16.gmra.mxu0 %v3900
  %v4195 = vpop.f32.mrf.mxu0
  %v4196 = vadd.f32 %v3967, %v4195
  %v4197 = vpop.f32.mrf.mxu0
  %v4198 = vpop.f32.mrf.mxu0
  %v4199 = vadd.f32 %v3967, %v4198
  %v4200 = vpop.f32.mrf.mxu0
  %4201 = vmatprep.mubr.bf16.mxu0 0
  %4202 = vmatmul.mubr.bf16.gmra.mxu0 %v3901
  %v4203 = vpop.f32.mrf.mxu0
  %v4204 = vadd.f32 %v3967, %v4203
  %v4205 = vpop.f32.mrf.mxu0
  %v4206 = vpop.f32.mrf.mxu0
  %v4207 = vadd.f32 %v3967, %v4206
  %v4208 = vpop.f32.mrf.mxu0
  %4209 = vmatprep.mubr.bf16.mxu0 0
  %4210 = vmatmul.mubr.bf16.gmra.mxu0 %v3902
  %v4211 = vpop.f32.mrf.mxu0
  %v4212 = vadd.f32 %v3967, %v4211
  %v4213 = vpop.f32.mrf.mxu0
  %v4214 = vpop.f32.mrf.mxu0
  %v4215 = vadd.f32 %v3967, %v4214
  %v4216 = vpop.f32.mrf.mxu0
  %4217 = vmatprep.mubr.bf16.mxu0 0
  %4218 = vmatmul.mubr.bf16.gmra.mxu0 %v3903
  %v4219 = vpop.f32.mrf.mxu0
  %v4220 = vadd.f32 %v3967, %v4219
  %v4221 = vpop.f32.mrf.mxu0
  %v4222 = vpop.f32.mrf.mxu0
  %v4223 = vadd.f32 %v3967, %v4222
  %v4224 = vpop.f32.mrf.mxu0
  %4225 = vmatprep.mubr.bf16.mxu0 0
  %4226 = vmatmul.mubr.bf16.gmra.mxu0 %v3904
  %v4227 = vpop.f32.mrf.mxu0
  %v4228 = vadd.f32 %v3967, %v4227
  %v4229 = vpop.f32.mrf.mxu0
  %v4230 = vpop.f32.mrf.mxu0
  %v4231 = vadd.f32 %v3967, %v4230
  %v4232 = vpop.f32.mrf.mxu0
  %4233 = vmatprep.mubr.bf16.mxu0 0
  %4234 = vmatmul.mubr.bf16.gmra.mxu0 %v3905
  %v4235 = vpop.f32.mrf.mxu0
  %v4236 = vadd.f32 %v3967, %v4235
  %v4237 = vpop.f32.mrf.mxu0
  %v4238 = vpop.f32.mrf.mxu0
  %v4239 = vadd.f32 %v3967, %v4238
  %v4240 = vpop.f32.mrf.mxu0
  %4241 = vmatprep.mubr.bf16.mxu0 0
  %4242 = vmatmul.mubr.bf16.gmra.mxu0 %v3906
  %v4243 = vpop.f32.mrf.mxu0
  %v4244 = vadd.f32 %v3967, %v4243
  %v4245 = vpop.f32.mrf.mxu0
  %v4246 = vpop.f32.mrf.mxu0
  %v4247 = vadd.f32 %v3967, %v4246
  %v4248 = vpop.f32.mrf.mxu0
  %4249 = vmatprep.mubr.bf16.mxu0 0
  %4250 = vmatmul.mubr.bf16.gmra.mxu0 %v3907
  %v4251 = vpop.f32.mrf.mxu0
  %v4252 = vadd.f32 %v3967, %v4251
  %v4253 = vpop.f32.mrf.mxu0
  %v4254 = vpop.f32.mrf.mxu0
  %v4255 = vadd.f32 %v3967, %v4254
  %v4256 = vpop.f32.mrf.mxu0
  %4257 = vmatprep.mubr.bf16.mxu0 0
  %4258 = vmatmul.mubr.bf16.gmra.mxu0 %v3908
  %v4259 = vpop.f32.mrf.mxu0
  %v4260 = vadd.f32 %v3967, %v4259
  %v4261 = vpop.f32.mrf.mxu0
  %v4262 = vpop.f32.mrf.mxu0
  %v4263 = vadd.f32 %v3967, %v4262
  %v4264 = vpop.f32.mrf.mxu0
  %4265 = vmatprep.mubr.bf16.mxu0 0
  %4266 = vmatmul.mubr.bf16.gmra.mxu0 %v3909
  %v4267 = vpop.f32.mrf.mxu0
  %v4268 = vadd.f32 %v3967, %v4267
  %v4269 = vpop.f32.mrf.mxu0
  %v4270 = vpop.f32.mrf.mxu0
  %v4271 = vadd.f32 %v3967, %v4270
  %v4272 = vpop.f32.mrf.mxu0
  %4273 = vmatprep.mubr.bf16.mxu0 0
  %4274 = vmatmul.mubr.bf16.gmra.mxu0 %v3910
  %v4275 = vpop.f32.mrf.mxu0
  %v4276 = vadd.f32 %v3967, %v4275
  %v4277 = vpop.f32.mrf.mxu0
  %v4278 = vpop.f32.mrf.mxu0
  %v4279 = vadd.f32 %v3967, %v4278
  %v4280 = vpop.f32.mrf.mxu0
  %4281 = vmatprep.mubr.bf16.mxu0 0
  %4282 = vmatmul.mubr.bf16.gmra.mxu0 %v3911
  %v4283 = vpop.f32.mrf.mxu0
  %v4284 = vadd.f32 %v3967, %v4283
  %v4285 = vpop.f32.mrf.mxu0
  %v4286 = vpop.f32.mrf.mxu0
  %v4287 = vadd.f32 %v3967, %v4286
  %v4288 = vpop.f32.mrf.mxu0
  %4289 = vmatprep.mubr.bf16.mxu0 0
  %4290 = vmatmul.mubr.bf16.gmra.mxu0 %v3912
  %v4291 = vpop.f32.mrf.mxu0
  %v4292 = vadd.f32 %v3967, %v4291
  %v4293 = vpop.f32.mrf.mxu0
  %v4294 = vpop.f32.mrf.mxu0
  %v4295 = vadd.f32 %v3967, %v4294
  %v4296 = vpop.f32.mrf.mxu0
  %4297 = vmatprep.mubr.bf16.mxu0 0
  %4298 = vmatmul.mubr.bf16.gmra.mxu0 %v3913
  %v4299 = vpop.f32.mrf.mxu0
  %v4300 = vadd.f32 %v3967, %v4299
  %v4301 = vpop.f32.mrf.mxu0
  %v4302 = vpop.f32.mrf.mxu0
  %v4303 = vadd.f32 %v3967, %v4302
  %v4304 = vpop.f32.mrf.mxu0
  %4305 = vmatprep.mubr.bf16.mxu0 0
  %4306 = vmatmul.mubr.bf16.gmra.mxu0 %v3914
  %v4307 = vpop.f32.mrf.mxu0
  %v4308 = vadd.f32 %v3967, %v4307
  %v4309 = vpop.f32.mrf.mxu0
  %v4310 = vpop.f32.mrf.mxu0
  %v4311 = vadd.f32 %v3967, %v4310
  %v4312 = vpop.f32.mrf.mxu0
  %4313 = vmatprep.mubr.bf16.mxu0 0
  %4314 = vmatmul.mubr.bf16.gmra.mxu0 %v3915
  %v4315 = vpop.f32.mrf.mxu0
  %v4316 = vadd.f32 %v3967, %v4315
  %v4317 = vpop.f32.mrf.mxu0
  %v4318 = vpop.f32.mrf.mxu0
  %v4319 = vadd.f32 %v3967, %v4318
  %v4320 = vpop.f32.mrf.mxu0
  %4321 = vmatprep.mubr.bf16.mxu0 0
  %4322 = vmatmul.mubr.bf16.gmra.mxu0 %v3916
  %v4323 = vpop.f32.mrf.mxu0
  %v4324 = vadd.f32 %v3967, %v4323
  %v4325 = vpop.f32.mrf.mxu0
  %v4326 = vpop.f32.mrf.mxu0
  %v4327 = vadd.f32 %v3967, %v4326
  %v4328 = vpop.f32.mrf.mxu0
  %4329 = vmatprep.mubr.bf16.mxu0 0
  %4330 = vmatmul.mubr.bf16.gmra.mxu0 %v3917
  %v4331 = vpop.f32.mrf.mxu0
  %v4332 = vadd.f32 %v3967, %v4331
  %v4333 = vpop.f32.mrf.mxu0
  %v4334 = vpop.f32.mrf.mxu0
  %v4335 = vadd.f32 %v3967, %v4334
  %v4336 = vpop.f32.mrf.mxu0
  %4337 = vmatprep.mubr.bf16.mxu0 0
  %4338 = vmatmul.mubr.bf16.gmra.mxu0 %v3918
  %v4339 = vpop.f32.mrf.mxu0
  %v4340 = vadd.f32 %v3967, %v4339
  %v4341 = vpop.f32.mrf.mxu0
  %v4342 = vpop.f32.mrf.mxu0
  %v4343 = vadd.f32 %v3967, %v4342
  %v4344 = vpop.f32.mrf.mxu0
  %4345 = vmatprep.mubr.bf16.mxu0 0
  %4346 = vmatmul.mubr.bf16.gmra.mxu0 %v3919
  %v4347 = vpop.f32.mrf.mxu0
  %v4348 = vadd.f32 %v3967, %v4347
  %v4349 = vpop.f32.mrf.mxu0
  %v4350 = vpop.f32.mrf.mxu0
  %v4351 = vadd.f32 %v3967, %v4350
  %v4352 = vpop.f32.mrf.mxu0
  %4353 = vmatprep.mubr.bf16.mxu0 0
  %4354 = vmatmul.mubr.bf16.gmra.mxu0 %v3920
  %v4355 = vpop.f32.mrf.mxu0
  %v4356 = vadd.f32 %v3967, %v4355
  %v4357 = vpop.f32.mrf.mxu0
  %v4358 = vpop.f32.mrf.mxu0
  %v4359 = vadd.f32 %v3967, %v4358
  %v4360 = vpop.f32.mrf.mxu0
  %4361 = vmatprep.mubr.bf16.mxu0 0
  %4362 = vmatmul.mubr.bf16.gmra.mxu0 %v3921
  %v4363 = vpop.f32.mrf.mxu0
  %v4364 = vadd.f32 %v3967, %v4363
  %v4365 = vpop.f32.mrf.mxu0
  %v4366 = vpop.f32.mrf.mxu0
  %v4367 = vadd.f32 %v3967, %v4366
  %v4368 = vpop.f32.mrf.mxu0
  %4369 = vmatprep.mubr.bf16.mxu0 0
  %4370 = vmatmul.mubr.bf16.gmra.mxu0 %v3922
  %v4371 = vpop.f32.mrf.mxu0
  %v4372 = vadd.f32 %v3967, %v4371
  %v4373 = vpop.f32.mrf.mxu0
  %v4374 = vpop.f32.mrf.mxu0
  %v4375 = vadd.f32 %v3967, %v4374
  %v4376 = vpop.f32.mrf.mxu0
  %4377 = vmatprep.mubr.bf16.mxu0 0
  %4378 = vmatmul.mubr.bf16.gmra.mxu0 %v3923
  %v4379 = vpop.f32.mrf.mxu0
  %v4380 = vadd.f32 %v3967, %v4379
  %v4381 = vpop.f32.mrf.mxu0
  %v4382 = vpop.f32.mrf.mxu0
  %v4383 = vadd.f32 %v3967, %v4382
  %v4384 = vpop.f32.mrf.mxu0
  %4385 = vmatprep.mubr.bf16.mxu0 0
  %4386 = vmatmul.mubr.bf16.gmra.mxu0 %v3924
  %v4387 = vpop.f32.mrf.mxu0
  %v4388 = vadd.f32 %v3967, %v4387
  %v4389 = vpop.f32.mrf.mxu0
  %v4390 = vpop.f32.mrf.mxu0
  %v4391 = vadd.f32 %v3967, %v4390
  %v4392 = vpop.f32.mrf.mxu0
  %4393 = vmatprep.mubr.bf16.mxu0 0
  %4394 = vmatmul.mubr.bf16.gmra.mxu0 %v3925
  %v4395 = vpop.f32.mrf.mxu0
  %v4396 = vadd.f32 %v3967, %v4395
  %v4397 = vpop.f32.mrf.mxu0
  %v4398 = vpop.f32.mrf.mxu0
  %v4399 = vadd.f32 %v3967, %v4398
  %v4400 = vpop.f32.mrf.mxu0
  %4401 = vmatprep.mubr.bf16.mxu0 0
  %4402 = vmatmul.mubr.bf16.gmra.mxu0 %v3926
  %v4403 = vpop.f32.mrf.mxu0
  %v4404 = vadd.f32 %v3967, %v4403
  %v4405 = vpop.f32.mrf.mxu0
  %v4406 = vpop.f32.mrf.mxu0
  %v4407 = vadd.f32 %v3967, %v4406
  %v4408 = vpop.f32.mrf.mxu0
  %4409 = vmatprep.mubr.bf16.mxu0 0
  %4410 = vmatmul.mubr.bf16.gmra.mxu0 %v3927
  %v4411 = vpop.f32.mrf.mxu0
  %v4412 = vadd.f32 %v3967, %v4411
  %v4413 = vpop.f32.mrf.mxu0
  %v4414 = vpop.f32.mrf.mxu0
  %v4415 = vadd.f32 %v3967, %v4414
  %v4416 = vpop.f32.mrf.mxu0
  %4417 = vmatprep.mubr.bf16.mxu0 0
  %4418 = vmatmul.mubr.bf16.gmra.mxu0 %v3928
  %v4419 = vpop.f32.mrf.mxu0
  %v4420 = vadd.f32 %v3967, %v4419
  %v4421 = vpop.f32.mrf.mxu0
  %v4422 = vpop.f32.mrf.mxu0
  %v4423 = vadd.f32 %v3967, %v4422
  %v4424 = vpop.f32.mrf.mxu0
  %4425 = vmatprep.mubr.bf16.mxu0 0
  %4426 = vmatmul.mubr.bf16.gmra.mxu0 %v3929
  %v4427 = vpop.f32.mrf.mxu0
  %v4428 = vadd.f32 %v3967, %v4427
  %v4429 = vpop.f32.mrf.mxu0
  %v4430 = vpop.f32.mrf.mxu0
  %v4431 = vadd.f32 %v3967, %v4430
  %v4432 = vpop.f32.mrf.mxu0
  %4433 = vmatprep.mubr.bf16.mxu0 0
  %4434 = vmatmul.mubr.bf16.gmra.mxu0 %v3930
  %v4435 = vpop.f32.mrf.mxu0
  %v4436 = vadd.f32 %v3967, %v4435
  %v4437 = vpop.f32.mrf.mxu0
  %v4438 = vpop.f32.mrf.mxu0
  %v4439 = vadd.f32 %v3967, %v4438
  %v4440 = vpop.f32.mrf.mxu0
  %4441 = vmatprep.mubr.bf16.mxu0 0
  %4442 = vmatmul.mubr.bf16.gmra.mxu0 %v3931
  %v4443 = vpop.f32.mrf.mxu0
  %v4444 = vadd.f32 %v3967, %v4443
  %v4445 = vpop.f32.mrf.mxu0
  %v4446 = vpop.f32.mrf.mxu0
  %v4447 = vadd.f32 %v3967, %v4446
  %v4448 = vpop.f32.mrf.mxu0
  %4449 = vmatprep.mubr.bf16.mxu0 0
  %4450 = vmatmul.mubr.bf16.gmra.mxu0 %v3932
  %v4451 = vpop.f32.mrf.mxu0
  %v4452 = vadd.f32 %v3967, %v4451
  %v4453 = vpop.f32.mrf.mxu0
  %v4454 = vpop.f32.mrf.mxu0
  %v4455 = vadd.f32 %v3967, %v4454
  %v4456 = vpop.f32.mrf.mxu0
  %4457 = vmatprep.mubr.bf16.mxu0 0
  %4458 = vmatmul.mubr.bf16.gmra.mxu0 %v3933
  %v4459 = vpop.f32.mrf.mxu0
  %v4460 = vadd.f32 %v3967, %v4459
  %v4461 = vpop.f32.mrf.mxu0
  %v4462 = vpop.f32.mrf.mxu0
  %v4463 = vadd.f32 %v3967, %v4462
  %v4464 = vpop.f32.mrf.mxu0
  %4465 = vmatprep.mubr.bf16.mxu0 0
  %4466 = vmatmul.mubr.bf16.gmra.mxu0 %v3934
  %v4467 = vpop.f32.mrf.mxu0
  %v4468 = vadd.f32 %v3967, %v4467
  %v4469 = vpop.f32.mrf.mxu0
  %v4470 = vpop.f32.mrf.mxu0
  %v4471 = vadd.f32 %v3967, %v4470
  %v4472 = vpop.f32.mrf.mxu0
  %4473 = vmatprep.mubr.bf16.mxu0 0
  %4474 = vmatmul.mubr.bf16.gmra.mxu0 %v3935
  %v4475 = vpop.f32.mrf.mxu0
  %v4476 = vadd.f32 %v3967, %v4475
  %v4477 = vpop.f32.mrf.mxu0
  %v4478 = vpop.f32.mrf.mxu0
  %v4479 = vadd.f32 %v3967, %v4478
  %v4480 = vpop.f32.mrf.mxu0
  %4481 = vmatprep.mubr.bf16.mxu0 0
  %4482 = vmatmul.mubr.bf16.gmra.mxu0 %v3936
  %v4483 = vpop.f32.mrf.mxu0
  %v4484 = vadd.f32 %v3967, %v4483
  %v4485 = vpop.f32.mrf.mxu0
  %v4486 = vpop.f32.mrf.mxu0
  %v4487 = vadd.f32 %v3967, %v4486
  %v4488 = vpop.f32.mrf.mxu0
  %4489 = vmatprep.mubr.bf16.mxu0 0
  %4490 = vmatmul.mubr.bf16.gmra.mxu0 %v3937
  %v4491 = vpop.f32.mrf.mxu0
  %v4492 = vadd.f32 %v3967, %v4491
  %v4493 = vpop.f32.mrf.mxu0
  %v4494 = vpop.f32.mrf.mxu0
  %v4495 = vadd.f32 %v3967, %v4494
  %v4496 = vpop.f32.mrf.mxu0
  %4497 = vmatprep.mubr.bf16.mxu0 0
  %4498 = vmatmul.mubr.bf16.gmra.mxu0 %v3938
  %v4499 = vpop.f32.mrf.mxu0
  %v4500 = vadd.f32 %v3967, %v4499
  %v4501 = vpop.f32.mrf.mxu0
  %v4502 = vpop.f32.mrf.mxu0
  %v4503 = vadd.f32 %v3967, %v4502
  %v4504 = vpop.f32.mrf.mxu0
  %4505 = vmatprep.mubr.bf16.mxu0 0
  %4506 = vmatmul.mubr.bf16.gmra.mxu0 %v3939
  %v4507 = vpop.f32.mrf.mxu0
  %v4508 = vadd.f32 %v3967, %v4507
  %v4509 = vpop.f32.mrf.mxu0
  %v4510 = vpop.f32.mrf.mxu0
  %v4511 = vadd.f32 %v3967, %v4510
  %v4512 = vpop.f32.mrf.mxu0
  %4513 = vmatprep.mubr.bf16.mxu0 0
  %4514 = vmatmul.mubr.bf16.gmra.mxu0 %v3940
  %v4515 = vpop.f32.mrf.mxu0
  %v4516 = vadd.f32 %v3967, %v4515
  %v4517 = vpop.f32.mrf.mxu0
  %v4518 = vpop.f32.mrf.mxu0
  %v4519 = vadd.f32 %v3967, %v4518
  %v4520 = vpop.f32.mrf.mxu0
  %4521 = vmatprep.mubr.bf16.mxu0 0
  %4522 = vmatmul.mubr.bf16.gmra.mxu0 %v3941
  %v4523 = vpop.f32.mrf.mxu0
  %v4524 = vadd.f32 %v3967, %v4523
  %v4525 = vpop.f32.mrf.mxu0
  %v4526 = vpop.f32.mrf.mxu0
  %v4527 = vadd.f32 %v3967, %v4526
  %v4528 = vpop.f32.mrf.mxu0
  %4529 = vmatprep.mubr.bf16.mxu0 0
  %4530 = vmatmul.mubr.bf16.gmra.mxu0 %v3942
  %v4531 = vpop.f32.mrf.mxu0
  %v4532 = vadd.f32 %v3967, %v4531
  %v4533 = vpop.f32.mrf.mxu0
  %v4534 = vpop.f32.mrf.mxu0
  %v4535 = vadd.f32 %v3967, %v4534
  %v4536 = vpop.f32.mrf.mxu0
  %4537 = vmatprep.mubr.bf16.mxu0 0
  %4538 = vmatmul.mubr.bf16.gmra.mxu0 %v3943
  %v4539 = vpop.f32.mrf.mxu0
  %v4540 = vadd.f32 %v3967, %v4539
  %v4541 = vpop.f32.mrf.mxu0
  %v4542 = vpop.f32.mrf.mxu0
  %v4543 = vadd.f32 %v3967, %v4542
  %v4544 = vpop.f32.mrf.mxu0
  %4545 = vmatprep.mubr.bf16.mxu0 0
  %4546 = vmatmul.mubr.bf16.gmra.mxu0 %v3944
  %v4547 = vpop.f32.mrf.mxu0
  %v4548 = vadd.f32 %v3967, %v4547
  %v4549 = vpop.f32.mrf.mxu0
  %v4550 = vpop.f32.mrf.mxu0
  %v4551 = vadd.f32 %v3967, %v4550
  %v4552 = vpop.f32.mrf.mxu0
  %4553 = vmatprep.mubr.bf16.mxu0 0
  %4554 = vmatmul.mubr.bf16.gmra.mxu0 %v3945
  %v4555 = vpop.f32.mrf.mxu0
  %v4556 = vadd.f32 %v3967, %v4555
  %v4557 = vpop.f32.mrf.mxu0
  %v4558 = vpop.f32.mrf.mxu0
  %v4559 = vadd.f32 %v3967, %v4558
  %v4560 = vpop.f32.mrf.mxu0
  %4561 = vdwg.mxu0
  %v4562 = vmax.f32 %v4052, 0.0
  %v4563 = vmax.f32 %v4055, 0.0
  %v4564 = vmax.f32 %v4060, 0.0
  %v4565 = vmax.f32 %v4063, 0.0
  %v4566 = vmax.f32 %v4068, 0.0
  %v4567 = vmax.f32 %v4071, 0.0
  %v4568 = vmax.f32 %v4076, 0.0
  %v4569 = vmax.f32 %v4079, 0.0
  %v4570 = vmax.f32 %v4084, 0.0
  %v4571 = vmax.f32 %v4087, 0.0
  %v4572 = vmax.f32 %v4092, 0.0
  %v4573 = vmax.f32 %v4095, 0.0
  %v4574 = vmax.f32 %v4100, 0.0
  %v4575 = vmax.f32 %v4103, 0.0
  %v4576 = vmax.f32 %v4108, 0.0
  %v4577 = vmax.f32 %v4111, 0.0
  %v4578 = vmax.f32 %v4116, 0.0
  %v4579 = vmax.f32 %v4119, 0.0
  %v4580 = vmax.f32 %v4124, 0.0
  %v4581 = vmax.f32 %v4127, 0.0
  %v4582 = vmax.f32 %v4132, 0.0
  %v4583 = vmax.f32 %v4135, 0.0
  %v4584 = vmax.f32 %v4140, 0.0
  %v4585 = vmax.f32 %v4143, 0.0
  %v4586 = vmax.f32 %v4148, 0.0
  %v4587 = vmax.f32 %v4151, 0.0
  %v4588 = vmax.f32 %v4156, 0.0
  %v4589 = vmax.f32 %v4159, 0.0
  %v4590 = vmax.f32 %v4164, 0.0
  %v4591 = vmax.f32 %v4167, 0.0
  %v4592 = vmax.f32 %v4172, 0.0
  %v4593 = vmax.f32 %v4175, 0.0
  %v4594 = vmax.f32 %v4180, 0.0
  %v4595 = vmax.f32 %v4183, 0.0
  %v4596 = vmax.f32 %v4188, 0.0
  %v4597 = vmax.f32 %v4191, 0.0
  %v4598 = vmax.f32 %v4196, 0.0
  %v4599 = vmax.f32 %v4199, 0.0
  %v4600 = vmax.f32 %v4204, 0.0
  %v4601 = vmax.f32 %v4207, 0.0
  %v4602 = vmax.f32 %v4212, 0.0
  %v4603 = vmax.f32 %v4215, 0.0
  %v4604 = vmax.f32 %v4220, 0.0
  %v4605 = vmax.f32 %v4223, 0.0
  %v4606 = vmax.f32 %v4228, 0.0
  %v4607 = vmax.f32 %v4231, 0.0
  %v4608 = vmax.f32 %v4236, 0.0
  %v4609 = vmax.f32 %v4239, 0.0
  %v4610 = vmax.f32 %v4244, 0.0
  %v4611 = vmax.f32 %v4247, 0.0
  %v4612 = vmax.f32 %v4252, 0.0
  %v4613 = vmax.f32 %v4255, 0.0
  %v4614 = vmax.f32 %v4260, 0.0
  %v4615 = vmax.f32 %v4263, 0.0
  %v4616 = vmax.f32 %v4268, 0.0
  %v4617 = vmax.f32 %v4271, 0.0
  %v4618 = vmax.f32 %v4276, 0.0
  %v4619 = vmax.f32 %v4279, 0.0
  %v4620 = vmax.f32 %v4284, 0.0
  %v4621 = vmax.f32 %v4287, 0.0
  %v4622 = vmax.f32 %v4292, 0.0
  %v4623 = vmax.f32 %v4295, 0.0
  %v4624 = vmax.f32 %v4300, 0.0
  %v4625 = vmax.f32 %v4303, 0.0
  %v4626 = vmax.f32 %v4308, 0.0
  %v4627 = vmax.f32 %v4311, 0.0
  %v4628 = vmax.f32 %v4316, 0.0
  %v4629 = vmax.f32 %v4319, 0.0
  %v4630 = vmax.f32 %v4324, 0.0
  %v4631 = vmax.f32 %v4327, 0.0
  %v4632 = vmax.f32 %v4332, 0.0
  %v4633 = vmax.f32 %v4335, 0.0
  %v4634 = vmax.f32 %v4340, 0.0
  %v4635 = vmax.f32 %v4343, 0.0
  %v4636 = vmax.f32 %v4348, 0.0
  %v4637 = vmax.f32 %v4351, 0.0
  %v4638 = vmax.f32 %v4356, 0.0
  %v4639 = vmax.f32 %v4359, 0.0
  %v4640 = vmax.f32 %v4364, 0.0
  %v4641 = vmax.f32 %v4367, 0.0
  %v4642 = vmax.f32 %v4372, 0.0
  %v4643 = vmax.f32 %v4375, 0.0
  %v4644 = vmax.f32 %v4380, 0.0
  %v4645 = vmax.f32 %v4383, 0.0
  %v4646 = vmax.f32 %v4388, 0.0
  %v4647 = vmax.f32 %v4391, 0.0
  %v4648 = vmax.f32 %v4396, 0.0
  %v4649 = vmax.f32 %v4399, 0.0
  %v4650 = vmax.f32 %v4404, 0.0
  %v4651 = vmax.f32 %v4407, 0.0
  %v4652 = vmax.f32 %v4412, 0.0
  %v4653 = vmax.f32 %v4415, 0.0
  %v4654 = vmax.f32 %v4420, 0.0
  %v4655 = vmax.f32 %v4423, 0.0
  %v4656 = vmax.f32 %v4428, 0.0
  %v4657 = vmax.f32 %v4431, 0.0
  %v4658 = vmax.f32 %v4436, 0.0
  %v4659 = vmax.f32 %v4439, 0.0
  %v4660 = vmax.f32 %v4444, 0.0
  %v4661 = vmax.f32 %v4447, 0.0
  %v4662 = vmax.f32 %v4452, 0.0
  %v4663 = vmax.f32 %v4455, 0.0
  %v4664 = vmax.f32 %v4460, 0.0
  %v4665 = vmax.f32 %v4463, 0.0
  %v4666 = vmax.f32 %v4468, 0.0
  %v4667 = vmax.f32 %v4471, 0.0
  %v4668 = vmax.f32 %v4476, 0.0
  %v4669 = vmax.f32 %v4479, 0.0
  %v4670 = vmax.f32 %v4484, 0.0
  %v4671 = vmax.f32 %v4487, 0.0
  %v4672 = vmax.f32 %v4492, 0.0
  %v4673 = vmax.f32 %v4495, 0.0
  %v4674 = vmax.f32 %v4500, 0.0
  %v4675 = vmax.f32 %v4503, 0.0
  %v4676 = vmax.f32 %v4508, 0.0
  %v4677 = vmax.f32 %v4511, 0.0
  %v4678 = vmax.f32 %v4516, 0.0
  %v4679 = vmax.f32 %v4519, 0.0
  %v4680 = vmax.f32 %v4524, 0.0
  %v4681 = vmax.f32 %v4527, 0.0
  %v4682 = vmax.f32 %v4532, 0.0
  %v4683 = vmax.f32 %v4535, 0.0
  %v4684 = vmax.f32 %v4540, 0.0
  %v4685 = vmax.f32 %v4543, 0.0
  %v4686 = vmax.f32 %v4548, 0.0
  %v4687 = vmax.f32 %v4551, 0.0
  %v4688 = vmax.f32 %v4556, 0.0
  %v4689 = vmax.f32 %v4559, 0.0
  %v4690 = vsel %vm3138, %v4562, 0.0
  %v4691 = vsel %vm3139, %v4563, 0.0
  %v4692 = vsel %vm3140, %v4564, 0.0
  %v4693 = vsel %vm3141, %v4565, 0.0
  %v4694 = vsel %vm3142, %v4566, 0.0
  %v4695 = vsel %vm3143, %v4567, 0.0
  %v4696 = vsel %vm3144, %v4568, 0.0
  %v4697 = vsel %vm3145, %v4569, 0.0
  %v4698 = vsel %vm3146, %v4570, 0.0
  %v4699 = vsel %vm3147, %v4571, 0.0
  %v4700 = vsel %vm3148, %v4572, 0.0
  %v4701 = vsel %vm3149, %v4573, 0.0
  %v4702 = vsel %vm3150, %v4574, 0.0
  %v4703 = vsel %vm3151, %v4575, 0.0
  %v4704 = vsel %vm3152, %v4576, 0.0
  %v4705 = vsel %vm3153, %v4577, 0.0
  %v4706 = vsel %vm3154, %v4578, 0.0
  %v4707 = vsel %vm3155, %v4579, 0.0
  %v4708 = vsel %vm3156, %v4580, 0.0
  %v4709 = vsel %vm3157, %v4581, 0.0
  %v4710 = vsel %vm3158, %v4582, 0.0
  %v4711 = vsel %vm3159, %v4583, 0.0
  %v4712 = vsel %vm3160, %v4584, 0.0
  %v4713 = vsel %vm3161, %v4585, 0.0
  %v4714 = vsel %vm3162, %v4586, 0.0
  %v4715 = vsel %vm3163, %v4587, 0.0
  %v4716 = vsel %vm3164, %v4588, 0.0
  %v4717 = vsel %vm3165, %v4589, 0.0
  %v4718 = vsel %vm3166, %v4590, 0.0
  %v4719 = vsel %vm3167, %v4591, 0.0
  %v4720 = vsel %vm3168, %v4592, 0.0
  %v4721 = vsel %vm3169, %v4593, 0.0
  %v4722 = vsel %vm3170, %v4594, 0.0
  %v4723 = vsel %vm3171, %v4595, 0.0
  %v4724 = vsel %vm3172, %v4596, 0.0
  %v4725 = vsel %vm3173, %v4597, 0.0
  %v4726 = vsel %vm3174, %v4598, 0.0
  %v4727 = vsel %vm3175, %v4599, 0.0
  %v4728 = vsel %vm3176, %v4600, 0.0
  %v4729 = vsel %vm3177, %v4601, 0.0
  %v4730 = vsel %vm3178, %v4602, 0.0
  %v4731 = vsel %vm3179, %v4603, 0.0
  %v4732 = vsel %vm3180, %v4604, 0.0
  %v4733 = vsel %vm3181, %v4605, 0.0
  %v4734 = vsel %vm3182, %v4606, 0.0
  %v4735 = vsel %vm3183, %v4607, 0.0
  %v4736 = vsel %vm3184, %v4608, 0.0
  %v4737 = vsel %vm3185, %v4609, 0.0
  %v4738 = vsel %vm3186, %v4610, 0.0
  %v4739 = vsel %vm3187, %v4611, 0.0
  %v4740 = vsel %vm3188, %v4612, 0.0
  %v4741 = vsel %vm3189, %v4613, 0.0
  %v4742 = vsel %vm3190, %v4614, 0.0
  %v4743 = vsel %vm3191, %v4615, 0.0
  %v4744 = vsel %vm3192, %v4616, 0.0
  %v4745 = vsel %vm3193, %v4617, 0.0
  %v4746 = vsel %vm3194, %v4618, 0.0
  %v4747 = vsel %vm3195, %v4619, 0.0
  %v4748 = vsel %vm3196, %v4620, 0.0
  %v4749 = vsel %vm3197, %v4621, 0.0
  %v4750 = vsel %vm3198, %v4622, 0.0
  %v4751 = vsel %vm3199, %v4623, 0.0
  %v4752 = vsel %vm3200, %v4624, 0.0
  %v4753 = vsel %vm3201, %v4625, 0.0
  %v4754 = vsel %vm3202, %v4626, 0.0
  %v4755 = vsel %vm3203, %v4627, 0.0
  %v4756 = vsel %vm3204, %v4628, 0.0
  %v4757 = vsel %vm3205, %v4629, 0.0
  %v4758 = vsel %vm3206, %v4630, 0.0
  %v4759 = vsel %vm3207, %v4631, 0.0
  %v4760 = vsel %vm3208, %v4632, 0.0
  %v4761 = vsel %vm3209, %v4633, 0.0
  %v4762 = vsel %vm3210, %v4634, 0.0
  %v4763 = vsel %vm3211, %v4635, 0.0
  %v4764 = vsel %vm3212, %v4636, 0.0
  %v4765 = vsel %vm3213, %v4637, 0.0
  %v4766 = vsel %vm3214, %v4638, 0.0
  %v4767 = vsel %vm3215, %v4639, 0.0
  %v4768 = vsel %vm3216, %v4640, 0.0
  %v4769 = vsel %vm3217, %v4641, 0.0
  %v4770 = vsel %vm3218, %v4642, 0.0
  %v4771 = vsel %vm3219, %v4643, 0.0
  %v4772 = vsel %vm3220, %v4644, 0.0
  %v4773 = vsel %vm3221, %v4645, 0.0
  %v4774 = vsel %vm3222, %v4646, 0.0
  %v4775 = vsel %vm3223, %v4647, 0.0
  %v4776 = vsel %vm3224, %v4648, 0.0
  %v4777 = vsel %vm3225, %v4649, 0.0
  %v4778 = vsel %vm3226, %v4650, 0.0
  %v4779 = vsel %vm3227, %v4651, 0.0
  %v4780 = vsel %vm3228, %v4652, 0.0
  %v4781 = vsel %vm3229, %v4653, 0.0
  %v4782 = vsel %vm3230, %v4654, 0.0
  %v4783 = vsel %vm3231, %v4655, 0.0
  %v4784 = vsel %vm3232, %v4656, 0.0
  %v4785 = vsel %vm3233, %v4657, 0.0
  %v4786 = vsel %vm3234, %v4658, 0.0
  %v4787 = vsel %vm3235, %v4659, 0.0
  %v4788 = vsel %vm3236, %v4660, 0.0
  %v4789 = vsel %vm3237, %v4661, 0.0
  %v4790 = vsel %vm3238, %v4662, 0.0
  %v4791 = vsel %vm3239, %v4663, 0.0
  %v4792 = vsel %vm3240, %v4664, 0.0
  %v4793 = vsel %vm3241, %v4665, 0.0
  %v4794 = vsel %vm3242, %v4666, 0.0
  %v4795 = vsel %vm3243, %v4667, 0.0
  %v4796 = vsel %vm3244, %v4668, 0.0
  %v4797 = vsel %vm3245, %v4669, 0.0
  %v4798 = vsel %vm3246, %v4670, 0.0
  %v4799 = vsel %vm3247, %v4671, 0.0
  %v4800 = vsel %vm3248, %v4672, 0.0
  %v4801 = vsel %vm3249, %v4673, 0.0
  %v4802 = vsel %vm3250, %v4674, 0.0
  %v4803 = vsel %vm3251, %v4675, 0.0
  %v4804 = vsel %vm3252, %v4676, 0.0
  %v4805 = vsel %vm3253, %v4677, 0.0
  %v4806 = vsel %vm3254, %v4678, 0.0
  %v4807 = vsel %vm3255, %v4679, 0.0
  %v4808 = vsel %vm3256, %v4680, 0.0
  %v4809 = vsel %vm3257, %v4681, 0.0
  %v4810 = vsel %vm3258, %v4682, 0.0
  %v4811 = vsel %vm3259, %v4683, 0.0
  %v4812 = vsel %vm3260, %v4684, 0.0
  %v4813 = vsel %vm3261, %v4685, 0.0
  %v4814 = vsel %vm3262, %v4686, 0.0
  %v4815 = vsel %vm3263, %v4687, 0.0
  %v4816 = vsel %vm3264, %v4688, 0.0
  %v4817 = vsel %vm3265, %v4689, 0.0
  %v4818 = vmax.f32 %v4690, %v4694
  %v4819 = vmax.f32 %v4818, %v4698
  %v4820 = vmax.f32 %v4819, %v4702
  %v4821 = vmax.f32 %v4820, %v4706
  %v4822 = vmax.f32 %v4821, %v4710
  %v4823 = vmax.f32 %v4822, %v4714
  %v4824 = vmax.f32 %v4823, %v4718
  %v4825 = vmax.f32 %v4824, %v4722
  %v4826 = vmax.f32 %v4825, %v4726
  %v4827 = vmax.f32 %v4826, %v4730
  %v4828 = vmax.f32 %v4827, %v4734
  %v4829 = vmax.f32 %v4828, %v4738
  %v4830 = vmax.f32 %v4829, %v4742
  %v4831 = vmax.f32 %v4830, %v4746
  %v4832 = vmax.f32 %v4831, %v4750
  %v4833 = vmax.f32 %v4691, %v4695
  %v4834 = vmax.f32 %v4833, %v4699
  %v4835 = vmax.f32 %v4834, %v4703
  %v4836 = vmax.f32 %v4835, %v4707
  %v4837 = vmax.f32 %v4836, %v4711
  %v4838 = vmax.f32 %v4837, %v4715
  %v4839 = vmax.f32 %v4838, %v4719
  %v4840 = vmax.f32 %v4839, %v4723
  %v4841 = vmax.f32 %v4840, %v4727
  %v4842 = vmax.f32 %v4841, %v4731
  %v4843 = vmax.f32 %v4842, %v4735
  %v4844 = vmax.f32 %v4843, %v4739
  %v4845 = vmax.f32 %v4844, %v4743
  %v4846 = vmax.f32 %v4845, %v4747
  %v4847 = vmax.f32 %v4846, %v4751
  %v4848 = vmax.f32 %v4692, %v4696
  %v4849 = vmax.f32 %v4848, %v4700
  %v4850 = vmax.f32 %v4849, %v4704
  %v4851 = vmax.f32 %v4850, %v4708
  %v4852 = vmax.f32 %v4851, %v4712
  %v4853 = vmax.f32 %v4852, %v4716
  %v4854 = vmax.f32 %v4853, %v4720
  %v4855 = vmax.f32 %v4854, %v4724
  %v4856 = vmax.f32 %v4855, %v4728
  %v4857 = vmax.f32 %v4856, %v4732
  %v4858 = vmax.f32 %v4857, %v4736
  %v4859 = vmax.f32 %v4858, %v4740
  %v4860 = vmax.f32 %v4859, %v4744
  %v4861 = vmax.f32 %v4860, %v4748
  %v4862 = vmax.f32 %v4861, %v4752
  %v4863 = vmax.f32 %v4693, %v4697
  %v4864 = vmax.f32 %v4863, %v4701
  %v4865 = vmax.f32 %v4864, %v4705
  %v4866 = vmax.f32 %v4865, %v4709
  %v4867 = vmax.f32 %v4866, %v4713
  %v4868 = vmax.f32 %v4867, %v4717
  %v4869 = vmax.f32 %v4868, %v4721
  %v4870 = vmax.f32 %v4869, %v4725
  %v4871 = vmax.f32 %v4870, %v4729
  %v4872 = vmax.f32 %v4871, %v4733
  %v4873 = vmax.f32 %v4872, %v4737
  %v4874 = vmax.f32 %v4873, %v4741
  %v4875 = vmax.f32 %v4874, %v4745
  %v4876 = vmax.f32 %v4875, %v4749
  %v4877 = vmax.f32 %v4876, %v4753
  %v4878 = vmax.f32 %v4754, %v4758
  %v4879 = vmax.f32 %v4878, %v4762
  %v4880 = vmax.f32 %v4879, %v4766
  %v4881 = vmax.f32 %v4880, %v4770
  %v4882 = vmax.f32 %v4881, %v4774
  %v4883 = vmax.f32 %v4882, %v4778
  %v4884 = vmax.f32 %v4883, %v4782
  %v4885 = vmax.f32 %v4884, %v4786
  %v4886 = vmax.f32 %v4885, %v4790
  %v4887 = vmax.f32 %v4886, %v4794
  %v4888 = vmax.f32 %v4887, %v4798
  %v4889 = vmax.f32 %v4888, %v4802
  %v4890 = vmax.f32 %v4889, %v4806
  %v4891 = vmax.f32 %v4890, %v4810
  %v4892 = vmax.f32 %v4891, %v4814
  %v4893 = vmax.f32 %v4755, %v4759
  %v4894 = vmax.f32 %v4893, %v4763
  %v4895 = vmax.f32 %v4894, %v4767
  %v4896 = vmax.f32 %v4895, %v4771
  %v4897 = vmax.f32 %v4896, %v4775
  %v4898 = vmax.f32 %v4897, %v4779
  %v4899 = vmax.f32 %v4898, %v4783
  %v4900 = vmax.f32 %v4899, %v4787
  %v4901 = vmax.f32 %v4900, %v4791
  %v4902 = vmax.f32 %v4901, %v4795
  %v4903 = vmax.f32 %v4902, %v4799
  %v4904 = vmax.f32 %v4903, %v4803
  %v4905 = vmax.f32 %v4904, %v4807
  %v4906 = vmax.f32 %v4905, %v4811
  %v4907 = vmax.f32 %v4906, %v4815
  %v4908 = vmax.f32 %v4756, %v4760
  %v4909 = vmax.f32 %v4908, %v4764
  %v4910 = vmax.f32 %v4909, %v4768
  %v4911 = vmax.f32 %v4910, %v4772
  %v4912 = vmax.f32 %v4911, %v4776
  %v4913 = vmax.f32 %v4912, %v4780
  %v4914 = vmax.f32 %v4913, %v4784
  %v4915 = vmax.f32 %v4914, %v4788
  %v4916 = vmax.f32 %v4915, %v4792
  %v4917 = vmax.f32 %v4916, %v4796
  %v4918 = vmax.f32 %v4917, %v4800
  %v4919 = vmax.f32 %v4918, %v4804
  %v4920 = vmax.f32 %v4919, %v4808
  %v4921 = vmax.f32 %v4920, %v4812
  %v4922 = vmax.f32 %v4921, %v4816
  %v4923 = vmax.f32 %v4757, %v4761
  %v4924 = vmax.f32 %v4923, %v4765
  %v4925 = vmax.f32 %v4924, %v4769
  %v4926 = vmax.f32 %v4925, %v4773
  %v4927 = vmax.f32 %v4926, %v4777
  %v4928 = vmax.f32 %v4927, %v4781
  %v4929 = vmax.f32 %v4928, %v4785
  %v4930 = vmax.f32 %v4929, %v4789
  %v4931 = vmax.f32 %v4930, %v4793
  %v4932 = vmax.f32 %v4931, %v4797
  %v4933 = vmax.f32 %v4932, %v4801
  %v4934 = vmax.f32 %v4933, %v4805
  %v4935 = vmax.f32 %v4934, %v4809
  %v4936 = vmax.f32 %v4935, %v4813
  %v4937 = vmax.f32 %v4936, %v4817
  %4938 = vrot.lane.b32.xlu0 %v4832, 64
  %v4939 = vpop.permute.xlu0 %4938
  %4940 = vrot.lane.b32.xlu0 %v4847, 64
  %v4941 = vpop.permute.xlu0 %4940
  %4942 = vrot.lane.b32.xlu0 %v4862, 64
  %v4943 = vpop.permute.xlu0 %4942
  %4944 = vrot.lane.b32.xlu0 %v4877, 64
  %v4945 = vpop.permute.xlu0 %4944
  %4946 = vrot.lane.b32.xlu0 %v4892, 64
  %v4947 = vpop.permute.xlu0 %4946
  %4948 = vrot.lane.b32.xlu0 %v4907, 64
  %v4949 = vpop.permute.xlu0 %4948
  %4950 = vrot.lane.b32.xlu0 %v4922, 64
  %v4951 = vpop.permute.xlu0 %4950
  %4952 = vrot.lane.b32.xlu0 %v4937, 64
  %v4953 = vpop.permute.xlu0 %4952
  %v4954 = vmax.f32 %v4832, %v4939
  %v4955 = vmax.f32 %v4847, %v4941
  %v4956 = vmax.f32 %v4862, %v4943
  %v4957 = vmax.f32 %v4877, %v4945
  %v4958 = vmax.f32 %v4892, %v4947
  %v4959 = vmax.f32 %v4907, %v4949
  %v4960 = vmax.f32 %v4922, %v4951
  %v4961 = vmax.f32 %v4937, %v4953
  %4962 = vrot.lane.b32.xlu0 %v4954, 32
  %v4963 = vpop.permute.xlu0 %4962
  %4964 = vrot.lane.b32.xlu0 %v4955, 32
  %v4965 = vpop.permute.xlu0 %4964
  %4966 = vrot.lane.b32.xlu0 %v4956, 32
  %v4967 = vpop.permute.xlu0 %4966
  %4968 = vrot.lane.b32.xlu0 %v4957, 32
  %v4969 = vpop.permute.xlu0 %4968
  %4970 = vrot.lane.b32.xlu0 %v4958, 32
  %v4971 = vpop.permute.xlu0 %4970
  %4972 = vrot.lane.b32.xlu0 %v4959, 32
  %v4973 = vpop.permute.xlu0 %4972
  %4974 = vrot.lane.b32.xlu0 %v4960, 32
  %v4975 = vpop.permute.xlu0 %4974
  %4976 = vrot.lane.b32.xlu0 %v4961, 32
  %v4977 = vpop.permute.xlu0 %4976
  %v4978 = vmax.f32 %v4954, %v4963
  %v4979 = vmax.f32 %v4955, %v4965
  %v4980 = vmax.f32 %v4956, %v4967
  %v4981 = vmax.f32 %v4957, %v4969
  %v4982 = vmax.f32 %v4958, %v4971
  %v4983 = vmax.f32 %v4959, %v4973
  %v4984 = vmax.f32 %v4960, %v4975
  %v4985 = vmax.f32 %v4961, %v4977
  %vm4986 = vcmask 261120
  %4987 = vst.msk [vmem:[%s8] sm:$0xff] %vm4986, %v4978
  %4988 = vst.msk [vmem:[%s8 + $0x8] sm:$0xff] %vm4986, %v4979
  %4989 = vst.msk [vmem:[%s8 + $0x10] sm:$0xff] %vm4986, %v4980
  %4990 = vst.msk [vmem:[%s8 + $0x18] sm:$0xff] %vm4986, %v4981
  %4991 = vst.msk [vmem:[%s8 + $0x20] sm:$0xff] %vm4986, %v4982
  %4992 = vst.msk [vmem:[%s8 + $0x28] sm:$0xff] %vm4986, %v4983
  %4993 = vst.msk [vmem:[%s8 + $0x30] sm:$0xff] %vm4986, %v4984
  %4994 = vst.msk [vmem:[%s8 + $0x38] sm:$0xff] %vm4986, %v4985
  // Predicated region
  $region34: #{tpu_custom_call.1} parent=0 // pred_check
    _
  $region35: #{tpu_custom_call.1} parent=0 // pred_check_branch
    %4996 = sbr.rel (0) target = $region37
  $region36: #{tpu_custom_call.1} parent=0 // pred_region
    _
  $region37: #{tpu_custom_call.1} parent=0 // pred_fallthru
    _
  // Predicated region
  $region38: #{tpu_custom_call.1} parent=0 // pred_check
    _
  $region39: #{tpu_custom_call.1} parent=0 // pred_check_branch
    %4998 = sbr.rel (0) target = $region41
  $region40: #{tpu_custom_call.1} parent=0 // pred_region
    _
  $region41: #{tpu_custom_call.1} parent=0 // pred_fallthru
    _

</llo_original>
